<compile_context>
chip_gen: v7x
topology: tpu7x:2x2x1
jax: 0.10.0
libtpu: 0.0.40
codegen_flags: <defaults>
</compile_context>

<pallas_src>
import functools
import math

import jax
import jax.numpy as jnp
from jax import lax
from jax.experimental import pallas as pl
from jax.experimental.pallas import tpu as pltpu


def _self_attn_kernel(h_ref, wq_ref, wk_ref, wv_ref, bq_ref, bk_ref, bv_ref,
                      mask_ref,
                      ctx_ref, attn_ref, qsc_ref, ksc_ref, vsc_ref,
                      q_scr, k_scr, v_scr,
                      *, group_size, head_dim, q_tile, seq_len, compute_dtype):
    G, d, TQ, S = group_size, head_dim, q_tile, seq_len
    del S  # shapes are carried by the refs
    qi = pl.program_id(2)
    cd = compute_dtype

    # Fold 1/sqrt(d) into the projections: (q*s)(k*s)^T = q k^T / sqrt(d).
    sqrt_scale = float(d) ** -0.25
    inv_sqrt_scale = float(d) ** 0.25  # undo the v pre-scale for probs @ v

    @pl.when(qi == 0)
    def _():
        # Project Q/K/V once per (batch, head-group); persists in VMEM scratch
        # across the query-tile ("arbitrary") grid axis.
        x = h_ref[0].astype(cd)                                       # [S, H]

        def proj(w_ref, b_ref):
            y = jnp.dot(x, w_ref[0].astype(cd),
                        preferred_element_type=jnp.float32)
            return ((y + b_ref[0].astype(jnp.float32)) * sqrt_scale).astype(cd)

        q_scr[...] = proj(wq_ref, bq_ref)
        k_scr[...] = proj(wk_ref, bk_ref)
        v_scr[...] = proj(wv_ref, bv_ref)

    row = pl.multiple_of(qi * TQ, TQ)
    mask_row = mask_ref[0].astype(jnp.float32)                        # [1, S]

    # Contract on the last dim of both operands (no materialized transposes).
    dn = (((1,), (1,)), ((), ()))

    for g in range(G):                                  # static unrolled loop
        lo = g * d
        # Per-head ref views (strided vld straight into the MXU push; no full
        # [S, GD] value loads, no lane-axis value slices).
        qg_t = q_scr[pl.ds(row, TQ), pl.ds(lo, d)]                    # [TQ, d]
        kg_t = k_scr[pl.ds(row, TQ), pl.ds(lo, d)]
        vg_t = v_scr[pl.ds(row, TQ), pl.ds(lo, d)]
        qg = q_scr[:, pl.ds(lo, d)]                                   # [S, d]
        kg = k_scr[:, pl.ds(lo, d)]
        vg = v_scr[:, pl.ds(lo, d)]

        # attention scores (returned AFTER mask addition, as in the reference)
        s = lax.dot_general(qg_t, kg, dn, preferred_element_type=jnp.float32)
        s = s + mask_row                                              # [TQ, S]
        attn_ref[0, g] = s.astype(attn_ref.dtype)

        # softmax over keys (exact division; the [TQ,1] reciprocal is cheap)
        m = jnp.max(s, axis=-1, keepdims=True)
        e = jnp.exp(s - m)
        p = e / jnp.sum(e, axis=-1, keepdims=True)

        ctx = jnp.dot(p.astype(cd), vg,
                      preferred_element_type=jnp.float32) * inv_sqrt_scale
        # Store this head's context immediately (no G live context tiles,
        # no lane-shuffling concatenate).  Head hg*G+g lands at lane offset
        # hg*GD + g*d of the [B, S, H] output via the ctx BlockSpec.
        ctx_ref[0, :, pl.ds(lo, d)] = ctx.astype(ctx_ref.dtype)

        qsc_ref[0, g] = lax.dot_general(
            qg_t, qg, dn, preferred_element_type=jnp.float32).astype(qsc_ref.dtype)
        ksc_ref[0, g] = lax.dot_general(
            kg_t, kg, dn, preferred_element_type=jnp.float32).astype(ksc_ref.dtype)
        vsc_ref[0, g] = lax.dot_general(
            vg_t, vg, dn, preferred_element_type=jnp.float32).astype(vsc_ref.dtype)


def _vmem_capacity_bytes():
    """Detected per-core VMEM capacity; conservative 64 MiB (v7x) fallback."""
    try:
        return int(pltpu.get_tpu_info().vmem_capacity_bytes)
    except Exception:
        return 64 * 1024 * 1024


def bert_self_attention(hidden_states, attention_mask, params, num_heads,
                        *, head_group_size=None, q_tile=None,
                        score_dtype=jnp.float32, compute_dtype=jnp.float32,
                        mxu_lanes=256):
    """hidden_states: [B, S, H]; attention_mask: additive [B,S]/[B,1,S]/[B,1,1,S]
    or None.

    Returns (context_layer [B,S,H], attention_scores [B,nh,S,S], value_scores,
             context_score=0, query_scores, key_scores), matching the PyTorch
    module's forward (eval mode).  score_dtype/compute_dtype default to f32;
    pass bfloat16 on v6e/v7x once numerics are signed off.  On v5e pass
    mxu_lanes=128 (its MXU is 128 wide, so GD=256 only costs VMEM)."""
    B, S, H = hidden_states.shape
    d = H // num_heads

    # --- head grouping: widest divisor of num_heads with G*d <= mxu_lanes ---
    if head_group_size is None:
        G = 1
        for cand in range(num_heads, 0, -1):
            if num_heads % cand == 0 and cand * d <= mxu_lanes:
                G = cand
                break
    else:
        G = head_group_size
    assert num_heads % G == 0
    NG = num_heads // G
    GD = G * d

    hid_bytes = jnp.dtype(hidden_states.dtype).itemsize
    score_bytes = jnp.dtype(score_dtype).itemsize
    cd_bytes = jnp.dtype(compute_dtype).itemsize

    # --- VMEM-aware query tile ----------------------------------------------
    # Per-program VMEM that does not depend on TQ (double-buffered inputs +
    # Q/K/V scratch) and the per-query-row cost (4 double-buffered score
    # output blocks + the ctx output block).
    fixed_bytes = (2 * S * H * hid_bytes          # hidden_states block
                   + 3 * 2 * H * GD * 4           # wq/wk/wv blocks (f32)
                   + 3 * 2 * GD * 4               # bq/bk/bv blocks
                   + 2 * S * 4                    # mask block
                   + 3 * S * GD * cd_bytes)       # q/k/v VMEM scratch
    per_tq_bytes = (4 * 2 * G * S * score_bytes   # attn/qsc/ksc/vsc blocks
                    + 2 * GD * hid_bytes)         # ctx block
    vmem_cap = _vmem_capacity_bytes()
    vmem_budget = int(vmem_cap * 0.85)            # headroom for Mosaic scratch

    if q_tile is None:
        avail = max(vmem_budget - fixed_bytes, per_tq_bytes * 8)
        tq_cap = max(avail // per_tq_bytes, 8)
        if S <= min(tq_cap, 256):
            TQ = S
        else:
            TQ = next((t for t in (256, 128, 64, 32, 16, 8)
                       if t <= tq_cap and S % t == 0), None)
            if TQ is None:   # no divisor fits the budget; take the smallest
                TQ = next((t for t in (256, 128, 64, 32, 16, 8)
                           if S % t == 0), S)
    else:
        TQ = q_tile
    assert S % TQ == 0
    QT = S // TQ

    need_bytes = fixed_bytes + per_tq_bytes * TQ + (4 << 20)
    vmem_limit = int(min(max(need_bytes, 16 << 20), vmem_cap))

    # Rearrange Linear params (PyTorch: weight [out,in], y = x W^T + b) into
    # per-head-group [NG, H, G*d] weights and [NG, 1, G*d] biases.
    def group_w(w):  # w: [out=H, in=H]
        return jnp.transpose(w, (1, 0)).reshape(H, NG, GD).transpose(1, 0, 2)

    def group_b(b):  # b: [H]
        return b.reshape(NG, 1, GD)

    wq, wk, wv = group_w(params["wq"]), group_w(params["wk"]), group_w(params["wv"])
    bq, bk, bv = group_b(params["bq"]), group_b(params["bk"]), group_b(params["bv"])

    # Additive key mask stays [B, 1, S]; broadcast happens inside the kernel.
    if attention_mask is None:
        mask = jnp.zeros((B, 1, S), jnp.float32)
    else:
        mask = attention_mask.astype(jnp.float32).reshape(B, 1, S)

    out_shapes = (
        jax.ShapeDtypeStruct((B, S, H), hidden_states.dtype),      # context
        jax.ShapeDtypeStruct((B, num_heads, S, S), score_dtype),   # attn scores
        jax.ShapeDtypeStruct((B, num_heads, S, S), score_dtype),   # query_scores
        jax.ShapeDtypeStruct((B, num_heads, S, S), score_dtype),   # key_scores
        jax.ShapeDtypeStruct((B, num_heads, S, S), score_dtype),   # value_scores
    )

    in_specs = [
        pl.BlockSpec((1, S, H), lambda b, hg, qi: (b, 0, 0)),    # hidden_states
        pl.BlockSpec((1, H, GD), lambda b, hg, qi: (hg, 0, 0)),  # wq
        pl.BlockSpec((1, H, GD), lambda b, hg, qi: (hg, 0, 0)),  # wk
        pl.BlockSpec((1, H, GD), lambda b, hg, qi: (hg, 0, 0)),  # wv
        pl.BlockSpec((1, 1, GD), lambda b, hg, qi: (hg, 0, 0)),  # bq
        pl.BlockSpec((1, 1, GD), lambda b, hg, qi: (hg, 0, 0)),  # bk
        pl.BlockSpec((1, 1, GD), lambda b, hg, qi: (hg, 0, 0)),  # bv
        pl.BlockSpec((1, 1, S), lambda b, hg, qi: (b, 0, 0)),    # mask [B,1,S]
    ]
    out_specs = (
        # Context written directly in [B, S, H] layout; head-group hg owns the
        # lane range [hg*GD, (hg+1)*GD) which matches the PyTorch head concat.
        pl.BlockSpec((1, TQ, GD), lambda b, hg, qi: (b, qi, hg)),        # ctx
        pl.BlockSpec((1, G, TQ, S), lambda b, hg, qi: (b, hg, qi, 0)),   # attn
        pl.BlockSpec((1, G, TQ, S), lambda b, hg, qi: (b, hg, qi, 0)),   # qsc
        pl.BlockSpec((1, G, TQ, S), lambda b, hg, qi: (b, hg, qi, 0)),   # ksc
        pl.BlockSpec((1, G, TQ, S), lambda b, hg, qi: (b, hg, qi, 0)),   # vsc
    )
    scratch_shapes = [pltpu.VMEM((S, GD), compute_dtype) for _ in range(3)]

    kernel = functools.partial(_self_attn_kernel,
                               group_size=G, head_dim=d, q_tile=TQ, seq_len=S,
                               compute_dtype=compute_dtype)

    context_layer, attn_scores, q_scores, k_scores, v_scores = pl.pallas_call(
        kernel,
        out_shape=out_shapes,
        grid_spec=pltpu.PrefetchScalarGridSpec(
            num_scalar_prefetch=0,
            grid=(B, NG, QT),
            in_specs=in_specs,
            out_specs=out_specs,
            scratch_shapes=scratch_shapes),
        compiler_params=pltpu.CompilerParams(
            dimension_semantics=("parallel", "parallel", "arbitrary"),
            vmem_limit_bytes=vmem_limit),
    )(hidden_states, wq, wk, wv, bq, bk, bv, mask)

    context_score = 0
    return (context_layer, attn_scores, v_scores, context_score,
            q_scores, k_scores)


def _reference(hidden_states, attention_mask, params, num_heads):
    """Pure-JAX reference matching the PyTorch forward (eval mode)."""
    B, S, H = hidden_states.shape
    d = H // num_heads
    scale = 1.0 / math.sqrt(d)

    def lin(x, w, b):
        return jnp.einsum("bsh,oh->bso", x, w) + b

    def heads(x):
        return x.reshape(B, S, num_heads, d).transpose(0, 2, 1, 3)

    q = heads(lin(hidden_states, params["wq"], params["bq"]))
    k = heads(lin(hidden_states, params["wk"], params["bk"]))
    v = heads(lin(hidden_states, params["wv"], params["bv"]))

    scores = jnp.einsum("bhqd,bhkd->bhqk", q, k) * scale
    if attention_mask is not None:
        scores = scores + attention_mask[:, None, None, :]
    probs = jax.nn.softmax(scores, axis=-1)
    qsc = jnp.einsum("bhqd,bhkd->bhqk", q, q) * scale
    ksc = jnp.einsum("bhqd,bhkd->bhqk", k, k) * scale
    vsc = jnp.einsum("bhqd,bhkd->bhqk", v, v) * scale
    ctx = jnp.einsum("bhqk,bhkd->bhqd", probs, v)
    ctx = ctx.transpose(0, 2, 1, 3).reshape(B, S, H)
    return ctx, scores, vsc, 0, qsc, ksc


if __name__ == "__main__":
    B, S, H, num_heads = 2, 8, 32, 4

    key = jax.random.PRNGKey(0)
    k_h, k_m, k_wq, k_wk, k_wv, k_bq, k_bk, k_bv = jax.random.split(key, 8)

    hidden_states = jax.random.normal(k_h, (B, S, H), jnp.float32)
    # additive mask in BERT style: 0 for keep, -10000 for masked positions
    keep = (jax.random.uniform(k_m, (B, S)) > 0.2).astype(jnp.float32)
    attention_mask = (1.0 - keep) * -10000.0

    std = 0.02
    params = {
        "wq": std * jax.random.normal(k_wq, (H, H), jnp.float32),
        "wk": std * jax.random.normal(k_wk, (H, H), jnp.float32),
        "wv": std * jax.random.normal(k_wv, (H, H), jnp.float32),
        "bq": std * jax.random.normal(k_bq, (H,), jnp.float32),
        "bk": std * jax.random.normal(k_bk, (H,), jnp.float32),
        "bv": std * jax.random.normal(k_bv, (H,), jnp.float32),
    }

    refs = _reference(hidden_states, attention_mask, params, num_heads)

    # Default f32 path: semantics-faithful to the PyTorch module.
    outs = bert_self_attention(hidden_states, attention_mask, params, num_heads)
    outs = jax.block_until_ready(outs)
    for o, r in zip(outs, refs):
        if isinstance(o, (int, float)):
            assert o == r
        else:
            assert jnp.allclose(o, r, atol=1e-3, rtol=1e-3), "f32 mismatch vs reference"

    # bf16 fast path (halved score writeback + native-bf16 MXU on v6e/v7x);
    # relaxed tolerance pending full numerics sign-off.
    outs_bf16 = bert_self_attention(hidden_states, attention_mask, params,
                                    num_heads, score_dtype=jnp.bfloat16,
                                    compute_dtype=jnp.bfloat16)
    outs_bf16 = jax.block_until_ready(outs_bf16)
    for o, r in zip(outs_bf16, refs):
        if isinstance(o, (int, float)):
            assert o == r
        else:
            assert jnp.allclose(jnp.asarray(o, jnp.float32), r,
                                atol=5e-2, rtol=5e-2), "bf16 mismatch vs reference"

    print("KERNEL_OK")
</pallas_src>

<mosaic_0001>
module attributes {stable_mosaic.version = 11 : i64} {
  func.func @_self_attn_kernel(%arg0: i32, %arg1: i32, %arg2: i32, %arg3: memref<1x8x32xf32, #tpu.memory_space<vmem>>, %arg4: memref<1x32x32xf32, #tpu.memory_space<vmem>>, %arg5: memref<1x32x32xf32, #tpu.memory_space<vmem>>, %arg6: memref<1x32x32xf32, #tpu.memory_space<vmem>>, %arg7: memref<1x1x32xf32, #tpu.memory_space<vmem>>, %arg8: memref<1x1x32xf32, #tpu.memory_space<vmem>>, %arg9: memref<1x1x32xf32, #tpu.memory_space<vmem>>, %arg10: memref<1x1x8xf32, #tpu.memory_space<vmem>>, %arg11: memref<1x8x32xf32, #tpu.memory_space<vmem>>, %arg12: memref<1x4x8x8xf32, #tpu.memory_space<vmem>>, %arg13: memref<1x4x8x8xf32, #tpu.memory_space<vmem>>, %arg14: memref<1x4x8x8xf32, #tpu.memory_space<vmem>>, %arg15: memref<1x4x8x8xf32, #tpu.memory_space<vmem>>, %arg16: memref<8x32xf32, #tpu.memory_space<vmem>>, %arg17: memref<8x32xf32, #tpu.memory_space<vmem>>, %arg18: memref<8x32xf32, #tpu.memory_space<vmem>>) attributes {dimension_semantics = [#tpu.dimension_semantics<parallel>, #tpu.dimension_semantics<parallel>, #tpu.dimension_semantics<arbitrary>], iteration_bounds = array<i64: 2, 1, 1>, scalar_prefetch = 0 : i64, scratch_operands = 3 : i64, tpu.core_type = #tpu.core_type<tc>, window_params = [{transform_indices = @transform_0, window_bounds = array<i64: 1, 8, 32>}, {transform_indices = @transform_1, window_bounds = array<i64: 1, 32, 32>}, {transform_indices = @transform_2, window_bounds = array<i64: 1, 32, 32>}, {transform_indices = @transform_3, window_bounds = array<i64: 1, 32, 32>}, {transform_indices = @transform_4, window_bounds = array<i64: 1, 1, 32>}, {transform_indices = @transform_5, window_bounds = array<i64: 1, 1, 32>}, {transform_indices = @transform_6, window_bounds = array<i64: 1, 1, 32>}, {transform_indices = @transform_7, window_bounds = array<i64: 1, 1, 8>}, {transform_indices = @transform_8, window_bounds = array<i64: 1, 8, 32>}, {transform_indices = @transform_9, window_bounds = array<i64: 1, 4, 8, 8>}, {transform_indices = @transform_10, window_bounds = array<i64: 1, 4, 8, 8>}, {transform_indices = @transform_11, window_bounds = array<i64: 1, 4, 8, 8>}, {transform_indices = @transform_12, window_bounds = array<i64: 1, 4, 8, 8>}]} {
    %c0_i32 = arith.constant 0 : i32
    %0 = arith.cmpi eq, %arg2, %c0_i32 : i32
    %1 = arith.extui %0 : i1 to i32
    %c0_i32_0 = arith.constant 0 : i32
    %2 = arith.cmpi ne, %1, %c0_i32_0 : i32
    scf.if %2 {
      %c0_140 = arith.constant 0 : index
      %c0_141 = arith.constant 0 : index
      %c0_142 = arith.constant 0 : index
      %175 = vector.load %arg3[%c0_140, %c0_141, %c0_142] : memref<1x8x32xf32, #tpu.memory_space<vmem>>, vector<1x8x32xf32>
      %176 = vector.shape_cast %175 : vector<1x8x32xf32> to vector<8x32xf32>
      %c0_143 = arith.constant 0 : index
      %c0_144 = arith.constant 0 : index
      %c0_145 = arith.constant 0 : index
      %177 = vector.load %arg4[%c0_143, %c0_144, %c0_145] : memref<1x32x32xf32, #tpu.memory_space<vmem>>, vector<1x32x32xf32>
      %178 = vector.shape_cast %177 : vector<1x32x32xf32> to vector<32x32xf32>
      %cst_146 = arith.constant dense<0.000000e+00> : vector<8x32xf32>
      %179 = tpu.matmul %176, %178, %cst_146 {dimension_numbers = #tpu.dot_dimension_numbers<[1], [0], [0], [1], [0, 0, 1, 1], [], []>} : vector<8x32xf32>, vector<32x32xf32>, vector<8x32xf32> -> vector<8x32xf32>
      %c0_147 = arith.constant 0 : index
      %c0_148 = arith.constant 0 : index
      %c0_149 = arith.constant 0 : index
      %180 = vector.load %arg7[%c0_147, %c0_148, %c0_149] : memref<1x1x32xf32, #tpu.memory_space<vmem>>, vector<1x1x32xf32>
      %181 = vector.shape_cast %180 : vector<1x1x32xf32> to vector<1x32xf32>
      %182 = vector.broadcast %181 : vector<1x32xf32> to vector<8x32xf32>
      %183 = arith.addf %179, %182 : vector<8x32xf32>
      %cst_150 = arith.constant 0.594603539 : f32
      %184 = vector.broadcast %cst_150 : f32 to vector<8x32xf32>
      %185 = arith.mulf %183, %184 : vector<8x32xf32>
      %c0_151 = arith.constant 0 : index
      %c0_152 = arith.constant 0 : index
      %186 = vector.load %arg16[%c0_151, %c0_152] : memref<8x32xf32, #tpu.memory_space<vmem>>, vector<8x32xf32>
      tpu.vector_store %arg16[%c0_151, %c0_152], %185 {strides = array<i32>} : memref<8x32xf32, #tpu.memory_space<vmem>>, vector<8x32xf32>,
      %c0_153 = arith.constant 0 : index
      %c0_154 = arith.constant 0 : index
      %c0_155 = arith.constant 0 : index
      %187 = vector.load %arg5[%c0_153, %c0_154, %c0_155] : memref<1x32x32xf32, #tpu.memory_space<vmem>>, vector<1x32x32xf32>
      %188 = vector.shape_cast %187 : vector<1x32x32xf32> to vector<32x32xf32>
      %cst_156 = arith.constant dense<0.000000e+00> : vector<8x32xf32>
      %189 = tpu.matmul %176, %188, %cst_156 {dimension_numbers = #tpu.dot_dimension_numbers<[1], [0], [0], [1], [0, 0, 1, 1], [], []>} : vector<8x32xf32>, vector<32x32xf32>, vector<8x32xf32> -> vector<8x32xf32>
      %c0_157 = arith.constant 0 : index
      %c0_158 = arith.constant 0 : index
      %c0_159 = arith.constant 0 : index
      %190 = vector.load %arg8[%c0_157, %c0_158, %c0_159] : memref<1x1x32xf32, #tpu.memory_space<vmem>>, vector<1x1x32xf32>
      %191 = vector.shape_cast %190 : vector<1x1x32xf32> to vector<1x32xf32>
      %192 = vector.broadcast %191 : vector<1x32xf32> to vector<8x32xf32>
      %193 = arith.addf %189, %192 : vector<8x32xf32>
      %cst_160 = arith.constant 0.594603539 : f32
      %194 = vector.broadcast %cst_160 : f32 to vector<8x32xf32>
      %195 = arith.mulf %193, %194 : vector<8x32xf32>
      %c0_161 = arith.constant 0 : index
      %c0_162 = arith.constant 0 : index
      %196 = vector.load %arg17[%c0_161, %c0_162] : memref<8x32xf32, #tpu.memory_space<vmem>>, vector<8x32xf32>
      tpu.vector_store %arg17[%c0_161, %c0_162], %195 {strides = array<i32>} : memref<8x32xf32, #tpu.memory_space<vmem>>, vector<8x32xf32>,
      %c0_163 = arith.constant 0 : index
      %c0_164 = arith.constant 0 : index
      %c0_165 = arith.constant 0 : index
      %197 = vector.load %arg6[%c0_163, %c0_164, %c0_165] : memref<1x32x32xf32, #tpu.memory_space<vmem>>, vector<1x32x32xf32>
      %198 = vector.shape_cast %197 : vector<1x32x32xf32> to vector<32x32xf32>
      %cst_166 = arith.constant dense<0.000000e+00> : vector<8x32xf32>
      %199 = tpu.matmul %176, %198, %cst_166 {dimension_numbers = #tpu.dot_dimension_numbers<[1], [0], [0], [1], [0, 0, 1, 1], [], []>} : vector<8x32xf32>, vector<32x32xf32>, vector<8x32xf32> -> vector<8x32xf32>
      %c0_167 = arith.constant 0 : index
      %c0_168 = arith.constant 0 : index
      %c0_169 = arith.constant 0 : index
      %200 = vector.load %arg9[%c0_167, %c0_168, %c0_169] : memref<1x1x32xf32, #tpu.memory_space<vmem>>, vector<1x1x32xf32>
      %201 = vector.shape_cast %200 : vector<1x1x32xf32> to vector<1x32xf32>
      %202 = vector.broadcast %201 : vector<1x32xf32> to vector<8x32xf32>
      %203 = arith.addf %199, %202 : vector<8x32xf32>
      %cst_170 = arith.constant 0.594603539 : f32
      %204 = vector.broadcast %cst_170 : f32 to vector<8x32xf32>
      %205 = arith.mulf %203, %204 : vector<8x32xf32>
      %c0_171 = arith.constant 0 : index
      %c0_172 = arith.constant 0 : index
      %206 = vector.load %arg18[%c0_171, %c0_172] : memref<8x32xf32, #tpu.memory_space<vmem>>, vector<8x32xf32>
      tpu.vector_store %arg18[%c0_171, %c0_172], %205 {strides = array<i32>} : memref<8x32xf32, #tpu.memory_space<vmem>>, vector<8x32xf32>,
    } else {
    }
    %c8_i32 = arith.constant 8 : i32
    %3 = arith.muli %arg2, %c8_i32 : i32
    %4 = tpu.assume_multiple %3, 8 : i32
    %c0 = arith.constant 0 : index
    %c0_1 = arith.constant 0 : index
    %c0_2 = arith.constant 0 : index
    %5 = vector.load %arg10[%c0, %c0_1, %c0_2] : memref<1x1x8xf32, #tpu.memory_space<vmem>>, vector<1x1x8xf32>
    %6 = vector.shape_cast %5 : vector<1x1x8xf32> to vector<1x8xf32>
    %7 = arith.index_cast %4 : i32 to index
    %c0_3 = arith.constant 0 : index
    %8 = vector.load %arg16[%7, %c0_3] : memref<8x32xf32, #tpu.memory_space<vmem>>, vector<8x8xf32>
    %9 = arith.index_cast %4 : i32 to index
    %c0_4 = arith.constant 0 : index
    %10 = vector.load %arg17[%9, %c0_4] : memref<8x32xf32, #tpu.memory_space<vmem>>, vector<8x8xf32>
    %11 = arith.index_cast %4 : i32 to index
    %c0_5 = arith.constant 0 : index
    %12 = vector.load %arg18[%11, %c0_5] : memref<8x32xf32, #tpu.memory_space<vmem>>, vector<8x8xf32>
    %c0_6 = arith.constant 0 : index
    %c0_7 = arith.constant 0 : index
    %13 = vector.load %arg16[%c0_6, %c0_7] : memref<8x32xf32, #tpu.memory_space<vmem>>, vector<8x8xf32>
    %c0_8 = arith.constant 0 : index
    %c0_9 = arith.constant 0 : index
    %14 = vector.load %arg17[%c0_8, %c0_9] : memref<8x32xf32, #tpu.memory_space<vmem>>, vector<8x8xf32>
    %c0_10 = arith.constant 0 : index
    %c0_11 = arith.constant 0 : index
    %15 = vector.load %arg18[%c0_10, %c0_11] : memref<8x32xf32, #tpu.memory_space<vmem>>, vector<8x8xf32>
    %cst = arith.constant dense<0.000000e+00> : vector<8x8xf32>
    %16 = tpu.matmul %8, %14, %cst {dimension_numbers = #tpu.dot_dimension_numbers<[1], [1], [0], [0], [0, 0, 1, 0], [], []>} : vector<8x8xf32>, vector<8x8xf32>, vector<8x8xf32> -> vector<8x8xf32>
    %17 = vector.broadcast %6 : vector<1x8xf32> to vector<8x8xf32>
    %18 = arith.addf %16, %17 : vector<8x8xf32>
    %c0_12 = arith.constant 0 : index
    %c0_13 = arith.constant 0 : index
    %c0_14 = arith.constant 0 : index
    %c0_15 = arith.constant 0 : index
    %19 = vector.load %arg12[%c0_12, %c0_13, %c0_14, %c0_15] : memref<1x4x8x8xf32, #tpu.memory_space<vmem>>, vector<1x1x8x8xf32>
    %20 = vector.shape_cast %19 : vector<1x1x8x8xf32> to vector<8x8xf32>
    %21 = vector.shape_cast %18 : vector<8x8xf32> to vector<1x1x8x8xf32>
    tpu.vector_store %arg12[%c0_12, %c0_13, %c0_14, %c0_15], %21 {strides = array<i32>} : memref<1x4x8x8xf32, #tpu.memory_space<vmem>>, vector<1x1x8x8xf32>,
    %cst_16 = arith.constant dense<0xFF800000> : vector<8xf32>
    %22 = vector.multi_reduction <maximumf>, %18, %cst_16 [1] : vector<8x8xf32> to vector<8xf32>
    %23 = vector.shape_cast %22 : vector<8xf32> to vector<8x1xf32>
    %24 = vector.broadcast %23 : vector<8x1xf32> to vector<8x8xf32>
    %25 = arith.subf %18, %24 : vector<8x8xf32>
    %26 = math.exp %25 : vector<8x8xf32>
    %cst_17 = arith.constant dense<0.000000e+00> : vector<8xf32>
    %27 = vector.multi_reduction <add>, %26, %cst_17 [1] : vector<8x8xf32> to vector<8xf32>
    %28 = vector.shape_cast %27 : vector<8xf32> to vector<8x1xf32>
    %29 = vector.broadcast %28 : vector<8x1xf32> to vector<8x8xf32>
    %30 = arith.divf %26, %29 : vector<8x8xf32>
    %cst_18 = arith.constant dense<0.000000e+00> : vector<8x8xf32>
    %31 = tpu.matmul %30, %15, %cst_18 {dimension_numbers = #tpu.dot_dimension_numbers<[1], [0], [0], [1], [0, 0, 1, 1], [], []>} : vector<8x8xf32>, vector<8x8xf32>, vector<8x8xf32> -> vector<8x8xf32>
    %cst_19 = arith.constant 1.68179286 : f32
    %32 = vector.broadcast %cst_19 : f32 to vector<8x8xf32>
    %33 = arith.mulf %31, %32 : vector<8x8xf32>
    %c0_20 = arith.constant 0 : index
    %c0_21 = arith.constant 0 : index
    %c0_22 = arith.constant 0 : index
    %34 = vector.load %arg11[%c0_20, %c0_21, %c0_22] : memref<1x8x32xf32, #tpu.memory_space<vmem>>, vector<1x8x8xf32>
    %35 = vector.shape_cast %34 : vector<1x8x8xf32> to vector<8x8xf32>
    %36 = vector.shape_cast %33 : vector<8x8xf32> to vector<1x8x8xf32>
    tpu.vector_store %arg11[%c0_20, %c0_21, %c0_22], %36 {strides = array<i32>} : memref<1x8x32xf32, #tpu.memory_space<vmem>>, vector<1x8x8xf32>,
    %cst_23 = arith.constant dense<0.000000e+00> : vector<8x8xf32>
    %37 = tpu.matmul %8, %13, %cst_23 {dimension_numbers = #tpu.dot_dimension_numbers<[1], [1], [0], [0], [0, 0, 1, 0], [], []>} : vector<8x8xf32>, vector<8x8xf32>, vector<8x8xf32> -> vector<8x8xf32>
    %c0_24 = arith.constant 0 : index
    %c0_25 = arith.constant 0 : index
    %c0_26 = arith.constant 0 : index
    %c0_27 = arith.constant 0 : index
    %38 = vector.load %arg13[%c0_24, %c0_25, %c0_26, %c0_27] : memref<1x4x8x8xf32, #tpu.memory_space<vmem>>, vector<1x1x8x8xf32>
    %39 = vector.shape_cast %38 : vector<1x1x8x8xf32> to vector<8x8xf32>
    %40 = vector.shape_cast %37 : vector<8x8xf32> to vector<1x1x8x8xf32>
    tpu.vector_store %arg13[%c0_24, %c0_25, %c0_26, %c0_27], %40 {strides = array<i32>} : memref<1x4x8x8xf32, #tpu.memory_space<vmem>>, vector<1x1x8x8xf32>,
    %cst_28 = arith.constant dense<0.000000e+00> : vector<8x8xf32>
    %41 = tpu.matmul %10, %14, %cst_28 {dimension_numbers = #tpu.dot_dimension_numbers<[1], [1], [0], [0], [0, 0, 1, 0], [], []>} : vector<8x8xf32>, vector<8x8xf32>, vector<8x8xf32> -> vector<8x8xf32>
    %c0_29 = arith.constant 0 : index
    %c0_30 = arith.constant 0 : index
    %c0_31 = arith.constant 0 : index
    %c0_32 = arith.constant 0 : index
    %42 = vector.load %arg14[%c0_29, %c0_30, %c0_31, %c0_32] : memref<1x4x8x8xf32, #tpu.memory_space<vmem>>, vector<1x1x8x8xf32>
    %43 = vector.shape_cast %42 : vector<1x1x8x8xf32> to vector<8x8xf32>
    %44 = vector.shape_cast %41 : vector<8x8xf32> to vector<1x1x8x8xf32>
    tpu.vector_store %arg14[%c0_29, %c0_30, %c0_31, %c0_32], %44 {strides = array<i32>} : memref<1x4x8x8xf32, #tpu.memory_space<vmem>>, vector<1x1x8x8xf32>,
    %cst_33 = arith.constant dense<0.000000e+00> : vector<8x8xf32>
    %45 = tpu.matmul %12, %15, %cst_33 {dimension_numbers = #tpu.dot_dimension_numbers<[1], [1], [0], [0], [0, 0, 1, 0], [], []>} : vector<8x8xf32>, vector<8x8xf32>, vector<8x8xf32> -> vector<8x8xf32>
    %c0_34 = arith.constant 0 : index
    %c0_35 = arith.constant 0 : index
    %c0_36 = arith.constant 0 : index
    %c0_37 = arith.constant 0 : index
    %46 = vector.load %arg15[%c0_34, %c0_35, %c0_36, %c0_37] : memref<1x4x8x8xf32, #tpu.memory_space<vmem>>, vector<1x1x8x8xf32>
    %47 = vector.shape_cast %46 : vector<1x1x8x8xf32> to vector<8x8xf32>
    %48 = vector.shape_cast %45 : vector<8x8xf32> to vector<1x1x8x8xf32>
    tpu.vector_store %arg15[%c0_34, %c0_35, %c0_36, %c0_37], %48 {strides = array<i32>} : memref<1x4x8x8xf32, #tpu.memory_space<vmem>>, vector<1x1x8x8xf32>,
    %49 = arith.index_cast %4 : i32 to index
    %c8 = arith.constant 8 : index
    %50 = vector.load %arg16[%49, %c8] : memref<8x32xf32, #tpu.memory_space<vmem>>, vector<8x8xf32>
    %51 = arith.index_cast %4 : i32 to index
    %c8_38 = arith.constant 8 : index
    %52 = vector.load %arg17[%51, %c8_38] : memref<8x32xf32, #tpu.memory_space<vmem>>, vector<8x8xf32>
    %53 = arith.index_cast %4 : i32 to index
    %c8_39 = arith.constant 8 : index
    %54 = vector.load %arg18[%53, %c8_39] : memref<8x32xf32, #tpu.memory_space<vmem>>, vector<8x8xf32>
    %c0_40 = arith.constant 0 : index
    %c8_41 = arith.constant 8 : index
    %55 = vector.load %arg16[%c0_40, %c8_41] : memref<8x32xf32, #tpu.memory_space<vmem>>, vector<8x8xf32>
    %c0_42 = arith.constant 0 : index
    %c8_43 = arith.constant 8 : index
    %56 = vector.load %arg17[%c0_42, %c8_43] : memref<8x32xf32, #tpu.memory_space<vmem>>, vector<8x8xf32>
    %c0_44 = arith.constant 0 : index
    %c8_45 = arith.constant 8 : index
    %57 = vector.load %arg18[%c0_44, %c8_45] : memref<8x32xf32, #tpu.memory_space<vmem>>, vector<8x8xf32>
    %cst_46 = arith.constant dense<0.000000e+00> : vector<8x8xf32>
    %58 = tpu.matmul %50, %56, %cst_46 {dimension_numbers = #tpu.dot_dimension_numbers<[1], [1], [0], [0], [0, 0, 1, 0], [], []>} : vector<8x8xf32>, vector<8x8xf32>, vector<8x8xf32> -> vector<8x8xf32>
    %59 = vector.broadcast %6 : vector<1x8xf32> to vector<8x8xf32>
    %60 = arith.addf %58, %59 : vector<8x8xf32>
    %c0_47 = arith.constant 0 : index
    %c1 = arith.constant 1 : index
    %c0_48 = arith.constant 0 : index
    %c0_49 = arith.constant 0 : index
    %61 = vector.load %arg12[%c0_47, %c1, %c0_48, %c0_49] : memref<1x4x8x8xf32, #tpu.memory_space<vmem>>, vector<1x1x8x8xf32>
    %62 = vector.shape_cast %61 : vector<1x1x8x8xf32> to vector<8x8xf32>
    %63 = vector.shape_cast %60 : vector<8x8xf32> to vector<1x1x8x8xf32>
    tpu.vector_store %arg12[%c0_47, %c1, %c0_48, %c0_49], %63 {strides = array<i32>} : memref<1x4x8x8xf32, #tpu.memory_space<vmem>>, vector<1x1x8x8xf32>,
    %cst_50 = arith.constant dense<0xFF800000> : vector<8xf32>
    %64 = vector.multi_reduction <maximumf>, %60, %cst_50 [1] : vector<8x8xf32> to vector<8xf32>
    %65 = vector.shape_cast %64 : vector<8xf32> to vector<8x1xf32>
    %66 = vector.broadcast %65 : vector<8x1xf32> to vector<8x8xf32>
    %67 = arith.subf %60, %66 : vector<8x8xf32>
    %68 = math.exp %67 : vector<8x8xf32>
    %cst_51 = arith.constant dense<0.000000e+00> : vector<8xf32>
    %69 = vector.multi_reduction <add>, %68, %cst_51 [1] : vector<8x8xf32> to vector<8xf32>
    %70 = vector.shape_cast %69 : vector<8xf32> to vector<8x1xf32>
    %71 = vector.broadcast %70 : vector<8x1xf32> to vector<8x8xf32>
    %72 = arith.divf %68, %71 : vector<8x8xf32>
    %cst_52 = arith.constant dense<0.000000e+00> : vector<8x8xf32>
    %73 = tpu.matmul %72, %57, %cst_52 {dimension_numbers = #tpu.dot_dimension_numbers<[1], [0], [0], [1], [0, 0, 1, 1], [], []>} : vector<8x8xf32>, vector<8x8xf32>, vector<8x8xf32> -> vector<8x8xf32>
    %cst_53 = arith.constant 1.68179286 : f32
    %74 = vector.broadcast %cst_53 : f32 to vector<8x8xf32>
    %75 = arith.mulf %73, %74 : vector<8x8xf32>
    %c0_54 = arith.constant 0 : index
    %c0_55 = arith.constant 0 : index
    %c8_56 = arith.constant 8 : index
    %76 = vector.load %arg11[%c0_54, %c0_55, %c8_56] : memref<1x8x32xf32, #tpu.memory_space<vmem>>, vector<1x8x8xf32>
    %77 = vector.shape_cast %76 : vector<1x8x8xf32> to vector<8x8xf32>
    %78 = vector.shape_cast %75 : vector<8x8xf32> to vector<1x8x8xf32>
    tpu.vector_store %arg11[%c0_54, %c0_55, %c8_56], %78 {strides = array<i32>} : memref<1x8x32xf32, #tpu.memory_space<vmem>>, vector<1x8x8xf32>,
    %cst_57 = arith.constant dense<0.000000e+00> : vector<8x8xf32>
    %79 = tpu.matmul %50, %55, %cst_57 {dimension_numbers = #tpu.dot_dimension_numbers<[1], [1], [0], [0], [0, 0, 1, 0], [], []>} : vector<8x8xf32>, vector<8x8xf32>, vector<8x8xf32> -> vector<8x8xf32>
    %c0_58 = arith.constant 0 : index
    %c1_59 = arith.constant 1 : index
    %c0_60 = arith.constant 0 : index
    %c0_61 = arith.constant 0 : index
    %80 = vector.load %arg13[%c0_58, %c1_59, %c0_60, %c0_61] : memref<1x4x8x8xf32, #tpu.memory_space<vmem>>, vector<1x1x8x8xf32>
    %81 = vector.shape_cast %80 : vector<1x1x8x8xf32> to vector<8x8xf32>
    %82 = vector.shape_cast %79 : vector<8x8xf32> to vector<1x1x8x8xf32>
    tpu.vector_store %arg13[%c0_58, %c1_59, %c0_60, %c0_61], %82 {strides = array<i32>} : memref<1x4x8x8xf32, #tpu.memory_space<vmem>>, vector<1x1x8x8xf32>,
    %cst_62 = arith.constant dense<0.000000e+00> : vector<8x8xf32>
    %83 = tpu.matmul %52, %56, %cst_62 {dimension_numbers = #tpu.dot_dimension_numbers<[1], [1], [0], [0], [0, 0, 1, 0], [], []>} : vector<8x8xf32>, vector<8x8xf32>, vector<8x8xf32> -> vector<8x8xf32>
    %c0_63 = arith.constant 0 : index
    %c1_64 = arith.constant 1 : index
    %c0_65 = arith.constant 0 : index
    %c0_66 = arith.constant 0 : index
    %84 = vector.load %arg14[%c0_63, %c1_64, %c0_65, %c0_66] : memref<1x4x8x8xf32, #tpu.memory_space<vmem>>, vector<1x1x8x8xf32>
    %85 = vector.shape_cast %84 : vector<1x1x8x8xf32> to vector<8x8xf32>
    %86 = vector.shape_cast %83 : vector<8x8xf32> to vector<1x1x8x8xf32>
    tpu.vector_store %arg14[%c0_63, %c1_64, %c0_65, %c0_66], %86 {strides = array<i32>} : memref<1x4x8x8xf32, #tpu.memory_space<vmem>>, vector<1x1x8x8xf32>,
    %cst_67 = arith.constant dense<0.000000e+00> : vector<8x8xf32>
    %87 = tpu.matmul %54, %57, %cst_67 {dimension_numbers = #tpu.dot_dimension_numbers<[1], [1], [0], [0], [0, 0, 1, 0], [], []>} : vector<8x8xf32>, vector<8x8xf32>, vector<8x8xf32> -> vector<8x8xf32>
    %c0_68 = arith.constant 0 : index
    %c1_69 = arith.constant 1 : index
    %c0_70 = arith.constant 0 : index
    %c0_71 = arith.constant 0 : index
    %88 = vector.load %arg15[%c0_68, %c1_69, %c0_70, %c0_71] : memref<1x4x8x8xf32, #tpu.memory_space<vmem>>, vector<1x1x8x8xf32>
    %89 = vector.shape_cast %88 : vector<1x1x8x8xf32> to vector<8x8xf32>
    %90 = vector.shape_cast %87 : vector<8x8xf32> to vector<1x1x8x8xf32>
    tpu.vector_store %arg15[%c0_68, %c1_69, %c0_70, %c0_71], %90 {strides = array<i32>} : memref<1x4x8x8xf32, #tpu.memory_space<vmem>>, vector<1x1x8x8xf32>,
    %91 = arith.index_cast %4 : i32 to index
    %c16 = arith.constant 16 : index
    %92 = vector.load %arg16[%91, %c16] : memref<8x32xf32, #tpu.memory_space<vmem>>, vector<8x8xf32>
    %93 = arith.index_cast %4 : i32 to index
    %c16_72 = arith.constant 16 : index
    %94 = vector.load %arg17[%93, %c16_72] : memref<8x32xf32, #tpu.memory_space<vmem>>, vector<8x8xf32>
    %95 = arith.index_cast %4 : i32 to index
    %c16_73 = arith.constant 16 : index
    %96 = vector.load %arg18[%95, %c16_73] : memref<8x32xf32, #tpu.memory_space<vmem>>, vector<8x8xf32>
    %c0_74 = arith.constant 0 : index
    %c16_75 = arith.constant 16 : index
    %97 = vector.load %arg16[%c0_74, %c16_75] : memref<8x32xf32, #tpu.memory_space<vmem>>, vector<8x8xf32>
    %c0_76 = arith.constant 0 : index
    %c16_77 = arith.constant 16 : index
    %98 = vector.load %arg17[%c0_76, %c16_77] : memref<8x32xf32, #tpu.memory_space<vmem>>, vector<8x8xf32>
    %c0_78 = arith.constant 0 : index
    %c16_79 = arith.constant 16 : index
    %99 = vector.load %arg18[%c0_78, %c16_79] : memref<8x32xf32, #tpu.memory_space<vmem>>, vector<8x8xf32>
    %cst_80 = arith.constant dense<0.000000e+00> : vector<8x8xf32>
    %100 = tpu.matmul %92, %98, %cst_80 {dimension_numbers = #tpu.dot_dimension_numbers<[1], [1], [0], [0], [0, 0, 1, 0], [], []>} : vector<8x8xf32>, vector<8x8xf32>, vector<8x8xf32> -> vector<8x8xf32>
    %101 = vector.broadcast %6 : vector<1x8xf32> to vector<8x8xf32>
    %102 = arith.addf %100, %101 : vector<8x8xf32>
    %c0_81 = arith.constant 0 : index
    %c2 = arith.constant 2 : index
    %c0_82 = arith.constant 0 : index
    %c0_83 = arith.constant 0 : index
    %103 = vector.load %arg12[%c0_81, %c2, %c0_82, %c0_83] : memref<1x4x8x8xf32, #tpu.memory_space<vmem>>, vector<1x1x8x8xf32>
    %104 = vector.shape_cast %103 : vector<1x1x8x8xf32> to vector<8x8xf32>
    %105 = vector.shape_cast %102 : vector<8x8xf32> to vector<1x1x8x8xf32>
    tpu.vector_store %arg12[%c0_81, %c2, %c0_82, %c0_83], %105 {strides = array<i32>} : memref<1x4x8x8xf32, #tpu.memory_space<vmem>>, vector<1x1x8x8xf32>,
    %cst_84 = arith.constant dense<0xFF800000> : vector<8xf32>
    %106 = vector.multi_reduction <maximumf>, %102, %cst_84 [1] : vector<8x8xf32> to vector<8xf32>
    %107 = vector.shape_cast %106 : vector<8xf32> to vector<8x1xf32>
    %108 = vector.broadcast %107 : vector<8x1xf32> to vector<8x8xf32>
    %109 = arith.subf %102, %108 : vector<8x8xf32>
    %110 = math.exp %109 : vector<8x8xf32>
    %cst_85 = arith.constant dense<0.000000e+00> : vector<8xf32>
    %111 = vector.multi_reduction <add>, %110, %cst_85 [1] : vector<8x8xf32> to vector<8xf32>
    %112 = vector.shape_cast %111 : vector<8xf32> to vector<8x1xf32>
    %113 = vector.broadcast %112 : vector<8x1xf32> to vector<8x8xf32>
    %114 = arith.divf %110, %113 : vector<8x8xf32>
    %cst_86 = arith.constant dense<0.000000e+00> : vector<8x8xf32>
    %115 = tpu.matmul %114, %99, %cst_86 {dimension_numbers = #tpu.dot_dimension_numbers<[1], [0], [0], [1], [0, 0, 1, 1], [], []>} : vector<8x8xf32>, vector<8x8xf32>, vector<8x8xf32> -> vector<8x8xf32>
    %cst_87 = arith.constant 1.68179286 : f32
    %116 = vector.broadcast %cst_87 : f32 to vector<8x8xf32>
    %117 = arith.mulf %115, %116 : vector<8x8xf32>
    %c0_88 = arith.constant 0 : index
    %c0_89 = arith.constant 0 : index
    %c16_90 = arith.constant 16 : index
    %118 = vector.load %arg11[%c0_88, %c0_89, %c16_90] : memref<1x8x32xf32, #tpu.memory_space<vmem>>, vector<1x8x8xf32>
    %119 = vector.shape_cast %118 : vector<1x8x8xf32> to vector<8x8xf32>
    %120 = vector.shape_cast %117 : vector<8x8xf32> to vector<1x8x8xf32>
    tpu.vector_store %arg11[%c0_88, %c0_89, %c16_90], %120 {strides = array<i32>} : memref<1x8x32xf32, #tpu.memory_space<vmem>>, vector<1x8x8xf32>,
    %cst_91 = arith.constant dense<0.000000e+00> : vector<8x8xf32>
    %121 = tpu.matmul %92, %97, %cst_91 {dimension_numbers = #tpu.dot_dimension_numbers<[1], [1], [0], [0], [0, 0, 1, 0], [], []>} : vector<8x8xf32>, vector<8x8xf32>, vector<8x8xf32> -> vector<8x8xf32>
    %c0_92 = arith.constant 0 : index
    %c2_93 = arith.constant 2 : index
    %c0_94 = arith.constant 0 : index
    %c0_95 = arith.constant 0 : index
    %122 = vector.load %arg13[%c0_92, %c2_93, %c0_94, %c0_95] : memref<1x4x8x8xf32, #tpu.memory_space<vmem>>, vector<1x1x8x8xf32>
    %123 = vector.shape_cast %122 : vector<1x1x8x8xf32> to vector<8x8xf32>
    %124 = vector.shape_cast %121 : vector<8x8xf32> to vector<1x1x8x8xf32>
    tpu.vector_store %arg13[%c0_92, %c2_93, %c0_94, %c0_95], %124 {strides = array<i32>} : memref<1x4x8x8xf32, #tpu.memory_space<vmem>>, vector<1x1x8x8xf32>,
    %cst_96 = arith.constant dense<0.000000e+00> : vector<8x8xf32>
    %125 = tpu.matmul %94, %98, %cst_96 {dimension_numbers = #tpu.dot_dimension_numbers<[1], [1], [0], [0], [0, 0, 1, 0], [], []>} : vector<8x8xf32>, vector<8x8xf32>, vector<8x8xf32> -> vector<8x8xf32>
    %c0_97 = arith.constant 0 : index
    %c2_98 = arith.constant 2 : index
    %c0_99 = arith.constant 0 : index
    %c0_100 = arith.constant 0 : index
    %126 = vector.load %arg14[%c0_97, %c2_98, %c0_99, %c0_100] : memref<1x4x8x8xf32, #tpu.memory_space<vmem>>, vector<1x1x8x8xf32>
    %127 = vector.shape_cast %126 : vector<1x1x8x8xf32> to vector<8x8xf32>
    %128 = vector.shape_cast %125 : vector<8x8xf32> to vector<1x1x8x8xf32>
    tpu.vector_store %arg14[%c0_97, %c2_98, %c0_99, %c0_100], %128 {strides = array<i32>} : memref<1x4x8x8xf32, #tpu.memory_space<vmem>>, vector<1x1x8x8xf32>,
    %cst_101 = arith.constant dense<0.000000e+00> : vector<8x8xf32>
    %129 = tpu.matmul %96, %99, %cst_101 {dimension_numbers = #tpu.dot_dimension_numbers<[1], [1], [0], [0], [0, 0, 1, 0], [], []>} : vector<8x8xf32>, vector<8x8xf32>, vector<8x8xf32> -> vector<8x8xf32>
    %c0_102 = arith.constant 0 : index
    %c2_103 = arith.constant 2 : index
    %c0_104 = arith.constant 0 : index
    %c0_105 = arith.constant 0 : index
    %130 = vector.load %arg15[%c0_102, %c2_103, %c0_104, %c0_105] : memref<1x4x8x8xf32, #tpu.memory_space<vmem>>, vector<1x1x8x8xf32>
    %131 = vector.shape_cast %130 : vector<1x1x8x8xf32> to vector<8x8xf32>
    %132 = vector.shape_cast %129 : vector<8x8xf32> to vector<1x1x8x8xf32>
    tpu.vector_store %arg15[%c0_102, %c2_103, %c0_104, %c0_105], %132 {strides = array<i32>} : memref<1x4x8x8xf32, #tpu.memory_space<vmem>>, vector<1x1x8x8xf32>,
    %133 = arith.index_cast %4 : i32 to index
    %c24 = arith.constant 24 : index
    %134 = vector.load %arg16[%133, %c24] : memref<8x32xf32, #tpu.memory_space<vmem>>, vector<8x8xf32>
    %135 = arith.index_cast %4 : i32 to index
    %c24_106 = arith.constant 24 : index
    %136 = vector.load %arg17[%135, %c24_106] : memref<8x32xf32, #tpu.memory_space<vmem>>, vector<8x8xf32>
    %137 = arith.index_cast %4 : i32 to index
    %c24_107 = arith.constant 24 : index
    %138 = vector.load %arg18[%137, %c24_107] : memref<8x32xf32, #tpu.memory_space<vmem>>, vector<8x8xf32>
    %c0_108 = arith.constant 0 : index
    %c24_109 = arith.constant 24 : index
    %139 = vector.load %arg16[%c0_108, %c24_109] : memref<8x32xf32, #tpu.memory_space<vmem>>, vector<8x8xf32>
    %c0_110 = arith.constant 0 : index
    %c24_111 = arith.constant 24 : index
    %140 = vector.load %arg17[%c0_110, %c24_111] : memref<8x32xf32, #tpu.memory_space<vmem>>, vector<8x8xf32>
    %c0_112 = arith.constant 0 : index
    %c24_113 = arith.constant 24 : index
    %141 = vector.load %arg18[%c0_112, %c24_113] : memref<8x32xf32, #tpu.memory_space<vmem>>, vector<8x8xf32>
    %cst_114 = arith.constant dense<0.000000e+00> : vector<8x8xf32>
    %142 = tpu.matmul %134, %140, %cst_114 {dimension_numbers = #tpu.dot_dimension_numbers<[1], [1], [0], [0], [0, 0, 1, 0], [], []>} : vector<8x8xf32>, vector<8x8xf32>, vector<8x8xf32> -> vector<8x8xf32>
    %143 = vector.broadcast %6 : vector<1x8xf32> to vector<8x8xf32>
    %144 = arith.addf %142, %143 : vector<8x8xf32>
    %c0_115 = arith.constant 0 : index
    %c3 = arith.constant 3 : index
    %c0_116 = arith.constant 0 : index
    %c0_117 = arith.constant 0 : index
    %145 = vector.load %arg12[%c0_115, %c3, %c0_116, %c0_117] : memref<1x4x8x8xf32, #tpu.memory_space<vmem>>, vector<1x1x8x8xf32>
    %146 = vector.shape_cast %145 : vector<1x1x8x8xf32> to vector<8x8xf32>
    %147 = vector.shape_cast %144 : vector<8x8xf32> to vector<1x1x8x8xf32>
    tpu.vector_store %arg12[%c0_115, %c3, %c0_116, %c0_117], %147 {strides = array<i32>} : memref<1x4x8x8xf32, #tpu.memory_space<vmem>>, vector<1x1x8x8xf32>,
    %cst_118 = arith.constant dense<0xFF800000> : vector<8xf32>
    %148 = vector.multi_reduction <maximumf>, %144, %cst_118 [1] : vector<8x8xf32> to vector<8xf32>
    %149 = vector.shape_cast %148 : vector<8xf32> to vector<8x1xf32>
    %150 = vector.broadcast %149 : vector<8x1xf32> to vector<8x8xf32>
    %151 = arith.subf %144, %150 : vector<8x8xf32>
    %152 = math.exp %151 : vector<8x8xf32>
    %cst_119 = arith.constant dense<0.000000e+00> : vector<8xf32>
    %153 = vector.multi_reduction <add>, %152, %cst_119 [1] : vector<8x8xf32> to vector<8xf32>
    %154 = vector.shape_cast %153 : vector<8xf32> to vector<8x1xf32>
    %155 = vector.broadcast %154 : vector<8x1xf32> to vector<8x8xf32>
    %156 = arith.divf %152, %155 : vector<8x8xf32>
    %cst_120 = arith.constant dense<0.000000e+00> : vector<8x8xf32>
    %157 = tpu.matmul %156, %141, %cst_120 {dimension_numbers = #tpu.dot_dimension_numbers<[1], [0], [0], [1], [0, 0, 1, 1], [], []>} : vector<8x8xf32>, vector<8x8xf32>, vector<8x8xf32> -> vector<8x8xf32>
    %cst_121 = arith.constant 1.68179286 : f32
    %158 = vector.broadcast %cst_121 : f32 to vector<8x8xf32>
    %159 = arith.mulf %157, %158 : vector<8x8xf32>
    %c0_122 = arith.constant 0 : index
    %c0_123 = arith.constant 0 : index
    %c24_124 = arith.constant 24 : index
    %160 = vector.load %arg11[%c0_122, %c0_123, %c24_124] : memref<1x8x32xf32, #tpu.memory_space<vmem>>, vector<1x8x8xf32>
    %161 = vector.shape_cast %160 : vector<1x8x8xf32> to vector<8x8xf32>
    %162 = vector.shape_cast %159 : vector<8x8xf32> to vector<1x8x8xf32>
    tpu.vector_store %arg11[%c0_122, %c0_123, %c24_124], %162 {strides = array<i32>} : memref<1x8x32xf32, #tpu.memory_space<vmem>>, vector<1x8x8xf32>,
    %cst_125 = arith.constant dense<0.000000e+00> : vector<8x8xf32>
    %163 = tpu.matmul %134, %139, %cst_125 {dimension_numbers = #tpu.dot_dimension_numbers<[1], [1], [0], [0], [0, 0, 1, 0], [], []>} : vector<8x8xf32>, vector<8x8xf32>, vector<8x8xf32> -> vector<8x8xf32>
    %c0_126 = arith.constant 0 : index
    %c3_127 = arith.constant 3 : index
    %c0_128 = arith.constant 0 : index
    %c0_129 = arith.constant 0 : index
    %164 = vector.load %arg13[%c0_126, %c3_127, %c0_128, %c0_129] : memref<1x4x8x8xf32, #tpu.memory_space<vmem>>, vector<1x1x8x8xf32>
    %165 = vector.shape_cast %164 : vector<1x1x8x8xf32> to vector<8x8xf32>
    %166 = vector.shape_cast %163 : vector<8x8xf32> to vector<1x1x8x8xf32>
    tpu.vector_store %arg13[%c0_126, %c3_127, %c0_128, %c0_129], %166 {strides = array<i32>} : memref<1x4x8x8xf32, #tpu.memory_space<vmem>>, vector<1x1x8x8xf32>,
    %cst_130 = arith.constant dense<0.000000e+00> : vector<8x8xf32>
    %167 = tpu.matmul %136, %140, %cst_130 {dimension_numbers = #tpu.dot_dimension_numbers<[1], [1], [0], [0], [0, 0, 1, 0], [], []>} : vector<8x8xf32>, vector<8x8xf32>, vector<8x8xf32> -> vector<8x8xf32>
    %c0_131 = arith.constant 0 : index
    %c3_132 = arith.constant 3 : index
    %c0_133 = arith.constant 0 : index
    %c0_134 = arith.constant 0 : index
    %168 = vector.load %arg14[%c0_131, %c3_132, %c0_133, %c0_134] : memref<1x4x8x8xf32, #tpu.memory_space<vmem>>, vector<1x1x8x8xf32>
    %169 = vector.shape_cast %168 : vector<1x1x8x8xf32> to vector<8x8xf32>
    %170 = vector.shape_cast %167 : vector<8x8xf32> to vector<1x1x8x8xf32>
    tpu.vector_store %arg14[%c0_131, %c3_132, %c0_133, %c0_134], %170 {strides = array<i32>} : memref<1x4x8x8xf32, #tpu.memory_space<vmem>>, vector<1x1x8x8xf32>,
    %cst_135 = arith.constant dense<0.000000e+00> : vector<8x8xf32>
    %171 = tpu.matmul %138, %141, %cst_135 {dimension_numbers = #tpu.dot_dimension_numbers<[1], [1], [0], [0], [0, 0, 1, 0], [], []>} : vector<8x8xf32>, vector<8x8xf32>, vector<8x8xf32> -> vector<8x8xf32>
    %c0_136 = arith.constant 0 : index
    %c3_137 = arith.constant 3 : index
    %c0_138 = arith.constant 0 : index
    %c0_139 = arith.constant 0 : index
    %172 = vector.load %arg15[%c0_136, %c3_137, %c0_138, %c0_139] : memref<1x4x8x8xf32, #tpu.memory_space<vmem>>, vector<1x1x8x8xf32>
    %173 = vector.shape_cast %172 : vector<1x1x8x8xf32> to vector<8x8xf32>
    %174 = vector.shape_cast %171 : vector<8x8xf32> to vector<1x1x8x8xf32>
    tpu.vector_store %arg15[%c0_136, %c3_137, %c0_138, %c0_139], %174 {strides = array<i32>} : memref<1x4x8x8xf32, #tpu.memory_space<vmem>>, vector<1x1x8x8xf32>,
    return
  }
  func.func @transform_0(%arg0: i32, %arg1: i32, %arg2: i32) -> (i32, i32, i32) {
    %c0_i32 = arith.constant 0 : i32
    %c0_i32_0 = arith.constant 0 : i32
    %c0_i32_1 = arith.constant 0 : i32
    return %arg0, %c0_i32, %c0_i32_0 : i32, i32, i32
  }
  func.func @transform_1(%arg0: i32, %arg1: i32, %arg2: i32) -> (i32, i32, i32) {
    %c0_i32 = arith.constant 0 : i32
    %c0_i32_0 = arith.constant 0 : i32
    %c0_i32_1 = arith.constant 0 : i32
    return %arg1, %c0_i32, %c0_i32_0 : i32, i32, i32
  }
  func.func @transform_2(%arg0: i32, %arg1: i32, %arg2: i32) -> (i32, i32, i32) {
    %c0_i32 = arith.constant 0 : i32
    %c0_i32_0 = arith.constant 0 : i32
    %c0_i32_1 = arith.constant 0 : i32
    return %arg1, %c0_i32, %c0_i32_0 : i32, i32, i32
  }
  func.func @transform_3(%arg0: i32, %arg1: i32, %arg2: i32) -> (i32, i32, i32) {
    %c0_i32 = arith.constant 0 : i32
    %c0_i32_0 = arith.constant 0 : i32
    %c0_i32_1 = arith.constant 0 : i32
    return %arg1, %c0_i32, %c0_i32_0 : i32, i32, i32
  }
  func.func @transform_4(%arg0: i32, %arg1: i32, %arg2: i32) -> (i32, i32, i32) {
    %c0_i32 = arith.constant 0 : i32
    %c0_i32_0 = arith.constant 0 : i32
    %c0_i32_1 = arith.constant 0 : i32
    return %arg1, %c0_i32, %c0_i32_0 : i32, i32, i32
  }
  func.func @transform_5(%arg0: i32, %arg1: i32, %arg2: i32) -> (i32, i32, i32) {
    %c0_i32 = arith.constant 0 : i32
    %c0_i32_0 = arith.constant 0 : i32
    %c0_i32_1 = arith.constant 0 : i32
    return %arg1, %c0_i32, %c0_i32_0 : i32, i32, i32
  }
  func.func @transform_6(%arg0: i32, %arg1: i32, %arg2: i32) -> (i32, i32, i32) {
    %c0_i32 = arith.constant 0 : i32
    %c0_i32_0 = arith.constant 0 : i32
    %c0_i32_1 = arith.constant 0 : i32
    return %arg1, %c0_i32, %c0_i32_0 : i32, i32, i32
  }
  func.func @transform_7(%arg0: i32, %arg1: i32, %arg2: i32) -> (i32, i32, i32) {
    %c0_i32 = arith.constant 0 : i32
    %c0_i32_0 = arith.constant 0 : i32
    %c0_i32_1 = arith.constant 0 : i32
    return %arg0, %c0_i32, %c0_i32_0 : i32, i32, i32
  }
  func.func @transform_8(%arg0: i32, %arg1: i32, %arg2: i32) -> (i32, i32, i32) {
    %c0_i32 = arith.constant 0 : i32
    return %arg0, %arg2, %arg1 : i32, i32, i32
  }
  func.func @transform_9(%arg0: i32, %arg1: i32, %arg2: i32) -> (i32, i32, i32, i32) {
    %c0_i32 = arith.constant 0 : i32
    %c0_i32_0 = arith.constant 0 : i32
    return %arg0, %arg1, %arg2, %c0_i32 : i32, i32, i32, i32
  }
  func.func @transform_10(%arg0: i32, %arg1: i32, %arg2: i32) -> (i32, i32, i32, i32) {
    %c0_i32 = arith.constant 0 : i32
    %c0_i32_0 = arith.constant 0 : i32
    return %arg0, %arg1, %arg2, %c0_i32 : i32, i32, i32, i32
  }
  func.func @transform_11(%arg0: i32, %arg1: i32, %arg2: i32) -> (i32, i32, i32, i32) {
    %c0_i32 = arith.constant 0 : i32
    %c0_i32_0 = arith.constant 0 : i32
    return %arg0, %arg1, %arg2, %c0_i32 : i32, i32, i32, i32
  }
  func.func @transform_12(%arg0: i32, %arg1: i32, %arg2: i32) -> (i32, i32, i32, i32) {
    %c0_i32 = arith.constant 0 : i32
    %c0_i32_0 = arith.constant 0 : i32
    return %arg0, %arg1, %arg2, %c0_i32 : i32, i32, i32, i32
  }
}

</mosaic_0001>

<llo_original>
// kernel: tpu_custom_call.1
$region0: #{tpu_custom_call.1}
  #allocation0 [shape = 'u32[]', space=smem, size = 0x4, offset = 0x4, fixed_abs, tag = 'smem constant byte address 0x4 - core index']
  #allocation1 [shape = 'u32[144,128]{1,0:T(1,128)}', space=vmem, size = 0x12000, scoped, tag = 'internal scratch']
  #allocation2 [shape = 'f32[8,32]{1,0:T(8,128)}', space=vmem, size = 0x1000, scoped, tag = 'scratch operand']
  #allocation3 [shape = 'f32[8,32]{1,0:T(8,128)}', space=vmem, size = 0x1000, scoped, tag = 'scratch operand']
  #allocation4 [shape = 'f32[8,32]{1,0:T(8,128)}', space=vmem, size = 0x1000, scoped, tag = 'scratch operand']
  %s0 = inlined_call_operand.hbm [shape: f32[2,8,32], index: 0, kind: input, shape index: {}]
  %s1 = inlined_call_operand.hbm [shape: f32[1,32,32], index: 1, kind: input, shape index: {}]
  %s2 = inlined_call_operand.hbm [shape: f32[1,32,32], index: 2, kind: input, shape index: {}]
  %s3 = inlined_call_operand.hbm [shape: f32[1,32,32], index: 3, kind: input, shape index: {}]
  %s4 = inlined_call_operand.vmem [shape: f32[1,1,32], index: 4, kind: input, shape index: {}]
  %s5 = inlined_call_operand.vmem [shape: f32[1,1,32], index: 5, kind: input, shape index: {}]
  %s6 = inlined_call_operand.vmem [shape: f32[1,1,32], index: 6, kind: input, shape index: {}]
  %s7 = inlined_call_operand.vmem [shape: f32[2,1,8], index: 7, kind: input, shape index: {}]
  %s8 = inlined_call_operand.hbm [shape: f32[2,8,32], index: 8, kind: output, shape index: {0}]
  %s9 = inlined_call_operand.hbm [shape: f32[2,4,8,8], index: 9, kind: output, shape index: {1}]
  %s10 = inlined_call_operand.hbm [shape: f32[2,4,8,8], index: 10, kind: output, shape index: {2}]
  %s11 = inlined_call_operand.hbm [shape: f32[2,4,8,8], index: 11, kind: output, shape index: {3}]
  %s12 = inlined_call_operand.hbm [shape: f32[2,4,8,8], index: 12, kind: output, shape index: {4}]
  %13 = xla_tuple %s8, %s9, %s10, %s11, %s12
  %s14 = sld [smem:[#allocation0]]
  $region117: #{tpu_custom_call.1} parent=0
    _
  %s16 = ssub.s32 1, %s14
  %s17 = scalar_select 0, %s16, %s14
  $region1: #{tpu_custom_call.1} parent=0
    #allocation5 [shape = 'u8[8192]{0}', space=vmem, size = 0x2000, scoped, tag = 'input window, operand 0']
    #allocation6 [shape = 's32[2]{0}', space=sflag, size = 0x8, scoped, tag = 'scoped memory for tpu_custom_call.1']
    #allocation7 [shape = 's32[2]{0}', space=sflag, size = 0x8, scoped, tag = 'scoped memory for tpu_custom_call.1']
    #allocation8 [shape = 'u8[16384]{0}', space=vmem, size = 0x4000, scoped, tag = 'input window, operand 1, single buffered']
    #allocation9 [shape = 's32[1]{0}', space=sflag, size = 0x4, scoped, tag = 'scoped memory for tpu_custom_call.1']
    #allocation10 [shape = 'u8[16384]{0}', space=vmem, size = 0x4000, scoped, tag = 'input window, operand 2, single buffered']
    #allocation11 [shape = 'u8[16384]{0}', space=vmem, size = 0x4000, scoped, tag = 'input window, operand 3, single buffered']
    #allocation12 [shape = 's32[1]{0}', space=sflag, size = 0x4, scoped, tag = 'scoped memory for tpu_custom_call.1']
    #allocation13 [shape = 'u8[8192]{0}', space=vmem, size = 0x2000, scoped, tag = 'output window, operand 0']
    #allocation14 [shape = 'u8[32768]{0}', space=vmem, size = 0x8000, scoped, tag = 'output window, operand 1']
    #allocation15 [shape = 's32[2]{0}', space=sflag, size = 0x8, scoped, tag = 'scoped memory for tpu_custom_call.1']
    #allocation16 [shape = 'u8[32768]{0}', space=vmem, size = 0x8000, scoped, tag = 'output window, operand 2']
    #allocation17 [shape = 'u8[32768]{0}', space=vmem, size = 0x8000, scoped, tag = 'output window, operand 3']
    #allocation18 [shape = 's32[2]{0}', space=sflag, size = 0x8, scoped, tag = 'scoped memory for tpu_custom_call.1']
    #allocation19 [shape = 'u8[32768]{0}', space=vmem, size = 0x8000, scoped, tag = 'output window, operand 4']
    %18 = vsyncpa [#allocation6], 0
    %s19 = scalar_lea.sflag [#allocation6], 1
    %20 = vsyncpa %s19, 0
    %21 = vsyncpa [#allocation9], 0
    %22 = vsyncpa [#allocation12], 0
    %23 = vsyncpa [#allocation7], 0
    %s24 = scalar_lea.sflag [#allocation7], 1
    %25 = vsyncpa %s24, 0
    %26 = vsyncpa [#allocation15], 0
    %s27 = scalar_lea.sflag [#allocation15], 1
    %28 = vsyncpa %s27, 0
    %29 = vsyncpa [#allocation18], 0
    %s30 = scalar_lea.sflag [#allocation18], 1
    %31 = vsyncpa %s30, 0
    loop: start=0, step=1, limit=4
    $region2: #{tpu_custom_call.1} parent=1 // loop_pre_header
      _
    $region3: #{tpu_custom_call.1} parent=1 // loop_header
      %s33 = sphi 0, %s37
      %p34 = scmp.ge.s32.totalorder %s33, 4
      %s40 = sphi 0, %s59
      %s41 = sphi 0, %s55
      %s42 = sphi 0, %s51
      %s43 = sphi 0, %s40
      %s44 = sphi 0, %s41
      %s45 = sphi 0, %s42
      %s46 = sphi 0, %s43
      %s47 = sphi 0, %s44
      %s48 = sphi 0, %s45
      %s62 = sphi 0, %s64
      %s65 = sphi 0, %s62
      %s66 = sphi 0, %s65
      %s82 = sphi 0, %s66
      %s88 = sphi 0, %s90
      %s91 = sphi 0, %s88
      %s92 = sphi 0, %s91
      %s108 = sphi 0, %s92
      %s114 = sphi 0, %s116
      %s117 = sphi 0, %s114
      %s118 = sphi 0, %s117
      %s134 = sphi 0, %s118
      %s140 = sphi 0, %s142
      %s143 = sphi 0, %s140
      %s144 = sphi 0, %s143
      %s160 = sphi 0, %s144
      %s166 = sphi 0, %s168
      %s169 = sphi 0, %s166
      %s170 = sphi 0, %s169
      %s186 = sphi 0, %s170
      %s192 = sphi 0, %s194
      %s195 = sphi 0, %s192
      %s196 = sphi 0, %s195
      %s212 = sphi 0, %s196
      %s218 = sphi 0, %s220
      %s221 = sphi 0, %s218
      %s222 = sphi 0, %s221
      %s238 = sphi 0, %s222
      %s244 = sphi 0, %s246
      %s247 = sphi 0, %s244
      %s248 = sphi 0, %s247
      %s264 = sphi 0, %s248
      %s274 = sphi 0, %s276
      %s277 = sphi 0, %s274
      %s278 = sphi 0, %s277
      %s294 = sphi 0, %s278
      %s304 = sphi 0, %s306
      %s307 = sphi 0, %s304
      %s308 = sphi 0, %s307
      %s324 = sphi 0, %s308
      %s334 = sphi 0, %s336
      %s337 = sphi 0, %s334
      %s338 = sphi 0, %s337
      %s354 = sphi 0, %s338
      %s364 = sphi 0, %s366
      %s367 = sphi 0, %s364
      %s368 = sphi 0, %s367
      %s384 = sphi 0, %s368
      %s394 = sphi 0, %s396
      %s397 = sphi 0, %s394
      %s398 = sphi 0, %s397
      %s414 = sphi 0, %s398
    $region4: #{tpu_custom_call.1} parent=1 // loop_header_branch
      %36 = sbr.rel (%p34) target = $region8
    $region5: #{tpu_custom_call.1} parent=1 // loop_body
      %s38 = ssub.s32 %s33, 1
      %s39 = ssub.s32 %s33, 2
      %s49 = sadd.s32 1, %s42
      %p50 = scmp.ge.s32.totalorder %s49, 1
      %s51 = scalar_select %p50, 0, %s49
      %s52 = sadd.s32 1, %s41
      %s53 = scalar_select %p50, %s52, %s41
      %p54 = scmp.ge.s32.totalorder %s53, 1
      %s55 = scalar_select %p54, 0, %s53
      %s56 = sadd.s32 1, %s40
      %s57 = scalar_select %p54, %s56, %s40
      %p58 = scmp.ge.s32.totalorder %s57, 2
      %s59 = scalar_select %p58, 0, %s57
      %s60 = ssub.s32 %s40, %s59
      %p61 = scmp.eq.s32.totalorder %s60, 0
      %s63 = sadd.s32 %s62, 1
      %s64 = scalar_select %p61, %s62, %s63
      %p67 = pneg %p61
      %p68 = scmp.eq.s32.totalorder %s33, 1
      %p69 = por %p67, %p68
      %p70 = scmp.ne.s32.totalorder %s62, %s65
      %p71 = scmp.eq.s32.totalorder %s33, 0
      %p72 = por %p70, %p71
      %p73 = scmp.ne.s32.totalorder %s62, %s65
      %p74 = scmp.eq.s32.totalorder %s38, 1
      %p75 = por %p73, %p74
      %p76 = scmp.ne.s32.totalorder %s65, %s66
      %p77 = scmp.eq.s32.totalorder %s38, 0
      %p78 = por %p76, %p77
      %p79 = scmp.ne.s32.totalorder %s65, %s66
      %p80 = scmp.eq.s32.totalorder %s39, 1
      %p81 = por %p79, %p80
      %p83 = scmp.ne.s32.totalorder %s66, %s82
      %p84 = scmp.eq.s32.totalorder %s39, 0
      %p85 = por %p83, %p84
      %s86 = ssub.s32 %s41, %s55
      %p87 = scmp.eq.s32.totalorder %s86, 0
      %s89 = sadd.s32 %s88, 1
      %s90 = scalar_select %p87, %s88, %s89
      %p93 = pneg %p87
      %p94 = scmp.eq.s32.totalorder %s33, 1
      %p95 = por %p93, %p94
      %p96 = scmp.ne.s32.totalorder %s88, %s91
      %p97 = scmp.eq.s32.totalorder %s33, 0
      %p98 = por %p96, %p97
      %p99 = scmp.ne.s32.totalorder %s88, %s91
      %p100 = scmp.eq.s32.totalorder %s38, 1
      %p101 = por %p99, %p100
      %p102 = scmp.ne.s32.totalorder %s91, %s92
      %p103 = scmp.eq.s32.totalorder %s38, 0
      %p104 = por %p102, %p103
      %p105 = scmp.ne.s32.totalorder %s91, %s92
      %p106 = scmp.eq.s32.totalorder %s39, 1
      %p107 = por %p105, %p106
      %p109 = scmp.ne.s32.totalorder %s92, %s108
      %p110 = scmp.eq.s32.totalorder %s39, 0
      %p111 = por %p109, %p110
      %s112 = ssub.s32 %s41, %s55
      %p113 = scmp.eq.s32.totalorder %s112, 0
      %s115 = sadd.s32 %s114, 1
      %s116 = scalar_select %p113, %s114, %s115
      %p119 = pneg %p113
      %p120 = scmp.eq.s32.totalorder %s33, 1
      %p121 = por %p119, %p120
      %p122 = scmp.ne.s32.totalorder %s114, %s117
      %p123 = scmp.eq.s32.totalorder %s33, 0
      %p124 = por %p122, %p123
      %p125 = scmp.ne.s32.totalorder %s114, %s117
      %p126 = scmp.eq.s32.totalorder %s38, 1
      %p127 = por %p125, %p126
      %p128 = scmp.ne.s32.totalorder %s117, %s118
      %p129 = scmp.eq.s32.totalorder %s38, 0
      %p130 = por %p128, %p129
      %p131 = scmp.ne.s32.totalorder %s117, %s118
      %p132 = scmp.eq.s32.totalorder %s39, 1
      %p133 = por %p131, %p132
      %p135 = scmp.ne.s32.totalorder %s118, %s134
      %p136 = scmp.eq.s32.totalorder %s39, 0
      %p137 = por %p135, %p136
      %s138 = ssub.s32 %s41, %s55
      %p139 = scmp.eq.s32.totalorder %s138, 0
      %s141 = sadd.s32 %s140, 1
      %s142 = scalar_select %p139, %s140, %s141
      %p145 = pneg %p139
      %p146 = scmp.eq.s32.totalorder %s33, 1
      %p147 = por %p145, %p146
      %p148 = scmp.ne.s32.totalorder %s140, %s143
      %p149 = scmp.eq.s32.totalorder %s33, 0
      %p150 = por %p148, %p149
      %p151 = scmp.ne.s32.totalorder %s140, %s143
      %p152 = scmp.eq.s32.totalorder %s38, 1
      %p153 = por %p151, %p152
      %p154 = scmp.ne.s32.totalorder %s143, %s144
      %p155 = scmp.eq.s32.totalorder %s38, 0
      %p156 = por %p154, %p155
      %p157 = scmp.ne.s32.totalorder %s143, %s144
      %p158 = scmp.eq.s32.totalorder %s39, 1
      %p159 = por %p157, %p158
      %p161 = scmp.ne.s32.totalorder %s144, %s160
      %p162 = scmp.eq.s32.totalorder %s39, 0
      %p163 = por %p161, %p162
      %s164 = ssub.s32 %s41, %s55
      %p165 = scmp.eq.s32.totalorder %s164, 0
      %s167 = sadd.s32 %s166, 1
      %s168 = scalar_select %p165, %s166, %s167
      %p171 = pneg %p165
      %p172 = scmp.eq.s32.totalorder %s33, 1
      %p173 = por %p171, %p172
      %p174 = scmp.ne.s32.totalorder %s166, %s169
      %p175 = scmp.eq.s32.totalorder %s33, 0
      %p176 = por %p174, %p175
      %p177 = scmp.ne.s32.totalorder %s166, %s169
      %p178 = scmp.eq.s32.totalorder %s38, 1
      %p179 = por %p177, %p178
      %p180 = scmp.ne.s32.totalorder %s169, %s170
      %p181 = scmp.eq.s32.totalorder %s38, 0
      %p182 = por %p180, %p181
      %p183 = scmp.ne.s32.totalorder %s169, %s170
      %p184 = scmp.eq.s32.totalorder %s39, 1
      %p185 = por %p183, %p184
      %p187 = scmp.ne.s32.totalorder %s170, %s186
      %p188 = scmp.eq.s32.totalorder %s39, 0
      %p189 = por %p187, %p188
      %s190 = ssub.s32 %s41, %s55
      %p191 = scmp.eq.s32.totalorder %s190, 0
      %s193 = sadd.s32 %s192, 1
      %s194 = scalar_select %p191, %s192, %s193
      %p197 = pneg %p191
      %p198 = scmp.eq.s32.totalorder %s33, 1
      %p199 = por %p197, %p198
      %p200 = scmp.ne.s32.totalorder %s192, %s195
      %p201 = scmp.eq.s32.totalorder %s33, 0
      %p202 = por %p200, %p201
      %p203 = scmp.ne.s32.totalorder %s192, %s195
      %p204 = scmp.eq.s32.totalorder %s38, 1
      %p205 = por %p203, %p204
      %p206 = scmp.ne.s32.totalorder %s195, %s196
      %p207 = scmp.eq.s32.totalorder %s38, 0
      %p208 = por %p206, %p207
      %p209 = scmp.ne.s32.totalorder %s195, %s196
      %p210 = scmp.eq.s32.totalorder %s39, 1
      %p211 = por %p209, %p210
      %p213 = scmp.ne.s32.totalorder %s196, %s212
      %p214 = scmp.eq.s32.totalorder %s39, 0
      %p215 = por %p213, %p214
      %s216 = ssub.s32 %s41, %s55
      %p217 = scmp.eq.s32.totalorder %s216, 0
      %s219 = sadd.s32 %s218, 1
      %s220 = scalar_select %p217, %s218, %s219
      %p223 = pneg %p217
      %p224 = scmp.eq.s32.totalorder %s33, 1
      %p225 = por %p223, %p224
      %p226 = scmp.ne.s32.totalorder %s218, %s221
      %p227 = scmp.eq.s32.totalorder %s33, 0
      %p228 = por %p226, %p227
      %p229 = scmp.ne.s32.totalorder %s218, %s221
      %p230 = scmp.eq.s32.totalorder %s38, 1
      %p231 = por %p229, %p230
      %p232 = scmp.ne.s32.totalorder %s221, %s222
      %p233 = scmp.eq.s32.totalorder %s38, 0
      %p234 = por %p232, %p233
      %p235 = scmp.ne.s32.totalorder %s221, %s222
      %p236 = scmp.eq.s32.totalorder %s39, 1
      %p237 = por %p235, %p236
      %p239 = scmp.ne.s32.totalorder %s222, %s238
      %p240 = scmp.eq.s32.totalorder %s39, 0
      %p241 = por %p239, %p240
      %s242 = ssub.s32 %s40, %s59
      %p243 = scmp.eq.s32.totalorder %s242, 0
      %s245 = sadd.s32 %s244, 1
      %s246 = scalar_select %p243, %s244, %s245
      %p249 = pneg %p243
      %p250 = scmp.eq.s32.totalorder %s33, 1
      %p251 = por %p249, %p250
      %p252 = scmp.ne.s32.totalorder %s244, %s247
      %p253 = scmp.eq.s32.totalorder %s33, 0
      %p254 = por %p252, %p253
      %p255 = scmp.ne.s32.totalorder %s244, %s247
      %p256 = scmp.eq.s32.totalorder %s38, 1
      %p257 = por %p255, %p256
      %p258 = scmp.ne.s32.totalorder %s247, %s248
      %p259 = scmp.eq.s32.totalorder %s38, 0
      %p260 = por %p258, %p259
      %p261 = scmp.ne.s32.totalorder %s247, %s248
      %p262 = scmp.eq.s32.totalorder %s39, 1
      %p263 = por %p261, %p262
      %p265 = scmp.ne.s32.totalorder %s248, %s264
      %p266 = scmp.eq.s32.totalorder %s39, 0
      %p267 = por %p265, %p266
      %s268 = ssub.s32 %s40, %s59
      %s269 = ssub.s32 %s42, %s51
      %s270 = sor.u32 %s268, %s269
      %s271 = ssub.s32 %s41, %s55
      %s272 = sor.u32 %s270, %s271
      %p273 = scmp.eq.s32.totalorder %s272, 0
      %s275 = sadd.s32 %s274, 1
      %s276 = scalar_select %p273, %s274, %s275
      %p279 = pneg %p273
      %p280 = scmp.eq.s32.totalorder %s33, 1
      %p281 = por %p279, %p280
      %p282 = scmp.ne.s32.totalorder %s274, %s277
      %p283 = scmp.eq.s32.totalorder %s33, 0
      %p284 = por %p282, %p283
      %p285 = scmp.ne.s32.totalorder %s274, %s277
      %p286 = scmp.eq.s32.totalorder %s38, 1
      %p287 = por %p285, %p286
      %p288 = scmp.ne.s32.totalorder %s277, %s278
      %p289 = scmp.eq.s32.totalorder %s38, 0
      %p290 = por %p288, %p289
      %p291 = scmp.ne.s32.totalorder %s277, %s278
      %p292 = scmp.eq.s32.totalorder %s39, 1
      %p293 = por %p291, %p292
      %p295 = scmp.ne.s32.totalorder %s278, %s294
      %p296 = scmp.eq.s32.totalorder %s39, 0
      %p297 = por %p295, %p296
      %s298 = ssub.s32 %s40, %s59
      %s299 = ssub.s32 %s41, %s55
      %s300 = sor.u32 %s298, %s299
      %s301 = ssub.s32 %s42, %s51
      %s302 = sor.u32 %s300, %s301
      %p303 = scmp.eq.s32.totalorder %s302, 0
      %s305 = sadd.s32 %s304, 1
      %s306 = scalar_select %p303, %s304, %s305
      %p309 = pneg %p303
      %p310 = scmp.eq.s32.totalorder %s33, 1
      %p311 = por %p309, %p310
      %p312 = scmp.ne.s32.totalorder %s304, %s307
      %p313 = scmp.eq.s32.totalorder %s33, 0
      %p314 = por %p312, %p313
      %p315 = scmp.ne.s32.totalorder %s304, %s307
      %p316 = scmp.eq.s32.totalorder %s38, 1
      %p317 = por %p315, %p316
      %p318 = scmp.ne.s32.totalorder %s307, %s308
      %p319 = scmp.eq.s32.totalorder %s38, 0
      %p320 = por %p318, %p319
      %p321 = scmp.ne.s32.totalorder %s307, %s308
      %p322 = scmp.eq.s32.totalorder %s39, 1
      %p323 = por %p321, %p322
      %p325 = scmp.ne.s32.totalorder %s308, %s324
      %p326 = scmp.eq.s32.totalorder %s39, 0
      %p327 = por %p325, %p326
      %s328 = ssub.s32 %s40, %s59
      %s329 = ssub.s32 %s41, %s55
      %s330 = sor.u32 %s328, %s329
      %s331 = ssub.s32 %s42, %s51
      %s332 = sor.u32 %s330, %s331
      %p333 = scmp.eq.s32.totalorder %s332, 0
      %s335 = sadd.s32 %s334, 1
      %s336 = scalar_select %p333, %s334, %s335
      %p339 = pneg %p333
      %p340 = scmp.eq.s32.totalorder %s33, 1
      %p341 = por %p339, %p340
      %p342 = scmp.ne.s32.totalorder %s334, %s337
      %p343 = scmp.eq.s32.totalorder %s33, 0
      %p344 = por %p342, %p343
      %p345 = scmp.ne.s32.totalorder %s334, %s337
      %p346 = scmp.eq.s32.totalorder %s38, 1
      %p347 = por %p345, %p346
      %p348 = scmp.ne.s32.totalorder %s337, %s338
      %p349 = scmp.eq.s32.totalorder %s38, 0
      %p350 = por %p348, %p349
      %p351 = scmp.ne.s32.totalorder %s337, %s338
      %p352 = scmp.eq.s32.totalorder %s39, 1
      %p353 = por %p351, %p352
      %p355 = scmp.ne.s32.totalorder %s338, %s354
      %p356 = scmp.eq.s32.totalorder %s39, 0
      %p357 = por %p355, %p356
      %s358 = ssub.s32 %s40, %s59
      %s359 = ssub.s32 %s41, %s55
      %s360 = sor.u32 %s358, %s359
      %s361 = ssub.s32 %s42, %s51
      %s362 = sor.u32 %s360, %s361
      %p363 = scmp.eq.s32.totalorder %s362, 0
      %s365 = sadd.s32 %s364, 1
      %s366 = scalar_select %p363, %s364, %s365
      %p369 = pneg %p363
      %p370 = scmp.eq.s32.totalorder %s33, 1
      %p371 = por %p369, %p370
      %p372 = scmp.ne.s32.totalorder %s364, %s367
      %p373 = scmp.eq.s32.totalorder %s33, 0
      %p374 = por %p372, %p373
      %p375 = scmp.ne.s32.totalorder %s364, %s367
      %p376 = scmp.eq.s32.totalorder %s38, 1
      %p377 = por %p375, %p376
      %p378 = scmp.ne.s32.totalorder %s367, %s368
      %p379 = scmp.eq.s32.totalorder %s38, 0
      %p380 = por %p378, %p379
      %p381 = scmp.ne.s32.totalorder %s367, %s368
      %p382 = scmp.eq.s32.totalorder %s39, 1
      %p383 = por %p381, %p382
      %p385 = scmp.ne.s32.totalorder %s368, %s384
      %p386 = scmp.eq.s32.totalorder %s39, 0
      %p387 = por %p385, %p386
      %s388 = ssub.s32 %s40, %s59
      %s389 = ssub.s32 %s41, %s55
      %s390 = sor.u32 %s388, %s389
      %s391 = ssub.s32 %s42, %s51
      %s392 = sor.u32 %s390, %s391
      %p393 = scmp.eq.s32.totalorder %s392, 0
      %s395 = sadd.s32 %s394, 1
      %s396 = scalar_select %p393, %s394, %s395
      %p399 = pneg %p393
      %p400 = scmp.eq.s32.totalorder %s33, 1
      %p401 = por %p399, %p400
      %p402 = scmp.ne.s32.totalorder %s394, %s397
      %p403 = scmp.eq.s32.totalorder %s33, 0
      %p404 = por %p402, %p403
      %p405 = scmp.ne.s32.totalorder %s394, %s397
      %p406 = scmp.eq.s32.totalorder %s38, 1
      %p407 = por %p405, %p406
      %p408 = scmp.ne.s32.totalorder %s397, %s398
      %p409 = scmp.eq.s32.totalorder %s38, 0
      %p410 = por %p408, %p409
      %p411 = scmp.ne.s32.totalorder %s397, %s398
      %p412 = scmp.eq.s32.totalorder %s39, 1
      %p413 = por %p411, %p412
      %p415 = scmp.ne.s32.totalorder %s398, %s414
      %p416 = scmp.eq.s32.totalorder %s39, 0
      %p417 = por %p415, %p416
      %p418 = scmp.le.s32.totalorder 1, %s33
      %p419 = scmp.lt.s32.totalorder %s33, 3
      %p420 = pnand %p418, %p419
      %p421 = pneg %p420
      // Predicated region
      $region9: #{tpu_custom_call.1} parent=5 // pred_check
        _
      $region10: #{tpu_custom_call.1} parent=5 // pred_check_branch
        %423 = sbr.rel (%p420) target = $region12
      $region11: #{tpu_custom_call.1} parent=5 // pred_region
        %s424 = ssub.s32 %s33, 1
        // Predicated region
        $region13: #{tpu_custom_call.1} parent=11 // pred_check
          %p425 = pneg %p104
        $region14: #{tpu_custom_call.1} parent=11 // pred_check_branch
          %427 = sbr.rel (%p425) target = $region16
        $region15: #{tpu_custom_call.1} parent=11 // pred_region
          %s429 = ssub.s32 512, 512
          %430 = vsyncadd [#allocation9], %s429
          %s431 = smul.addr %s44, 4
          %s432 = smul.addr %s431, 128
          %s433 = scalar_lea.hbm %s1, %s432
          %s434 = sshll.u32 [#allocation8], 4
          %s435 = int_to_ptr.vmem [resolvable:$true] %s434
          %440 = dma.hbm_to_vmem [thread:$0]  %s433, 512, %s435, [#allocation9], 128, 128, 8
        $region16: #{tpu_custom_call.1} parent=11 // pred_fallthru
          _
        // Predicated region
        $region17: #{tpu_custom_call.1} parent=11 // pred_check
          %p441 = pneg %p130
        $region18: #{tpu_custom_call.1} parent=11 // pred_check_branch
          %443 = sbr.rel (%p441) target = $region20
        $region19: #{tpu_custom_call.1} parent=11 // pred_region
          %s445 = ssub.s32 512, 512
          %446 = vsyncadd [#allocation9], %s445
          %s447 = smul.addr %s44, 4
          %s448 = smul.addr %s447, 128
          %s449 = scalar_lea.hbm %s2, %s448
          %s450 = sshll.u32 [#allocation10], 4
          %s451 = int_to_ptr.vmem [resolvable:$true] %s450
          %456 = dma.hbm_to_vmem [thread:$0]  %s449, 512, %s451, [#allocation9], 128, 128, 8
        $region20: #{tpu_custom_call.1} parent=11 // pred_fallthru
          _
        // Predicated region
        $region21: #{tpu_custom_call.1} parent=11 // pred_check
          %p457 = pneg %p156
        $region22: #{tpu_custom_call.1} parent=11 // pred_check_branch
          %459 = sbr.rel (%p457) target = $region24
        $region23: #{tpu_custom_call.1} parent=11 // pred_region
          %s461 = ssub.s32 512, 512
          %462 = vsyncadd [#allocation12], %s461
          %s463 = smul.addr %s44, 4
          %s464 = smul.addr %s463, 128
          %s465 = scalar_lea.hbm %s3, %s464
          %s466 = sshll.u32 [#allocation11], 4
          %s467 = int_to_ptr.vmem [resolvable:$true] %s466
          %472 = dma.hbm_to_vmem [thread:$0]  %s465, 512, %s467, [#allocation12], 128, 128, 8
        $region24: #{tpu_custom_call.1} parent=11 // pred_fallthru
          _
        // Predicated region
        $region25: #{tpu_custom_call.1} parent=11 // pred_check
          %p473 = pneg %p182
        $region26: #{tpu_custom_call.1} parent=11 // pred_check_branch
          %475 = sbr.rel (%p473) target = $region28
        $region27: #{tpu_custom_call.1} parent=11 // pred_region
          %p476 = scmp.lt.s32.totalorder %s44, 0
          %s477 = scalar_select %p476, %s44, 0
          %s478 = scalar_lea.vmem %s4, %s477
        $region28: #{tpu_custom_call.1} parent=11 // pred_fallthru
          _
        // Predicated region
        $region29: #{tpu_custom_call.1} parent=11 // pred_check
          %p479 = pneg %p208
        $region30: #{tpu_custom_call.1} parent=11 // pred_check_branch
          %481 = sbr.rel (%p479) target = $region32
        $region31: #{tpu_custom_call.1} parent=11 // pred_region
          %p482 = scmp.lt.s32.totalorder %s44, 0
          %s483 = scalar_select %p482, %s44, 0
          %s484 = scalar_lea.vmem %s5, %s483
        $region32: #{tpu_custom_call.1} parent=11 // pred_fallthru
          _
        // Predicated region
        $region33: #{tpu_custom_call.1} parent=11 // pred_check
          %p485 = pneg %p234
        $region34: #{tpu_custom_call.1} parent=11 // pred_check_branch
          %487 = sbr.rel (%p485) target = $region36
        $region35: #{tpu_custom_call.1} parent=11 // pred_region
          %p488 = scmp.lt.s32.totalorder %s44, 0
          %s489 = scalar_select %p488, %s44, 0
          %s490 = scalar_lea.vmem %s6, %s489
        $region36: #{tpu_custom_call.1} parent=11 // pred_fallthru
          _
      $region12: #{tpu_custom_call.1} parent=5 // pred_fallthru
        _
      %p491 = scmp.lt.s32.totalorder %s33, 2
      // Predicated region
      $region37: #{tpu_custom_call.1} parent=5 // pred_check
        %p492 = pneg %p491
      $region38: #{tpu_custom_call.1} parent=5 // pred_check_branch
        %494 = sbr.rel (%p492) target = $region40
      $region39: #{tpu_custom_call.1} parent=5 // pred_region
        // Predicated region
        $region41: #{tpu_custom_call.1} parent=39 // pred_check
          %p495 = pneg %p72
        $region42: #{tpu_custom_call.1} parent=39 // pred_check_branch
          %497 = sbr.rel (%p495) target = $region44
        $region43: #{tpu_custom_call.1} parent=39 // pred_region
          %s498 = sand.u32 %s62, 1
          %s499 = scalar_lea.sflag [#allocation6], %s498
          %s500 = sand.u32 %s62, 1
          %s501 = smul.addr %s500, 8
          %s502 = scalar_lea.vmem [#allocation5], %s501
          %s504 = ssub.s32 128, 128
          %505 = vsyncadd %s499, %s504
          %s506 = smul.addr %s40, 128
          %s507 = scalar_lea.hbm %s0, %s506
          %s509 = sshll.u32 %s502, 4
          %s510 = int_to_ptr.vmem [resolvable:$true] %s509
          %512 = dma.hbm_to_vmem [thread:$0]  %s507, 128, %s510, %s499
        $region44: #{tpu_custom_call.1} parent=39 // pred_fallthru
          _
        // Predicated region
        $region45: #{tpu_custom_call.1} parent=39 // pred_check
          %p513 = pneg %p254
        $region46: #{tpu_custom_call.1} parent=39 // pred_check_branch
          %515 = sbr.rel (%p513) target = $region48
        $region47: #{tpu_custom_call.1} parent=39 // pred_region
          %p516 = scmp.lt.s32.totalorder %s40, 1
          %s517 = scalar_select %p516, %s40, 1
          %s518 = scalar_lea.vmem %s7, %s517
        $region48: #{tpu_custom_call.1} parent=39 // pred_fallthru
          _
      $region40: #{tpu_custom_call.1} parent=5 // pred_fallthru
        _
      %p519 = scmp.le.s32.totalorder 1, %s33
      %p520 = scmp.lt.s32.totalorder %s33, 3
      %p521 = pnand %p519, %p520
      %p522 = pneg %p521
      // Predicated region
      $region49: #{tpu_custom_call.1} parent=5 // pred_check
        _
      $region50: #{tpu_custom_call.1} parent=5 // pred_check_branch
        %524 = sbr.rel (%p521) target = $region52
      $region51: #{tpu_custom_call.1} parent=5 // pred_region
        %s525 = ssub.s32 %s33, 1
        %s526 = sand.u32 %s65, 1
        %s527 = scalar_lea.sflag [#allocation6], %s526
        %s528 = sand.u32 %s65, 1
        %s529 = smul.addr %s528, 8
        %s530 = scalar_lea.vmem [#allocation5], %s529
        // Predicated region
        $region53: #{tpu_custom_call.1} parent=51 // pred_check
          %p531 = pneg %p78
        $region54: #{tpu_custom_call.1} parent=51 // pred_check_branch
          %533 = sbr.rel (%p531) target = $region56
        $region55: #{tpu_custom_call.1} parent=51 // pred_region
          %534 = dma.done %s527, 128
        $region56: #{tpu_custom_call.1} parent=51 // pred_fallthru
          _
        // Predicated region
        $region57: #{tpu_custom_call.1} parent=51 // pred_check
          %p535 = pneg %p104
        $region58: #{tpu_custom_call.1} parent=51 // pred_check_branch
          %537 = sbr.rel (%p535) target = $region60
        $region59: #{tpu_custom_call.1} parent=51 // pred_region
          %538 = dma.done [#allocation9], 512
        $region60: #{tpu_custom_call.1} parent=51 // pred_fallthru
          _
        // Predicated region
        $region61: #{tpu_custom_call.1} parent=51 // pred_check
          %p539 = pneg %p130
        $region62: #{tpu_custom_call.1} parent=51 // pred_check_branch
          %541 = sbr.rel (%p539) target = $region64
        $region63: #{tpu_custom_call.1} parent=51 // pred_region
          %542 = dma.done [#allocation9], 512
        $region64: #{tpu_custom_call.1} parent=51 // pred_fallthru
          _
        // Predicated region
        $region65: #{tpu_custom_call.1} parent=51 // pred_check
          %p543 = pneg %p156
        $region66: #{tpu_custom_call.1} parent=51 // pred_check_branch
          %545 = sbr.rel (%p543) target = $region68
        $region67: #{tpu_custom_call.1} parent=51 // pred_region
          %546 = dma.done [#allocation12], 512
        $region68: #{tpu_custom_call.1} parent=51 // pred_fallthru
          _
        %s547 = sand.u32 %s65, 1
        %s548 = scalar_lea.sflag [#allocation6], %s547
        %s549 = sand.u32 %s65, 1
        %s550 = smul.addr %s549, 8
        %s551 = scalar_lea.vmem [#allocation5], %s550
        %p552 = pneg %p78
        %p553 = pneg %p75
        %p554 = pneg %p104
        %p555 = pneg %p101
        %p556 = pneg %p130
        %p557 = pneg %p127
        %p558 = pneg %p156
        %p559 = pneg %p153
        %p560 = scmp.lt.s32.totalorder %s44, 0
        %s561 = scalar_select %p560, %s44, 0
        %s562 = scalar_lea.vmem %s4, %s561
        %p563 = pneg %p182
        %p564 = pneg %p179
        %p565 = scmp.lt.s32.totalorder %s44, 0
        %s566 = scalar_select %p565, %s44, 0
        %s567 = scalar_lea.vmem %s5, %s566
        %p568 = pneg %p208
        %p569 = pneg %p205
        %p570 = scmp.lt.s32.totalorder %s44, 0
        %s571 = scalar_select %p570, %s44, 0
        %s572 = scalar_lea.vmem %s6, %s571
        %p573 = pneg %p234
        %p574 = pneg %p231
        %p575 = scmp.lt.s32.totalorder %s43, 1
        %s576 = scalar_select %p575, %s43, 1
        %s577 = scalar_lea.vmem %s7, %s576
        %p578 = pneg %p260
        %p579 = pneg %p257
        %p580 = pneg %p290
        %p581 = pneg %p287
        %s582 = sand.u32 %s277, 1
        %s583 = scalar_lea.sflag [#allocation7], %s582
        %s584 = sand.u32 %s277, 1
        %s585 = smul.addr %s584, 8
        %s586 = scalar_lea.vmem [#allocation13], %s585
        %p587 = pneg %p320
        %p588 = pneg %p317
        %s589 = sand.u32 %s38, 1
        %s590 = scalar_lea.sflag [#allocation15], %s589
        %s591 = sand.u32 %s307, 1
        %s592 = smul.addr %s591, 32
        %s593 = scalar_lea.vmem [#allocation14], %s592
        %p594 = pneg %p350
        %p595 = pneg %p347
        %s596 = sand.u32 %s38, 1
        %s597 = scalar_lea.sflag [#allocation15], %s596
        %s598 = sand.u32 %s337, 1
        %s599 = smul.addr %s598, 32
        %s600 = scalar_lea.vmem [#allocation16], %s599
        %p601 = pneg %p380
        %p602 = pneg %p377
        %s603 = sand.u32 %s38, 1
        %s604 = scalar_lea.sflag [#allocation18], %s603
        %s605 = sand.u32 %s367, 1
        %s606 = smul.addr %s605, 32
        %s607 = scalar_lea.vmem [#allocation17], %s606
        %p608 = pneg %p410
        %p609 = pneg %p407
        %s610 = sand.u32 %s38, 1
        %s611 = scalar_lea.sflag [#allocation18], %s610
        %s612 = sand.u32 %s397, 1
        %s613 = smul.addr %s612, 32
        %s614 = scalar_lea.vmem [#allocation19], %s613
        %p615 = scmp.lt.s32.totalorder %s44, 0
        %s616 = scalar_select %p615, %s44, 0
        %s617 = scalar_lea.vmem %s4, %s616
        %p618 = scmp.lt.s32.totalorder %s44, 0
        %s619 = scalar_select %p618, %s44, 0
        %s620 = scalar_lea.vmem %s5, %s619
        %p621 = scmp.lt.s32.totalorder %s44, 0
        %s622 = scalar_select %p621, %s44, 0
        %s623 = scalar_lea.vmem %s6, %s622
        %p624 = scmp.lt.s32.totalorder %s43, 1
        %s625 = scalar_select %p624, %s43, 1
        %s626 = scalar_lea.vmem %s7, %s625
        %s627 = smul.u32 4, %s44
        %s628 = smul.u32 4, %s44
        %s629 = smul.u32 4, %s44
        %s630 = smul.u32 4, %s44
        %p631 = scmp.eq.s32.totalorder %s45, 0
        // Predicated region
        $region69: #{tpu_custom_call.1} parent=51 // pred_check
          %p632 = pneg %p631
        $region70: #{tpu_custom_call.1} parent=51 // pred_check_branch
          %634 = sbr.rel (%p632) target = $region72
        $region71: #{tpu_custom_call.1} parent=51 // pred_region
          %v635 = vld [vmem:[%s530] sm:$0xff]
          %v636 = vld [vmem:[#allocation8] sm:$0xff]
          %v637 = vld [vmem:[#allocation8 + $0x8] sm:$0xff]
          %v638 = vld [vmem:[#allocation8 + $0x10] sm:$0xff]
          %v639 = vld [vmem:[#allocation8 + $0x18] sm:$0xff]
          %v640 = vld [vmem:[%s617] sm:$0x1]
          %v642 = vlaneseq
          %v643 = vshrl.u32 %v642, 7
          %v644 = vsub.s32 0, %v643
          %v645 = vrot.slane %v640, %v644
          %vm647 = vcmask 261120
          %v649 = vsel %vm647, %v635, 0
          %651 = vmatprep.subr.mxu0 0.0
          %652 = vmatpush1.msra.mxu0 %v636
          %653 = vmatprep.subr.mxu0 0.0
          %654 = vmatpush1.msra.mxu0 %v637
          %655 = vmatprep.subr.mxu0 0.0
          %656 = vmatpush1.msra.mxu0 %v638
          %657 = vmatprep.subr.mxu0 0.0
          %658 = vmatpush1.msra.mxu0 %v639
          %659 = vmatprep.subr.mxu0 0.0
          %660 = vmatpush1.msra.mxu0 0.0
          %661 = vmatprep.subr.mxu0 0.0
          %662 = vmatpush1.msra.mxu0 0.0
          %663 = vmatprep.subr.mxu0 0.0
          %664 = vmatpush1.msra.mxu0 0.0
          %665 = vmatprep.subr.mxu0 0.0
          %666 = vmatpush1.msra.mxu0 0.0
          %667 = vmatprep.subr.mxu0 0.0
          %668 = vmatpush1.msra.mxu0 0.0
          %669 = vmatprep.subr.mxu0 0.0
          %670 = vmatpush1.msra.mxu0 0.0
          %671 = vmatprep.subr.mxu0 0.0
          %672 = vmatpush1.msra.mxu0 0.0
          %673 = vmatprep.subr.mxu0 0.0
          %674 = vmatpush1.msra.mxu0 0.0
          %675 = vmatprep.subr.mxu0 0.0
          %676 = vmatpush1.msra.mxu0 0.0
          %677 = vmatprep.subr.mxu0 0.0
          %678 = vmatpush1.msra.mxu0 0.0
          %679 = vmatprep.subr.mxu0 0.0
          %680 = vmatpush1.msra.mxu0 0.0
          %681 = vmatprep.subr.mxu0 0.0
          %682 = vmatpush1.msra.mxu0 0.0
          %683 = vmatprep.subr.mxu0 0.0
          %684 = vmatpush1.msra.mxu0 0.0
          %685 = vmatprep.subr.mxu0 0.0
          %686 = vmatpush1.msra.mxu0 0.0
          %687 = vmatprep.subr.mxu0 0.0
          %688 = vmatpush1.msra.mxu0 0.0
          %689 = vmatprep.subr.mxu0 0.0
          %690 = vmatpush1.msra.mxu0 0.0
          %691 = vmatprep.subr.mxu0 0.0
          %692 = vmatpush1.msra.mxu0 0.0
          %693 = vmatprep.subr.mxu0 0.0
          %694 = vmatpush1.msra.mxu0 0.0
          %695 = vmatprep.subr.mxu0 0.0
          %696 = vmatpush1.msra.mxu0 0.0
          %697 = vmatprep.subr.mxu0 0.0
          %698 = vmatpush1.msra.mxu0 0.0
          %699 = vmatprep.subr.mxu0 0.0
          %700 = vmatpush1.msra.mxu0 0.0
          %701 = vmatprep.subr.mxu0 0.0
          %702 = vmatpush1.msra.mxu0 0.0
          %703 = vmatprep.subr.mxu0 0.0
          %704 = vmatpush1.msra.mxu0 0.0
          %705 = vmatprep.subr.mxu0 0.0
          %706 = vmatpush1.msra.mxu0 0.0
          %707 = vmatprep.subr.mxu0 0.0
          %708 = vmatpush1.msra.mxu0 0.0
          %709 = vmatprep.subr.mxu0 0.0
          %710 = vmatpush1.msra.mxu0 0.0
          %711 = vmatprep.subr.mxu0 0.0
          %712 = vmatpush1.msra.mxu0 0.0
          %713 = vmatprep.subr.mxu0 0.0
          %714 = vmatpush1.msra.mxu0 0.0
          %715 = vmatprep.mubr.f32.mxu0 0.0
          %716 = vmatmul.mubr.f32.gmra.mrb[0].mxu0 %v649
          %v717 = vpop.f32.mrb[0].mxu0
          %v718 = vadd.f32 %v645, %v717
          %v719 = vpop.f32.mrb[0].mxu0
          %720 = vdwg.mxu0
          %v721 = vmul.f32 %v718, 0.59460354
          %722 = vst.msk [vmem:[#allocation2] sm:$0xff] %vm647, %v721
          %v723 = vld [vmem:[#allocation10] sm:$0xff]
          %v724 = vld [vmem:[#allocation10 + $0x8] sm:$0xff]
          %v725 = vld [vmem:[#allocation10 + $0x10] sm:$0xff]
          %v726 = vld [vmem:[#allocation10 + $0x18] sm:$0xff]
          %v727 = vld [vmem:[%s620] sm:$0x1]
          %v729 = vlaneseq
          %v730 = vshrl.u32 %v729, 7
          %v731 = vsub.s32 0, %v730
          %v732 = vrot.slane %v727, %v731
          %734 = vmatprep.subr.mxu0 0.0
          %735 = vmatpush1.msra.mxu0 %v723
          %736 = vmatprep.subr.mxu0 0.0
          %737 = vmatpush1.msra.mxu0 %v724
          %738 = vmatprep.subr.mxu0 0.0
          %739 = vmatpush1.msra.mxu0 %v725
          %740 = vmatprep.subr.mxu0 0.0
          %741 = vmatpush1.msra.mxu0 %v726
          %742 = vmatprep.subr.mxu0 0.0
          %743 = vmatpush1.msra.mxu0 0.0
          %744 = vmatprep.subr.mxu0 0.0
          %745 = vmatpush1.msra.mxu0 0.0
          %746 = vmatprep.subr.mxu0 0.0
          %747 = vmatpush1.msra.mxu0 0.0
          %748 = vmatprep.subr.mxu0 0.0
          %749 = vmatpush1.msra.mxu0 0.0
          %750 = vmatprep.subr.mxu0 0.0
          %751 = vmatpush1.msra.mxu0 0.0
          %752 = vmatprep.subr.mxu0 0.0
          %753 = vmatpush1.msra.mxu0 0.0
          %754 = vmatprep.subr.mxu0 0.0
          %755 = vmatpush1.msra.mxu0 0.0
          %756 = vmatprep.subr.mxu0 0.0
          %757 = vmatpush1.msra.mxu0 0.0
          %758 = vmatprep.subr.mxu0 0.0
          %759 = vmatpush1.msra.mxu0 0.0
          %760 = vmatprep.subr.mxu0 0.0
          %761 = vmatpush1.msra.mxu0 0.0
          %762 = vmatprep.subr.mxu0 0.0
          %763 = vmatpush1.msra.mxu0 0.0
          %764 = vmatprep.subr.mxu0 0.0
          %765 = vmatpush1.msra.mxu0 0.0
          %766 = vmatprep.subr.mxu0 0.0
          %767 = vmatpush1.msra.mxu0 0.0
          %768 = vmatprep.subr.mxu0 0.0
          %769 = vmatpush1.msra.mxu0 0.0
          %770 = vmatprep.subr.mxu0 0.0
          %771 = vmatpush1.msra.mxu0 0.0
          %772 = vmatprep.subr.mxu0 0.0
          %773 = vmatpush1.msra.mxu0 0.0
          %774 = vmatprep.subr.mxu0 0.0
          %775 = vmatpush1.msra.mxu0 0.0
          %776 = vmatprep.subr.mxu0 0.0
          %777 = vmatpush1.msra.mxu0 0.0
          %778 = vmatprep.subr.mxu0 0.0
          %779 = vmatpush1.msra.mxu0 0.0
          %780 = vmatprep.subr.mxu0 0.0
          %781 = vmatpush1.msra.mxu0 0.0
          %782 = vmatprep.subr.mxu0 0.0
          %783 = vmatpush1.msra.mxu0 0.0
          %784 = vmatprep.subr.mxu0 0.0
          %785 = vmatpush1.msra.mxu0 0.0
          %786 = vmatprep.subr.mxu0 0.0
          %787 = vmatpush1.msra.mxu0 0.0
          %788 = vmatprep.subr.mxu0 0.0
          %789 = vmatpush1.msra.mxu0 0.0
          %790 = vmatprep.subr.mxu0 0.0
          %791 = vmatpush1.msra.mxu0 0.0
          %792 = vmatprep.subr.mxu0 0.0
          %793 = vmatpush1.msra.mxu0 0.0
          %794 = vmatprep.subr.mxu0 0.0
          %795 = vmatpush1.msra.mxu0 0.0
          %796 = vmatprep.subr.mxu0 0.0
          %797 = vmatpush1.msra.mxu0 0.0
          %798 = vmatprep.mubr.f32.mxu0 0.0
          %799 = vmatmul.mubr.f32.gmra.mrb[0].mxu0 %v649
          %v800 = vpop.f32.mrb[0].mxu0
          %v801 = vadd.f32 %v732, %v800
          %v802 = vpop.f32.mrb[0].mxu0
          %803 = vdwg.mxu0
          %v804 = vmul.f32 %v801, 0.59460354
          %805 = vst.msk [vmem:[#allocation3] sm:$0xff] %vm647, %v804
          %v806 = vld [vmem:[#allocation11] sm:$0xff]
          %v807 = vld [vmem:[#allocation11 + $0x8] sm:$0xff]
          %v808 = vld [vmem:[#allocation11 + $0x10] sm:$0xff]
          %v809 = vld [vmem:[#allocation11 + $0x18] sm:$0xff]
          %v810 = vld [vmem:[%s623] sm:$0x1]
          %v812 = vlaneseq
          %v813 = vshrl.u32 %v812, 7
          %v814 = vsub.s32 0, %v813
          %v815 = vrot.slane %v810, %v814
          %817 = vmatprep.subr.mxu0 0.0
          %818 = vmatpush1.msra.mxu0 %v806
          %819 = vmatprep.subr.mxu0 0.0
          %820 = vmatpush1.msra.mxu0 %v807
          %821 = vmatprep.subr.mxu0 0.0
          %822 = vmatpush1.msra.mxu0 %v808
          %823 = vmatprep.subr.mxu0 0.0
          %824 = vmatpush1.msra.mxu0 %v809
          %825 = vmatprep.subr.mxu0 0.0
          %826 = vmatpush1.msra.mxu0 0.0
          %827 = vmatprep.subr.mxu0 0.0
          %828 = vmatpush1.msra.mxu0 0.0
          %829 = vmatprep.subr.mxu0 0.0
          %830 = vmatpush1.msra.mxu0 0.0
          %831 = vmatprep.subr.mxu0 0.0
          %832 = vmatpush1.msra.mxu0 0.0
          %833 = vmatprep.subr.mxu0 0.0
          %834 = vmatpush1.msra.mxu0 0.0
          %835 = vmatprep.subr.mxu0 0.0
          %836 = vmatpush1.msra.mxu0 0.0
          %837 = vmatprep.subr.mxu0 0.0
          %838 = vmatpush1.msra.mxu0 0.0
          %839 = vmatprep.subr.mxu0 0.0
          %840 = vmatpush1.msra.mxu0 0.0
          %841 = vmatprep.subr.mxu0 0.0
          %842 = vmatpush1.msra.mxu0 0.0
          %843 = vmatprep.subr.mxu0 0.0
          %844 = vmatpush1.msra.mxu0 0.0
          %845 = vmatprep.subr.mxu0 0.0
          %846 = vmatpush1.msra.mxu0 0.0
          %847 = vmatprep.subr.mxu0 0.0
          %848 = vmatpush1.msra.mxu0 0.0
          %849 = vmatprep.subr.mxu0 0.0
          %850 = vmatpush1.msra.mxu0 0.0
          %851 = vmatprep.subr.mxu0 0.0
          %852 = vmatpush1.msra.mxu0 0.0
          %853 = vmatprep.subr.mxu0 0.0
          %854 = vmatpush1.msra.mxu0 0.0
          %855 = vmatprep.subr.mxu0 0.0
          %856 = vmatpush1.msra.mxu0 0.0
          %857 = vmatprep.subr.mxu0 0.0
          %858 = vmatpush1.msra.mxu0 0.0
          %859 = vmatprep.subr.mxu0 0.0
          %860 = vmatpush1.msra.mxu0 0.0
          %861 = vmatprep.subr.mxu0 0.0
          %862 = vmatpush1.msra.mxu0 0.0
          %863 = vmatprep.subr.mxu0 0.0
          %864 = vmatpush1.msra.mxu0 0.0
          %865 = vmatprep.subr.mxu0 0.0
          %866 = vmatpush1.msra.mxu0 0.0
          %867 = vmatprep.subr.mxu0 0.0
          %868 = vmatpush1.msra.mxu0 0.0
          %869 = vmatprep.subr.mxu0 0.0
          %870 = vmatpush1.msra.mxu0 0.0
          %871 = vmatprep.subr.mxu0 0.0
          %872 = vmatpush1.msra.mxu0 0.0
          %873 = vmatprep.subr.mxu0 0.0
          %874 = vmatpush1.msra.mxu0 0.0
          %875 = vmatprep.subr.mxu0 0.0
          %876 = vmatpush1.msra.mxu0 0.0
          %877 = vmatprep.subr.mxu0 0.0
          %878 = vmatpush1.msra.mxu0 0.0
          %879 = vmatprep.subr.mxu0 0.0
          %880 = vmatpush1.msra.mxu0 0.0
          %881 = vmatprep.mubr.f32.mxu0 0.0
          %882 = vmatmul.mubr.f32.gmra.mrb[0].mxu0 %v649
          %v883 = vpop.f32.mrb[0].mxu0
          %v884 = vadd.f32 %v815, %v883
          %v885 = vpop.f32.mrb[0].mxu0
          %886 = vdwg.mxu0
          %v887 = vmul.f32 %v884, 0.59460354
          %888 = vst.msk [vmem:[#allocation4] sm:$0xff] %vm647, %v887
        $region72: #{tpu_custom_call.1} parent=51 // pred_fallthru
          _
        %s889 = smul.u32 %s45, 8
        %v890 = vld [vmem:[%s626] sm:$0x1]
        %s891 = scalar_lea.vmem [#allocation2], %s889
        %v892 = vld [vmem:[%s891] sm:$0xff]
        %s893 = scalar_lea.vmem [#allocation3], %s889
        %v894 = vld [vmem:[%s893] sm:$0xff]
        %s895 = scalar_lea.vmem [#allocation4], %s889
        %v896 = vld [vmem:[%s895] sm:$0xff]
        %v897 = vld [vmem:[#allocation2] sm:$0xff]
        %v898 = vld [vmem:[#allocation3] sm:$0xff]
        %v899 = vld [vmem:[#allocation4] sm:$0xff]
        %v901 = vlaneseq
        %v902 = vshrl.u32 %v901, 7
        %v903 = vsub.s32 0, %v902
        %v904 = vrot.slane %v890, %v903
        %vm906 = vcmask 64512
        %v908 = vsel %vm906, %v892, 0
        %v911 = vsel %vm906, %v898, 0
        %913 = vmatprep.subr.mxu0 0.0
        %914 = vmatpush1.xpose.msra.mxu0 %v911
        %915 = vmatprep.subr.mxu0 0.0
        %916 = vmatpush1.xpose.msra.mxu0 0.0
        %917 = vmatprep.subr.mxu0 0.0
        %918 = vmatpush1.xpose.msra.mxu0 0.0
        %919 = vmatprep.subr.mxu0 0.0
        %920 = vmatpush1.xpose.msra.mxu0 0.0
        %921 = vmatprep.subr.mxu0 0.0
        %922 = vmatpush1.xpose.msra.mxu0 0.0
        %923 = vmatprep.subr.mxu0 0.0
        %924 = vmatpush1.xpose.msra.mxu0 0.0
        %925 = vmatprep.subr.mxu0 0.0
        %926 = vmatpush1.xpose.msra.mxu0 0.0
        %927 = vmatprep.subr.mxu0 0.0
        %928 = vmatpush1.xpose.msra.mxu0 0.0
        %929 = vmatprep.subr.mxu0 0.0
        %930 = vmatpush1.xpose.msra.mxu0 0.0
        %931 = vmatprep.subr.mxu0 0.0
        %932 = vmatpush1.xpose.msra.mxu0 0.0
        %933 = vmatprep.subr.mxu0 0.0
        %934 = vmatpush1.xpose.msra.mxu0 0.0
        %935 = vmatprep.subr.mxu0 0.0
        %936 = vmatpush1.xpose.msra.mxu0 0.0
        %937 = vmatprep.subr.mxu0 0.0
        %938 = vmatpush1.xpose.msra.mxu0 0.0
        %939 = vmatprep.subr.mxu0 0.0
        %940 = vmatpush1.xpose.msra.mxu0 0.0
        %941 = vmatprep.subr.mxu0 0.0
        %942 = vmatpush1.xpose.msra.mxu0 0.0
        %943 = vmatprep.subr.mxu0 0.0
        %944 = vmatpush1.xpose.msra.mxu0 0.0
        %945 = vmatprep.subr.mxu0 0.0
        %946 = vmatpush1.xpose.msra.mxu0 0.0
        %947 = vmatprep.subr.mxu0 0.0
        %948 = vmatpush1.xpose.msra.mxu0 0.0
        %949 = vmatprep.subr.mxu0 0.0
        %950 = vmatpush1.xpose.msra.mxu0 0.0
        %951 = vmatprep.subr.mxu0 0.0
        %952 = vmatpush1.xpose.msra.mxu0 0.0
        %953 = vmatprep.subr.mxu0 0.0
        %954 = vmatpush1.xpose.msra.mxu0 0.0
        %955 = vmatprep.subr.mxu0 0.0
        %956 = vmatpush1.xpose.msra.mxu0 0.0
        %957 = vmatprep.subr.mxu0 0.0
        %958 = vmatpush1.xpose.msra.mxu0 0.0
        %959 = vmatprep.subr.mxu0 0.0
        %960 = vmatpush1.xpose.msra.mxu0 0.0
        %961 = vmatprep.subr.mxu0 0.0
        %962 = vmatpush1.xpose.msra.mxu0 0.0
        %963 = vmatprep.subr.mxu0 0.0
        %964 = vmatpush1.xpose.msra.mxu0 0.0
        %965 = vmatprep.subr.mxu0 0.0
        %966 = vmatpush1.xpose.msra.mxu0 0.0
        %967 = vmatprep.subr.mxu0 0.0
        %968 = vmatpush1.xpose.msra.mxu0 0.0
        %969 = vmatprep.subr.mxu0 0.0
        %970 = vmatpush1.xpose.msra.mxu0 0.0
        %971 = vmatprep.subr.mxu0 0.0
        %972 = vmatpush1.xpose.msra.mxu0 0.0
        %973 = vmatprep.subr.mxu0 0.0
        %974 = vmatpush1.xpose.msra.mxu0 0.0
        %975 = vmatprep.subr.mxu0 0.0
        %976 = vmatpush1.xpose.msra.mxu0 0.0
        %977 = vmatprep.mubr.f32.mxu0 0.0
        %978 = vmatmul.mubr.f32.gmra.mrb[0].mxu0 %v908
        %v979 = vpop.f32.mrb[0].mxu0
        %v980 = vadd.f32 %v904, %v979
        %v981 = vpop.f32.mrb[0].mxu0
        %982 = vdwg.mxu0
        %983 = vst.msk [vmem:[%s593] sm:$0xff] %vm906, %v980
        %v984 = vsel %vm906, %v980, -inf
        %985 = vmax.xlane.f32.xlu0 %v984
        %v986 = vpop.xlane.xlu0 %985
        %v987 = vsub.f32 %v980, %v986
        %v988 = vmul.f32 %v987, 1.442695
        %v989 = vpow.pop %v988
        %v990 = vsel %vm906, %v989, 0.0
        %991 = vadd.xlane.f32.xlu0 %v990
        %v992 = vpop.xlane.xlu0 %991
        %v993 = vrcp.pop %v992
        %v994 = vmul.f32 %v989, %v993
        %v996 = vsel %vm906, %v994, 0
        %998 = vmatprep.subr.mxu0 0.0
        %999 = vmatpush1.msra.mxu0 %v899
        %1000 = vmatprep.subr.mxu0 0.0
        %1001 = vmatpush1.msra.mxu0 0.0
        %1002 = vmatprep.subr.mxu0 0.0
        %1003 = vmatpush1.msra.mxu0 0.0
        %1004 = vmatprep.subr.mxu0 0.0
        %1005 = vmatpush1.msra.mxu0 0.0
        %1006 = vmatprep.subr.mxu0 0.0
        %1007 = vmatpush1.msra.mxu0 0.0
        %1008 = vmatprep.subr.mxu0 0.0
        %1009 = vmatpush1.msra.mxu0 0.0
        %1010 = vmatprep.subr.mxu0 0.0
        %1011 = vmatpush1.msra.mxu0 0.0
        %1012 = vmatprep.subr.mxu0 0.0
        %1013 = vmatpush1.msra.mxu0 0.0
        %1014 = vmatprep.subr.mxu0 0.0
        %1015 = vmatpush1.msra.mxu0 0.0
        %1016 = vmatprep.subr.mxu0 0.0
        %1017 = vmatpush1.msra.mxu0 0.0
        %1018 = vmatprep.subr.mxu0 0.0
        %1019 = vmatpush1.msra.mxu0 0.0
        %1020 = vmatprep.subr.mxu0 0.0
        %1021 = vmatpush1.msra.mxu0 0.0
        %1022 = vmatprep.subr.mxu0 0.0
        %1023 = vmatpush1.msra.mxu0 0.0
        %1024 = vmatprep.subr.mxu0 0.0
        %1025 = vmatpush1.msra.mxu0 0.0
        %1026 = vmatprep.subr.mxu0 0.0
        %1027 = vmatpush1.msra.mxu0 0.0
        %1028 = vmatprep.subr.mxu0 0.0
        %1029 = vmatpush1.msra.mxu0 0.0
        %1030 = vmatprep.subr.mxu0 0.0
        %1031 = vmatpush1.msra.mxu0 0.0
        %1032 = vmatprep.subr.mxu0 0.0
        %1033 = vmatpush1.msra.mxu0 0.0
        %1034 = vmatprep.subr.mxu0 0.0
        %1035 = vmatpush1.msra.mxu0 0.0
        %1036 = vmatprep.subr.mxu0 0.0
        %1037 = vmatpush1.msra.mxu0 0.0
        %1038 = vmatprep.subr.mxu0 0.0
        %1039 = vmatpush1.msra.mxu0 0.0
        %1040 = vmatprep.subr.mxu0 0.0
        %1041 = vmatpush1.msra.mxu0 0.0
        %1042 = vmatprep.subr.mxu0 0.0
        %1043 = vmatpush1.msra.mxu0 0.0
        %1044 = vmatprep.subr.mxu0 0.0
        %1045 = vmatpush1.msra.mxu0 0.0
        %1046 = vmatprep.subr.mxu0 0.0
        %1047 = vmatpush1.msra.mxu0 0.0
        %1048 = vmatprep.subr.mxu0 0.0
        %1049 = vmatpush1.msra.mxu0 0.0
        %1050 = vmatprep.subr.mxu0 0.0
        %1051 = vmatpush1.msra.mxu0 0.0
        %1052 = vmatprep.subr.mxu0 0.0
        %1053 = vmatpush1.msra.mxu0 0.0
        %1054 = vmatprep.subr.mxu0 0.0
        %1055 = vmatpush1.msra.mxu0 0.0
        %1056 = vmatprep.subr.mxu0 0.0
        %1057 = vmatpush1.msra.mxu0 0.0
        %1058 = vmatprep.subr.mxu0 0.0
        %1059 = vmatpush1.msra.mxu0 0.0
        %1060 = vmatprep.subr.mxu0 0.0
        %1061 = vmatpush1.msra.mxu0 0.0
        %1062 = vmatprep.mubr.f32.mxu0 0.0
        %1063 = vmatmul.mubr.f32.gmra.mrb[0].mxu0 %v996
        %v1064 = vpop.f32.mrb[0].mxu0
        %v1065 = vadd.f32 0.0, %v1064
        %v1066 = vpop.f32.mrb[0].mxu0
        %1067 = vdwg.mxu0
        %v1068 = vmul.f32 %v1065, 1.6817929
        %1069 = vst.msk [vmem:[%s586] sm:$0xff] %vm906, %v1068
        %v1071 = vsel %vm906, %v897, 0
        %1073 = vmatprep.subr.mxu0 0.0
        %1074 = vmatpush1.xpose.msra.mxu0 %v1071
        %1075 = vmatprep.subr.mxu0 0.0
        %1076 = vmatpush1.xpose.msra.mxu0 0.0
        %1077 = vmatprep.subr.mxu0 0.0
        %1078 = vmatpush1.xpose.msra.mxu0 0.0
        %1079 = vmatprep.subr.mxu0 0.0
        %1080 = vmatpush1.xpose.msra.mxu0 0.0
        %1081 = vmatprep.subr.mxu0 0.0
        %1082 = vmatpush1.xpose.msra.mxu0 0.0
        %1083 = vmatprep.subr.mxu0 0.0
        %1084 = vmatpush1.xpose.msra.mxu0 0.0
        %1085 = vmatprep.subr.mxu0 0.0
        %1086 = vmatpush1.xpose.msra.mxu0 0.0
        %1087 = vmatprep.subr.mxu0 0.0
        %1088 = vmatpush1.xpose.msra.mxu0 0.0
        %1089 = vmatprep.subr.mxu0 0.0
        %1090 = vmatpush1.xpose.msra.mxu0 0.0
        %1091 = vmatprep.subr.mxu0 0.0
        %1092 = vmatpush1.xpose.msra.mxu0 0.0
        %1093 = vmatprep.subr.mxu0 0.0
        %1094 = vmatpush1.xpose.msra.mxu0 0.0
        %1095 = vmatprep.subr.mxu0 0.0
        %1096 = vmatpush1.xpose.msra.mxu0 0.0
        %1097 = vmatprep.subr.mxu0 0.0
        %1098 = vmatpush1.xpose.msra.mxu0 0.0
        %1099 = vmatprep.subr.mxu0 0.0
        %1100 = vmatpush1.xpose.msra.mxu0 0.0
        %1101 = vmatprep.subr.mxu0 0.0
        %1102 = vmatpush1.xpose.msra.mxu0 0.0
        %1103 = vmatprep.subr.mxu0 0.0
        %1104 = vmatpush1.xpose.msra.mxu0 0.0
        %1105 = vmatprep.subr.mxu0 0.0
        %1106 = vmatpush1.xpose.msra.mxu0 0.0
        %1107 = vmatprep.subr.mxu0 0.0
        %1108 = vmatpush1.xpose.msra.mxu0 0.0
        %1109 = vmatprep.subr.mxu0 0.0
        %1110 = vmatpush1.xpose.msra.mxu0 0.0
        %1111 = vmatprep.subr.mxu0 0.0
        %1112 = vmatpush1.xpose.msra.mxu0 0.0
        %1113 = vmatprep.subr.mxu0 0.0
        %1114 = vmatpush1.xpose.msra.mxu0 0.0
        %1115 = vmatprep.subr.mxu0 0.0
        %1116 = vmatpush1.xpose.msra.mxu0 0.0
        %1117 = vmatprep.subr.mxu0 0.0
        %1118 = vmatpush1.xpose.msra.mxu0 0.0
        %1119 = vmatprep.subr.mxu0 0.0
        %1120 = vmatpush1.xpose.msra.mxu0 0.0
        %1121 = vmatprep.subr.mxu0 0.0
        %1122 = vmatpush1.xpose.msra.mxu0 0.0
        %1123 = vmatprep.subr.mxu0 0.0
        %1124 = vmatpush1.xpose.msra.mxu0 0.0
        %1125 = vmatprep.subr.mxu0 0.0
        %1126 = vmatpush1.xpose.msra.mxu0 0.0
        %1127 = vmatprep.subr.mxu0 0.0
        %1128 = vmatpush1.xpose.msra.mxu0 0.0
        %1129 = vmatprep.subr.mxu0 0.0
        %1130 = vmatpush1.xpose.msra.mxu0 0.0
        %1131 = vmatprep.subr.mxu0 0.0
        %1132 = vmatpush1.xpose.msra.mxu0 0.0
        %1133 = vmatprep.subr.mxu0 0.0
        %1134 = vmatpush1.xpose.msra.mxu0 0.0
        %1135 = vmatprep.subr.mxu0 0.0
        %1136 = vmatpush1.xpose.msra.mxu0 0.0
        %1137 = vmatprep.mubr.f32.mxu0 0.0
        %1138 = vmatmul.mubr.f32.gmra.mrb[0].mxu0 %v908
        %v1139 = vpop.f32.mrb[0].mxu0
        %v1140 = vadd.f32 0.0, %v1139
        %v1141 = vpop.f32.mrb[0].mxu0
        %1142 = vdwg.mxu0
        %1143 = vst.msk [vmem:[%s600] sm:$0xff] %vm906, %v1140
        %v1145 = vsel %vm906, %v894, 0
        %1147 = vmatprep.subr.mxu0 0.0
        %1148 = vmatpush1.xpose.msra.mxu0 %v911
        %1149 = vmatprep.subr.mxu0 0.0
        %1150 = vmatpush1.xpose.msra.mxu0 0.0
        %1151 = vmatprep.subr.mxu0 0.0
        %1152 = vmatpush1.xpose.msra.mxu0 0.0
        %1153 = vmatprep.subr.mxu0 0.0
        %1154 = vmatpush1.xpose.msra.mxu0 0.0
        %1155 = vmatprep.subr.mxu0 0.0
        %1156 = vmatpush1.xpose.msra.mxu0 0.0
        %1157 = vmatprep.subr.mxu0 0.0
        %1158 = vmatpush1.xpose.msra.mxu0 0.0
        %1159 = vmatprep.subr.mxu0 0.0
        %1160 = vmatpush1.xpose.msra.mxu0 0.0
        %1161 = vmatprep.subr.mxu0 0.0
        %1162 = vmatpush1.xpose.msra.mxu0 0.0
        %1163 = vmatprep.subr.mxu0 0.0
        %1164 = vmatpush1.xpose.msra.mxu0 0.0
        %1165 = vmatprep.subr.mxu0 0.0
        %1166 = vmatpush1.xpose.msra.mxu0 0.0
        %1167 = vmatprep.subr.mxu0 0.0
        %1168 = vmatpush1.xpose.msra.mxu0 0.0
        %1169 = vmatprep.subr.mxu0 0.0
        %1170 = vmatpush1.xpose.msra.mxu0 0.0
        %1171 = vmatprep.subr.mxu0 0.0
        %1172 = vmatpush1.xpose.msra.mxu0 0.0
        %1173 = vmatprep.subr.mxu0 0.0
        %1174 = vmatpush1.xpose.msra.mxu0 0.0
        %1175 = vmatprep.subr.mxu0 0.0
        %1176 = vmatpush1.xpose.msra.mxu0 0.0
        %1177 = vmatprep.subr.mxu0 0.0
        %1178 = vmatpush1.xpose.msra.mxu0 0.0
        %1179 = vmatprep.subr.mxu0 0.0
        %1180 = vmatpush1.xpose.msra.mxu0 0.0
        %1181 = vmatprep.subr.mxu0 0.0
        %1182 = vmatpush1.xpose.msra.mxu0 0.0
        %1183 = vmatprep.subr.mxu0 0.0
        %1184 = vmatpush1.xpose.msra.mxu0 0.0
        %1185 = vmatprep.subr.mxu0 0.0
        %1186 = vmatpush1.xpose.msra.mxu0 0.0
        %1187 = vmatprep.subr.mxu0 0.0
        %1188 = vmatpush1.xpose.msra.mxu0 0.0
        %1189 = vmatprep.subr.mxu0 0.0
        %1190 = vmatpush1.xpose.msra.mxu0 0.0
        %1191 = vmatprep.subr.mxu0 0.0
        %1192 = vmatpush1.xpose.msra.mxu0 0.0
        %1193 = vmatprep.subr.mxu0 0.0
        %1194 = vmatpush1.xpose.msra.mxu0 0.0
        %1195 = vmatprep.subr.mxu0 0.0
        %1196 = vmatpush1.xpose.msra.mxu0 0.0
        %1197 = vmatprep.subr.mxu0 0.0
        %1198 = vmatpush1.xpose.msra.mxu0 0.0
        %1199 = vmatprep.subr.mxu0 0.0
        %1200 = vmatpush1.xpose.msra.mxu0 0.0
        %1201 = vmatprep.subr.mxu0 0.0
        %1202 = vmatpush1.xpose.msra.mxu0 0.0
        %1203 = vmatprep.subr.mxu0 0.0
        %1204 = vmatpush1.xpose.msra.mxu0 0.0
        %1205 = vmatprep.subr.mxu0 0.0
        %1206 = vmatpush1.xpose.msra.mxu0 0.0
        %1207 = vmatprep.subr.mxu0 0.0
        %1208 = vmatpush1.xpose.msra.mxu0 0.0
        %1209 = vmatprep.subr.mxu0 0.0
        %1210 = vmatpush1.xpose.msra.mxu0 0.0
        %1211 = vmatprep.mubr.f32.mxu0 0.0
        %1212 = vmatmul.mubr.f32.gmra.mrb[0].mxu0 %v1145
        %v1213 = vpop.f32.mrb[0].mxu0
        %v1214 = vadd.f32 0.0, %v1213
        %v1215 = vpop.f32.mrb[0].mxu0
        %1216 = vdwg.mxu0
        %1217 = vst.msk [vmem:[%s607] sm:$0xff] %vm906, %v1214
        %v1219 = vsel %vm906, %v896, 0
        %v1222 = vsel %vm906, %v899, 0
        %1224 = vmatprep.subr.mxu0 0.0
        %1225 = vmatpush1.xpose.msra.mxu0 %v1222
        %1226 = vmatprep.subr.mxu0 0.0
        %1227 = vmatpush1.xpose.msra.mxu0 0.0
        %1228 = vmatprep.subr.mxu0 0.0
        %1229 = vmatpush1.xpose.msra.mxu0 0.0
        %1230 = vmatprep.subr.mxu0 0.0
        %1231 = vmatpush1.xpose.msra.mxu0 0.0
        %1232 = vmatprep.subr.mxu0 0.0
        %1233 = vmatpush1.xpose.msra.mxu0 0.0
        %1234 = vmatprep.subr.mxu0 0.0
        %1235 = vmatpush1.xpose.msra.mxu0 0.0
        %1236 = vmatprep.subr.mxu0 0.0
        %1237 = vmatpush1.xpose.msra.mxu0 0.0
        %1238 = vmatprep.subr.mxu0 0.0
        %1239 = vmatpush1.xpose.msra.mxu0 0.0
        %1240 = vmatprep.subr.mxu0 0.0
        %1241 = vmatpush1.xpose.msra.mxu0 0.0
        %1242 = vmatprep.subr.mxu0 0.0
        %1243 = vmatpush1.xpose.msra.mxu0 0.0
        %1244 = vmatprep.subr.mxu0 0.0
        %1245 = vmatpush1.xpose.msra.mxu0 0.0
        %1246 = vmatprep.subr.mxu0 0.0
        %1247 = vmatpush1.xpose.msra.mxu0 0.0
        %1248 = vmatprep.subr.mxu0 0.0
        %1249 = vmatpush1.xpose.msra.mxu0 0.0
        %1250 = vmatprep.subr.mxu0 0.0
        %1251 = vmatpush1.xpose.msra.mxu0 0.0
        %1252 = vmatprep.subr.mxu0 0.0
        %1253 = vmatpush1.xpose.msra.mxu0 0.0
        %1254 = vmatprep.subr.mxu0 0.0
        %1255 = vmatpush1.xpose.msra.mxu0 0.0
        %1256 = vmatprep.subr.mxu0 0.0
        %1257 = vmatpush1.xpose.msra.mxu0 0.0
        %1258 = vmatprep.subr.mxu0 0.0
        %1259 = vmatpush1.xpose.msra.mxu0 0.0
        %1260 = vmatprep.subr.mxu0 0.0
        %1261 = vmatpush1.xpose.msra.mxu0 0.0
        %1262 = vmatprep.subr.mxu0 0.0
        %1263 = vmatpush1.xpose.msra.mxu0 0.0
        %1264 = vmatprep.subr.mxu0 0.0
        %1265 = vmatpush1.xpose.msra.mxu0 0.0
        %1266 = vmatprep.subr.mxu0 0.0
        %1267 = vmatpush1.xpose.msra.mxu0 0.0
        %1268 = vmatprep.subr.mxu0 0.0
        %1269 = vmatpush1.xpose.msra.mxu0 0.0
        %1270 = vmatprep.subr.mxu0 0.0
        %1271 = vmatpush1.xpose.msra.mxu0 0.0
        %1272 = vmatprep.subr.mxu0 0.0
        %1273 = vmatpush1.xpose.msra.mxu0 0.0
        %1274 = vmatprep.subr.mxu0 0.0
        %1275 = vmatpush1.xpose.msra.mxu0 0.0
        %1276 = vmatprep.subr.mxu0 0.0
        %1277 = vmatpush1.xpose.msra.mxu0 0.0
        %1278 = vmatprep.subr.mxu0 0.0
        %1279 = vmatpush1.xpose.msra.mxu0 0.0
        %1280 = vmatprep.subr.mxu0 0.0
        %1281 = vmatpush1.xpose.msra.mxu0 0.0
        %1282 = vmatprep.subr.mxu0 0.0
        %1283 = vmatpush1.xpose.msra.mxu0 0.0
        %1284 = vmatprep.subr.mxu0 0.0
        %1285 = vmatpush1.xpose.msra.mxu0 0.0
        %1286 = vmatprep.subr.mxu0 0.0
        %1287 = vmatpush1.xpose.msra.mxu0 0.0
        %1288 = vmatprep.mubr.f32.mxu0 0.0
        %1289 = vmatmul.mubr.f32.gmra.mrb[0].mxu0 %v1219
        %v1290 = vpop.f32.mrb[0].mxu0
        %v1291 = vadd.f32 0.0, %v1290
        %v1292 = vpop.f32.mrb[0].mxu0
        %1293 = vdwg.mxu0
        %1294 = vst.msk [vmem:[%s614] sm:$0xff] %vm906, %v1291
        %v1295 = vld [vmem:[%s891] sm:$0xff]
        %v1296 = vld [vmem:[%s893] sm:$0xff]
        %v1297 = vld [vmem:[%s895] sm:$0xff]
        %v1298 = vld [vmem:[#allocation2] sm:$0xff]
        %v1299 = vld [vmem:[#allocation3] sm:$0xff]
        %v1300 = vld [vmem:[#allocation4] sm:$0xff]
        %1302 = vrot.lane.b32.xlu0 %v1295, 120
        %v1303 = vpop.permute.xlu0 %1302
        %1305 = vrot.lane.b32.xlu0 %v1299, 120
        %v1306 = vpop.permute.xlu0 %1305
        %v1307 = vsel %vm906, %v1303, 0
        %v1309 = vsel %vm906, %v1306, 0
        %1311 = vmatprep.subr.mxu0 0.0
        %1312 = vmatpush1.xpose.msra.mxu0 %v1309
        %1313 = vmatprep.subr.mxu0 0.0
        %1314 = vmatpush1.xpose.msra.mxu0 0.0
        %1315 = vmatprep.subr.mxu0 0.0
        %1316 = vmatpush1.xpose.msra.mxu0 0.0
        %1317 = vmatprep.subr.mxu0 0.0
        %1318 = vmatpush1.xpose.msra.mxu0 0.0
        %1319 = vmatprep.subr.mxu0 0.0
        %1320 = vmatpush1.xpose.msra.mxu0 0.0
        %1321 = vmatprep.subr.mxu0 0.0
        %1322 = vmatpush1.xpose.msra.mxu0 0.0
        %1323 = vmatprep.subr.mxu0 0.0
        %1324 = vmatpush1.xpose.msra.mxu0 0.0
        %1325 = vmatprep.subr.mxu0 0.0
        %1326 = vmatpush1.xpose.msra.mxu0 0.0
        %1327 = vmatprep.subr.mxu0 0.0
        %1328 = vmatpush1.xpose.msra.mxu0 0.0
        %1329 = vmatprep.subr.mxu0 0.0
        %1330 = vmatpush1.xpose.msra.mxu0 0.0
        %1331 = vmatprep.subr.mxu0 0.0
        %1332 = vmatpush1.xpose.msra.mxu0 0.0
        %1333 = vmatprep.subr.mxu0 0.0
        %1334 = vmatpush1.xpose.msra.mxu0 0.0
        %1335 = vmatprep.subr.mxu0 0.0
        %1336 = vmatpush1.xpose.msra.mxu0 0.0
        %1337 = vmatprep.subr.mxu0 0.0
        %1338 = vmatpush1.xpose.msra.mxu0 0.0
        %1339 = vmatprep.subr.mxu0 0.0
        %1340 = vmatpush1.xpose.msra.mxu0 0.0
        %1341 = vmatprep.subr.mxu0 0.0
        %1342 = vmatpush1.xpose.msra.mxu0 0.0
        %1343 = vmatprep.subr.mxu0 0.0
        %1344 = vmatpush1.xpose.msra.mxu0 0.0
        %1345 = vmatprep.subr.mxu0 0.0
        %1346 = vmatpush1.xpose.msra.mxu0 0.0
        %1347 = vmatprep.subr.mxu0 0.0
        %1348 = vmatpush1.xpose.msra.mxu0 0.0
        %1349 = vmatprep.subr.mxu0 0.0
        %1350 = vmatpush1.xpose.msra.mxu0 0.0
        %1351 = vmatprep.subr.mxu0 0.0
        %1352 = vmatpush1.xpose.msra.mxu0 0.0
        %1353 = vmatprep.subr.mxu0 0.0
        %1354 = vmatpush1.xpose.msra.mxu0 0.0
        %1355 = vmatprep.subr.mxu0 0.0
        %1356 = vmatpush1.xpose.msra.mxu0 0.0
        %1357 = vmatprep.subr.mxu0 0.0
        %1358 = vmatpush1.xpose.msra.mxu0 0.0
        %1359 = vmatprep.subr.mxu0 0.0
        %1360 = vmatpush1.xpose.msra.mxu0 0.0
        %1361 = vmatprep.subr.mxu0 0.0
        %1362 = vmatpush1.xpose.msra.mxu0 0.0
        %1363 = vmatprep.subr.mxu0 0.0
        %1364 = vmatpush1.xpose.msra.mxu0 0.0
        %1365 = vmatprep.subr.mxu0 0.0
        %1366 = vmatpush1.xpose.msra.mxu0 0.0
        %1367 = vmatprep.subr.mxu0 0.0
        %1368 = vmatpush1.xpose.msra.mxu0 0.0
        %1369 = vmatprep.subr.mxu0 0.0
        %1370 = vmatpush1.xpose.msra.mxu0 0.0
        %1371 = vmatprep.subr.mxu0 0.0
        %1372 = vmatpush1.xpose.msra.mxu0 0.0
        %1373 = vmatprep.subr.mxu0 0.0
        %1374 = vmatpush1.xpose.msra.mxu0 0.0
        %1375 = vmatprep.mubr.f32.mxu0 0.0
        %1376 = vmatmul.mubr.f32.gmra.mrb[0].mxu0 %v1307
        %v1377 = vpop.f32.mrb[0].mxu0
        %v1378 = vadd.f32 %v904, %v1377
        %v1379 = vpop.f32.mrb[0].mxu0
        %1380 = vdwg.mxu0
        %s1381 = scalar_lea.vmem %s593, 8 [#allocation14]
        %1382 = vst.msk [vmem:[%s1381] sm:$0xff] %vm906, %v1378
        %v1383 = vsel %vm906, %v1378, -inf
        %1384 = vmax.xlane.f32.xlu0 %v1383
        %v1385 = vpop.xlane.xlu0 %1384
        %v1386 = vsub.f32 %v1378, %v1385
        %v1387 = vmul.f32 %v1386, 1.442695
        %v1388 = vpow.pop %v1387
        %v1389 = vsel %vm906, %v1388, 0.0
        %1390 = vadd.xlane.f32.xlu0 %v1389
        %v1391 = vpop.xlane.xlu0 %1390
        %v1392 = vrcp.pop %v1391
        %v1393 = vmul.f32 %v1388, %v1392
        %1395 = vrot.lane.b32.xlu0 %v1300, 120
        %v1396 = vpop.permute.xlu0 %1395
        %v1399 = vsel %vm906, %v1393, 0
        %1401 = vmatprep.subr.mxu0 0.0
        %1402 = vmatpush1.msra.mxu0 %v1396
        %1403 = vmatprep.subr.mxu0 0.0
        %1404 = vmatpush1.msra.mxu0 0.0
        %1405 = vmatprep.subr.mxu0 0.0
        %1406 = vmatpush1.msra.mxu0 0.0
        %1407 = vmatprep.subr.mxu0 0.0
        %1408 = vmatpush1.msra.mxu0 0.0
        %1409 = vmatprep.subr.mxu0 0.0
        %1410 = vmatpush1.msra.mxu0 0.0
        %1411 = vmatprep.subr.mxu0 0.0
        %1412 = vmatpush1.msra.mxu0 0.0
        %1413 = vmatprep.subr.mxu0 0.0
        %1414 = vmatpush1.msra.mxu0 0.0
        %1415 = vmatprep.subr.mxu0 0.0
        %1416 = vmatpush1.msra.mxu0 0.0
        %1417 = vmatprep.subr.mxu0 0.0
        %1418 = vmatpush1.msra.mxu0 0.0
        %1419 = vmatprep.subr.mxu0 0.0
        %1420 = vmatpush1.msra.mxu0 0.0
        %1421 = vmatprep.subr.mxu0 0.0
        %1422 = vmatpush1.msra.mxu0 0.0
        %1423 = vmatprep.subr.mxu0 0.0
        %1424 = vmatpush1.msra.mxu0 0.0
        %1425 = vmatprep.subr.mxu0 0.0
        %1426 = vmatpush1.msra.mxu0 0.0
        %1427 = vmatprep.subr.mxu0 0.0
        %1428 = vmatpush1.msra.mxu0 0.0
        %1429 = vmatprep.subr.mxu0 0.0
        %1430 = vmatpush1.msra.mxu0 0.0
        %1431 = vmatprep.subr.mxu0 0.0
        %1432 = vmatpush1.msra.mxu0 0.0
        %1433 = vmatprep.subr.mxu0 0.0
        %1434 = vmatpush1.msra.mxu0 0.0
        %1435 = vmatprep.subr.mxu0 0.0
        %1436 = vmatpush1.msra.mxu0 0.0
        %1437 = vmatprep.subr.mxu0 0.0
        %1438 = vmatpush1.msra.mxu0 0.0
        %1439 = vmatprep.subr.mxu0 0.0
        %1440 = vmatpush1.msra.mxu0 0.0
        %1441 = vmatprep.subr.mxu0 0.0
        %1442 = vmatpush1.msra.mxu0 0.0
        %1443 = vmatprep.subr.mxu0 0.0
        %1444 = vmatpush1.msra.mxu0 0.0
        %1445 = vmatprep.subr.mxu0 0.0
        %1446 = vmatpush1.msra.mxu0 0.0
        %1447 = vmatprep.subr.mxu0 0.0
        %1448 = vmatpush1.msra.mxu0 0.0
        %1449 = vmatprep.subr.mxu0 0.0
        %1450 = vmatpush1.msra.mxu0 0.0
        %1451 = vmatprep.subr.mxu0 0.0
        %1452 = vmatpush1.msra.mxu0 0.0
        %1453 = vmatprep.subr.mxu0 0.0
        %1454 = vmatpush1.msra.mxu0 0.0
        %1455 = vmatprep.subr.mxu0 0.0
        %1456 = vmatpush1.msra.mxu0 0.0
        %1457 = vmatprep.subr.mxu0 0.0
        %1458 = vmatpush1.msra.mxu0 0.0
        %1459 = vmatprep.subr.mxu0 0.0
        %1460 = vmatpush1.msra.mxu0 0.0
        %1461 = vmatprep.subr.mxu0 0.0
        %1462 = vmatpush1.msra.mxu0 0.0
        %1463 = vmatprep.subr.mxu0 0.0
        %1464 = vmatpush1.msra.mxu0 0.0
        %1465 = vmatprep.mubr.f32.mxu0 0.0
        %1466 = vmatmul.mubr.f32.gmra.mrb[0].mxu0 %v1399
        %v1467 = vpop.f32.mrb[0].mxu0
        %v1468 = vadd.f32 0.0, %v1467
        %v1469 = vpop.f32.mrb[0].mxu0
        %1470 = vdwg.mxu0
        %v1471 = vmul.f32 %v1468, 1.6817929
        %1473 = vrot.lane.b32.xlu0 %v1471, 8
        %v1474 = vpop.permute.xlu0 %1473
        %vm1476 = vcmask 130112
        %1477 = vst.msk [vmem:[%s586] sm:$0xff] %vm1476, %v1474
        %1479 = vrot.lane.b32.xlu0 %v1298, 120
        %v1480 = vpop.permute.xlu0 %1479
        %v1481 = vsel %vm906, %v1480, 0
        %1483 = vmatprep.subr.mxu0 0.0
        %1484 = vmatpush1.xpose.msra.mxu0 %v1481
        %1485 = vmatprep.subr.mxu0 0.0
        %1486 = vmatpush1.xpose.msra.mxu0 0.0
        %1487 = vmatprep.subr.mxu0 0.0
        %1488 = vmatpush1.xpose.msra.mxu0 0.0
        %1489 = vmatprep.subr.mxu0 0.0
        %1490 = vmatpush1.xpose.msra.mxu0 0.0
        %1491 = vmatprep.subr.mxu0 0.0
        %1492 = vmatpush1.xpose.msra.mxu0 0.0
        %1493 = vmatprep.subr.mxu0 0.0
        %1494 = vmatpush1.xpose.msra.mxu0 0.0
        %1495 = vmatprep.subr.mxu0 0.0
        %1496 = vmatpush1.xpose.msra.mxu0 0.0
        %1497 = vmatprep.subr.mxu0 0.0
        %1498 = vmatpush1.xpose.msra.mxu0 0.0
        %1499 = vmatprep.subr.mxu0 0.0
        %1500 = vmatpush1.xpose.msra.mxu0 0.0
        %1501 = vmatprep.subr.mxu0 0.0
        %1502 = vmatpush1.xpose.msra.mxu0 0.0
        %1503 = vmatprep.subr.mxu0 0.0
        %1504 = vmatpush1.xpose.msra.mxu0 0.0
        %1505 = vmatprep.subr.mxu0 0.0
        %1506 = vmatpush1.xpose.msra.mxu0 0.0
        %1507 = vmatprep.subr.mxu0 0.0
        %1508 = vmatpush1.xpose.msra.mxu0 0.0
        %1509 = vmatprep.subr.mxu0 0.0
        %1510 = vmatpush1.xpose.msra.mxu0 0.0
        %1511 = vmatprep.subr.mxu0 0.0
        %1512 = vmatpush1.xpose.msra.mxu0 0.0
        %1513 = vmatprep.subr.mxu0 0.0
        %1514 = vmatpush1.xpose.msra.mxu0 0.0
        %1515 = vmatprep.subr.mxu0 0.0
        %1516 = vmatpush1.xpose.msra.mxu0 0.0
        %1517 = vmatprep.subr.mxu0 0.0
        %1518 = vmatpush1.xpose.msra.mxu0 0.0
        %1519 = vmatprep.subr.mxu0 0.0
        %1520 = vmatpush1.xpose.msra.mxu0 0.0
        %1521 = vmatprep.subr.mxu0 0.0
        %1522 = vmatpush1.xpose.msra.mxu0 0.0
        %1523 = vmatprep.subr.mxu0 0.0
        %1524 = vmatpush1.xpose.msra.mxu0 0.0
        %1525 = vmatprep.subr.mxu0 0.0
        %1526 = vmatpush1.xpose.msra.mxu0 0.0
        %1527 = vmatprep.subr.mxu0 0.0
        %1528 = vmatpush1.xpose.msra.mxu0 0.0
        %1529 = vmatprep.subr.mxu0 0.0
        %1530 = vmatpush1.xpose.msra.mxu0 0.0
        %1531 = vmatprep.subr.mxu0 0.0
        %1532 = vmatpush1.xpose.msra.mxu0 0.0
        %1533 = vmatprep.subr.mxu0 0.0
        %1534 = vmatpush1.xpose.msra.mxu0 0.0
        %1535 = vmatprep.subr.mxu0 0.0
        %1536 = vmatpush1.xpose.msra.mxu0 0.0
        %1537 = vmatprep.subr.mxu0 0.0
        %1538 = vmatpush1.xpose.msra.mxu0 0.0
        %1539 = vmatprep.subr.mxu0 0.0
        %1540 = vmatpush1.xpose.msra.mxu0 0.0
        %1541 = vmatprep.subr.mxu0 0.0
        %1542 = vmatpush1.xpose.msra.mxu0 0.0
        %1543 = vmatprep.subr.mxu0 0.0
        %1544 = vmatpush1.xpose.msra.mxu0 0.0
        %1545 = vmatprep.subr.mxu0 0.0
        %1546 = vmatpush1.xpose.msra.mxu0 0.0
        %1547 = vmatprep.mubr.f32.mxu0 0.0
        %1548 = vmatmul.mubr.f32.gmra.mrb[0].mxu0 %v1307
        %v1549 = vpop.f32.mrb[0].mxu0
        %v1550 = vadd.f32 0.0, %v1549
        %v1551 = vpop.f32.mrb[0].mxu0
        %1552 = vdwg.mxu0
        %s1553 = scalar_lea.vmem %s600, 8 [#allocation16]
        %1554 = vst.msk [vmem:[%s1553] sm:$0xff] %vm906, %v1550
        %1556 = vrot.lane.b32.xlu0 %v1296, 120
        %v1557 = vpop.permute.xlu0 %1556
        %v1558 = vsel %vm906, %v1557, 0
        %1560 = vmatprep.subr.mxu0 0.0
        %1561 = vmatpush1.xpose.msra.mxu0 %v1309
        %1562 = vmatprep.subr.mxu0 0.0
        %1563 = vmatpush1.xpose.msra.mxu0 0.0
        %1564 = vmatprep.subr.mxu0 0.0
        %1565 = vmatpush1.xpose.msra.mxu0 0.0
        %1566 = vmatprep.subr.mxu0 0.0
        %1567 = vmatpush1.xpose.msra.mxu0 0.0
        %1568 = vmatprep.subr.mxu0 0.0
        %1569 = vmatpush1.xpose.msra.mxu0 0.0
        %1570 = vmatprep.subr.mxu0 0.0
        %1571 = vmatpush1.xpose.msra.mxu0 0.0
        %1572 = vmatprep.subr.mxu0 0.0
        %1573 = vmatpush1.xpose.msra.mxu0 0.0
        %1574 = vmatprep.subr.mxu0 0.0
        %1575 = vmatpush1.xpose.msra.mxu0 0.0
        %1576 = vmatprep.subr.mxu0 0.0
        %1577 = vmatpush1.xpose.msra.mxu0 0.0
        %1578 = vmatprep.subr.mxu0 0.0
        %1579 = vmatpush1.xpose.msra.mxu0 0.0
        %1580 = vmatprep.subr.mxu0 0.0
        %1581 = vmatpush1.xpose.msra.mxu0 0.0
        %1582 = vmatprep.subr.mxu0 0.0
        %1583 = vmatpush1.xpose.msra.mxu0 0.0
        %1584 = vmatprep.subr.mxu0 0.0
        %1585 = vmatpush1.xpose.msra.mxu0 0.0
        %1586 = vmatprep.subr.mxu0 0.0
        %1587 = vmatpush1.xpose.msra.mxu0 0.0
        %1588 = vmatprep.subr.mxu0 0.0
        %1589 = vmatpush1.xpose.msra.mxu0 0.0
        %1590 = vmatprep.subr.mxu0 0.0
        %1591 = vmatpush1.xpose.msra.mxu0 0.0
        %1592 = vmatprep.subr.mxu0 0.0
        %1593 = vmatpush1.xpose.msra.mxu0 0.0
        %1594 = vmatprep.subr.mxu0 0.0
        %1595 = vmatpush1.xpose.msra.mxu0 0.0
        %1596 = vmatprep.subr.mxu0 0.0
        %1597 = vmatpush1.xpose.msra.mxu0 0.0
        %1598 = vmatprep.subr.mxu0 0.0
        %1599 = vmatpush1.xpose.msra.mxu0 0.0
        %1600 = vmatprep.subr.mxu0 0.0
        %1601 = vmatpush1.xpose.msra.mxu0 0.0
        %1602 = vmatprep.subr.mxu0 0.0
        %1603 = vmatpush1.xpose.msra.mxu0 0.0
        %1604 = vmatprep.subr.mxu0 0.0
        %1605 = vmatpush1.xpose.msra.mxu0 0.0
        %1606 = vmatprep.subr.mxu0 0.0
        %1607 = vmatpush1.xpose.msra.mxu0 0.0
        %1608 = vmatprep.subr.mxu0 0.0
        %1609 = vmatpush1.xpose.msra.mxu0 0.0
        %1610 = vmatprep.subr.mxu0 0.0
        %1611 = vmatpush1.xpose.msra.mxu0 0.0
        %1612 = vmatprep.subr.mxu0 0.0
        %1613 = vmatpush1.xpose.msra.mxu0 0.0
        %1614 = vmatprep.subr.mxu0 0.0
        %1615 = vmatpush1.xpose.msra.mxu0 0.0
        %1616 = vmatprep.subr.mxu0 0.0
        %1617 = vmatpush1.xpose.msra.mxu0 0.0
        %1618 = vmatprep.subr.mxu0 0.0
        %1619 = vmatpush1.xpose.msra.mxu0 0.0
        %1620 = vmatprep.subr.mxu0 0.0
        %1621 = vmatpush1.xpose.msra.mxu0 0.0
        %1622 = vmatprep.subr.mxu0 0.0
        %1623 = vmatpush1.xpose.msra.mxu0 0.0
        %1624 = vmatprep.mubr.f32.mxu0 0.0
        %1625 = vmatmul.mubr.f32.gmra.mrb[0].mxu0 %v1558
        %v1626 = vpop.f32.mrb[0].mxu0
        %v1627 = vadd.f32 0.0, %v1626
        %v1628 = vpop.f32.mrb[0].mxu0
        %1629 = vdwg.mxu0
        %s1630 = scalar_lea.vmem %s607, 8 [#allocation17]
        %1631 = vst.msk [vmem:[%s1630] sm:$0xff] %vm906, %v1627
        %1633 = vrot.lane.b32.xlu0 %v1297, 120
        %v1634 = vpop.permute.xlu0 %1633
        %v1635 = vsel %vm906, %v1634, 0
        %v1637 = vsel %vm906, %v1396, 0
        %1639 = vmatprep.subr.mxu0 0.0
        %1640 = vmatpush1.xpose.msra.mxu0 %v1637
        %1641 = vmatprep.subr.mxu0 0.0
        %1642 = vmatpush1.xpose.msra.mxu0 0.0
        %1643 = vmatprep.subr.mxu0 0.0
        %1644 = vmatpush1.xpose.msra.mxu0 0.0
        %1645 = vmatprep.subr.mxu0 0.0
        %1646 = vmatpush1.xpose.msra.mxu0 0.0
        %1647 = vmatprep.subr.mxu0 0.0
        %1648 = vmatpush1.xpose.msra.mxu0 0.0
        %1649 = vmatprep.subr.mxu0 0.0
        %1650 = vmatpush1.xpose.msra.mxu0 0.0
        %1651 = vmatprep.subr.mxu0 0.0
        %1652 = vmatpush1.xpose.msra.mxu0 0.0
        %1653 = vmatprep.subr.mxu0 0.0
        %1654 = vmatpush1.xpose.msra.mxu0 0.0
        %1655 = vmatprep.subr.mxu0 0.0
        %1656 = vmatpush1.xpose.msra.mxu0 0.0
        %1657 = vmatprep.subr.mxu0 0.0
        %1658 = vmatpush1.xpose.msra.mxu0 0.0
        %1659 = vmatprep.subr.mxu0 0.0
        %1660 = vmatpush1.xpose.msra.mxu0 0.0
        %1661 = vmatprep.subr.mxu0 0.0
        %1662 = vmatpush1.xpose.msra.mxu0 0.0
        %1663 = vmatprep.subr.mxu0 0.0
        %1664 = vmatpush1.xpose.msra.mxu0 0.0
        %1665 = vmatprep.subr.mxu0 0.0
        %1666 = vmatpush1.xpose.msra.mxu0 0.0
        %1667 = vmatprep.subr.mxu0 0.0
        %1668 = vmatpush1.xpose.msra.mxu0 0.0
        %1669 = vmatprep.subr.mxu0 0.0
        %1670 = vmatpush1.xpose.msra.mxu0 0.0
        %1671 = vmatprep.subr.mxu0 0.0
        %1672 = vmatpush1.xpose.msra.mxu0 0.0
        %1673 = vmatprep.subr.mxu0 0.0
        %1674 = vmatpush1.xpose.msra.mxu0 0.0
        %1675 = vmatprep.subr.mxu0 0.0
        %1676 = vmatpush1.xpose.msra.mxu0 0.0
        %1677 = vmatprep.subr.mxu0 0.0
        %1678 = vmatpush1.xpose.msra.mxu0 0.0
        %1679 = vmatprep.subr.mxu0 0.0
        %1680 = vmatpush1.xpose.msra.mxu0 0.0
        %1681 = vmatprep.subr.mxu0 0.0
        %1682 = vmatpush1.xpose.msra.mxu0 0.0
        %1683 = vmatprep.subr.mxu0 0.0
        %1684 = vmatpush1.xpose.msra.mxu0 0.0
        %1685 = vmatprep.subr.mxu0 0.0
        %1686 = vmatpush1.xpose.msra.mxu0 0.0
        %1687 = vmatprep.subr.mxu0 0.0
        %1688 = vmatpush1.xpose.msra.mxu0 0.0
        %1689 = vmatprep.subr.mxu0 0.0
        %1690 = vmatpush1.xpose.msra.mxu0 0.0
        %1691 = vmatprep.subr.mxu0 0.0
        %1692 = vmatpush1.xpose.msra.mxu0 0.0
        %1693 = vmatprep.subr.mxu0 0.0
        %1694 = vmatpush1.xpose.msra.mxu0 0.0
        %1695 = vmatprep.subr.mxu0 0.0
        %1696 = vmatpush1.xpose.msra.mxu0 0.0
        %1697 = vmatprep.subr.mxu0 0.0
        %1698 = vmatpush1.xpose.msra.mxu0 0.0
        %1699 = vmatprep.subr.mxu0 0.0
        %1700 = vmatpush1.xpose.msra.mxu0 0.0
        %1701 = vmatprep.subr.mxu0 0.0
        %1702 = vmatpush1.xpose.msra.mxu0 0.0
        %1703 = vmatprep.mubr.f32.mxu0 0.0
        %1704 = vmatmul.mubr.f32.gmra.mrb[0].mxu0 %v1635
        %v1705 = vpop.f32.mrb[0].mxu0
        %v1706 = vadd.f32 0.0, %v1705
        %v1707 = vpop.f32.mrb[0].mxu0
        %1708 = vdwg.mxu0
        %s1709 = scalar_lea.vmem %s614, 8 [#allocation19]
        %1710 = vst.msk [vmem:[%s1709] sm:$0xff] %vm906, %v1706
        %v1711 = vld [vmem:[%s891] sm:$0xff]
        %v1712 = vld [vmem:[%s893] sm:$0xff]
        %v1713 = vld [vmem:[%s895] sm:$0xff]
        %v1714 = vld [vmem:[#allocation2] sm:$0xff]
        %v1715 = vld [vmem:[#allocation3] sm:$0xff]
        %v1716 = vld [vmem:[#allocation4] sm:$0xff]
        %1718 = vrot.lane.b32.xlu0 %v1711, 112
        %v1719 = vpop.permute.xlu0 %1718
        %1721 = vrot.lane.b32.xlu0 %v1715, 112
        %v1722 = vpop.permute.xlu0 %1721
        %v1723 = vsel %vm906, %v1719, 0
        %v1725 = vsel %vm906, %v1722, 0
        %1727 = vmatprep.subr.mxu0 0.0
        %1728 = vmatpush1.xpose.msra.mxu0 %v1725
        %1729 = vmatprep.subr.mxu0 0.0
        %1730 = vmatpush1.xpose.msra.mxu0 0.0
        %1731 = vmatprep.subr.mxu0 0.0
        %1732 = vmatpush1.xpose.msra.mxu0 0.0
        %1733 = vmatprep.subr.mxu0 0.0
        %1734 = vmatpush1.xpose.msra.mxu0 0.0
        %1735 = vmatprep.subr.mxu0 0.0
        %1736 = vmatpush1.xpose.msra.mxu0 0.0
        %1737 = vmatprep.subr.mxu0 0.0
        %1738 = vmatpush1.xpose.msra.mxu0 0.0
        %1739 = vmatprep.subr.mxu0 0.0
        %1740 = vmatpush1.xpose.msra.mxu0 0.0
        %1741 = vmatprep.subr.mxu0 0.0
        %1742 = vmatpush1.xpose.msra.mxu0 0.0
        %1743 = vmatprep.subr.mxu0 0.0
        %1744 = vmatpush1.xpose.msra.mxu0 0.0
        %1745 = vmatprep.subr.mxu0 0.0
        %1746 = vmatpush1.xpose.msra.mxu0 0.0
        %1747 = vmatprep.subr.mxu0 0.0
        %1748 = vmatpush1.xpose.msra.mxu0 0.0
        %1749 = vmatprep.subr.mxu0 0.0
        %1750 = vmatpush1.xpose.msra.mxu0 0.0
        %1751 = vmatprep.subr.mxu0 0.0
        %1752 = vmatpush1.xpose.msra.mxu0 0.0
        %1753 = vmatprep.subr.mxu0 0.0
        %1754 = vmatpush1.xpose.msra.mxu0 0.0
        %1755 = vmatprep.subr.mxu0 0.0
        %1756 = vmatpush1.xpose.msra.mxu0 0.0
        %1757 = vmatprep.subr.mxu0 0.0
        %1758 = vmatpush1.xpose.msra.mxu0 0.0
        %1759 = vmatprep.subr.mxu0 0.0
        %1760 = vmatpush1.xpose.msra.mxu0 0.0
        %1761 = vmatprep.subr.mxu0 0.0
        %1762 = vmatpush1.xpose.msra.mxu0 0.0
        %1763 = vmatprep.subr.mxu0 0.0
        %1764 = vmatpush1.xpose.msra.mxu0 0.0
        %1765 = vmatprep.subr.mxu0 0.0
        %1766 = vmatpush1.xpose.msra.mxu0 0.0
        %1767 = vmatprep.subr.mxu0 0.0
        %1768 = vmatpush1.xpose.msra.mxu0 0.0
        %1769 = vmatprep.subr.mxu0 0.0
        %1770 = vmatpush1.xpose.msra.mxu0 0.0
        %1771 = vmatprep.subr.mxu0 0.0
        %1772 = vmatpush1.xpose.msra.mxu0 0.0
        %1773 = vmatprep.subr.mxu0 0.0
        %1774 = vmatpush1.xpose.msra.mxu0 0.0
        %1775 = vmatprep.subr.mxu0 0.0
        %1776 = vmatpush1.xpose.msra.mxu0 0.0
        %1777 = vmatprep.subr.mxu0 0.0
        %1778 = vmatpush1.xpose.msra.mxu0 0.0
        %1779 = vmatprep.subr.mxu0 0.0
        %1780 = vmatpush1.xpose.msra.mxu0 0.0
        %1781 = vmatprep.subr.mxu0 0.0
        %1782 = vmatpush1.xpose.msra.mxu0 0.0
        %1783 = vmatprep.subr.mxu0 0.0
        %1784 = vmatpush1.xpose.msra.mxu0 0.0
        %1785 = vmatprep.subr.mxu0 0.0
        %1786 = vmatpush1.xpose.msra.mxu0 0.0
        %1787 = vmatprep.subr.mxu0 0.0
        %1788 = vmatpush1.xpose.msra.mxu0 0.0
        %1789 = vmatprep.subr.mxu0 0.0
        %1790 = vmatpush1.xpose.msra.mxu0 0.0
        %1791 = vmatprep.mubr.f32.mxu0 0.0
        %1792 = vmatmul.mubr.f32.gmra.mrb[0].mxu0 %v1723
        %v1793 = vpop.f32.mrb[0].mxu0
        %v1794 = vadd.f32 %v904, %v1793
        %v1795 = vpop.f32.mrb[0].mxu0
        %1796 = vdwg.mxu0
        %s1797 = scalar_lea.vmem %s593, 16 [#allocation14]
        %1798 = vst.msk [vmem:[%s1797] sm:$0xff] %vm906, %v1794
        %v1799 = vsel %vm906, %v1794, -inf
        %1800 = vmax.xlane.f32.xlu0 %v1799
        %v1801 = vpop.xlane.xlu0 %1800
        %v1802 = vsub.f32 %v1794, %v1801
        %v1803 = vmul.f32 %v1802, 1.442695
        %v1804 = vpow.pop %v1803
        %v1805 = vsel %vm906, %v1804, 0.0
        %1806 = vadd.xlane.f32.xlu0 %v1805
        %v1807 = vpop.xlane.xlu0 %1806
        %v1808 = vrcp.pop %v1807
        %v1809 = vmul.f32 %v1804, %v1808
        %1811 = vrot.lane.b32.xlu0 %v1716, 112
        %v1812 = vpop.permute.xlu0 %1811
        %v1815 = vsel %vm906, %v1809, 0
        %1817 = vmatprep.subr.mxu0 0.0
        %1818 = vmatpush1.msra.mxu0 %v1812
        %1819 = vmatprep.subr.mxu0 0.0
        %1820 = vmatpush1.msra.mxu0 0.0
        %1821 = vmatprep.subr.mxu0 0.0
        %1822 = vmatpush1.msra.mxu0 0.0
        %1823 = vmatprep.subr.mxu0 0.0
        %1824 = vmatpush1.msra.mxu0 0.0
        %1825 = vmatprep.subr.mxu0 0.0
        %1826 = vmatpush1.msra.mxu0 0.0
        %1827 = vmatprep.subr.mxu0 0.0
        %1828 = vmatpush1.msra.mxu0 0.0
        %1829 = vmatprep.subr.mxu0 0.0
        %1830 = vmatpush1.msra.mxu0 0.0
        %1831 = vmatprep.subr.mxu0 0.0
        %1832 = vmatpush1.msra.mxu0 0.0
        %1833 = vmatprep.subr.mxu0 0.0
        %1834 = vmatpush1.msra.mxu0 0.0
        %1835 = vmatprep.subr.mxu0 0.0
        %1836 = vmatpush1.msra.mxu0 0.0
        %1837 = vmatprep.subr.mxu0 0.0
        %1838 = vmatpush1.msra.mxu0 0.0
        %1839 = vmatprep.subr.mxu0 0.0
        %1840 = vmatpush1.msra.mxu0 0.0
        %1841 = vmatprep.subr.mxu0 0.0
        %1842 = vmatpush1.msra.mxu0 0.0
        %1843 = vmatprep.subr.mxu0 0.0
        %1844 = vmatpush1.msra.mxu0 0.0
        %1845 = vmatprep.subr.mxu0 0.0
        %1846 = vmatpush1.msra.mxu0 0.0
        %1847 = vmatprep.subr.mxu0 0.0
        %1848 = vmatpush1.msra.mxu0 0.0
        %1849 = vmatprep.subr.mxu0 0.0
        %1850 = vmatpush1.msra.mxu0 0.0
        %1851 = vmatprep.subr.mxu0 0.0
        %1852 = vmatpush1.msra.mxu0 0.0
        %1853 = vmatprep.subr.mxu0 0.0
        %1854 = vmatpush1.msra.mxu0 0.0
        %1855 = vmatprep.subr.mxu0 0.0
        %1856 = vmatpush1.msra.mxu0 0.0
        %1857 = vmatprep.subr.mxu0 0.0
        %1858 = vmatpush1.msra.mxu0 0.0
        %1859 = vmatprep.subr.mxu0 0.0
        %1860 = vmatpush1.msra.mxu0 0.0
        %1861 = vmatprep.subr.mxu0 0.0
        %1862 = vmatpush1.msra.mxu0 0.0
        %1863 = vmatprep.subr.mxu0 0.0
        %1864 = vmatpush1.msra.mxu0 0.0
        %1865 = vmatprep.subr.mxu0 0.0
        %1866 = vmatpush1.msra.mxu0 0.0
        %1867 = vmatprep.subr.mxu0 0.0
        %1868 = vmatpush1.msra.mxu0 0.0
        %1869 = vmatprep.subr.mxu0 0.0
        %1870 = vmatpush1.msra.mxu0 0.0
        %1871 = vmatprep.subr.mxu0 0.0
        %1872 = vmatpush1.msra.mxu0 0.0
        %1873 = vmatprep.subr.mxu0 0.0
        %1874 = vmatpush1.msra.mxu0 0.0
        %1875 = vmatprep.subr.mxu0 0.0
        %1876 = vmatpush1.msra.mxu0 0.0
        %1877 = vmatprep.subr.mxu0 0.0
        %1878 = vmatpush1.msra.mxu0 0.0
        %1879 = vmatprep.subr.mxu0 0.0
        %1880 = vmatpush1.msra.mxu0 0.0
        %1881 = vmatprep.mubr.f32.mxu0 0.0
        %1882 = vmatmul.mubr.f32.gmra.mrb[0].mxu0 %v1815
        %v1883 = vpop.f32.mrb[0].mxu0
        %v1884 = vadd.f32 0.0, %v1883
        %v1885 = vpop.f32.mrb[0].mxu0
        %1886 = vdwg.mxu0
        %v1887 = vmul.f32 %v1884, 1.6817929
        %1889 = vrot.lane.b32.xlu0 %v1887, 16
        %v1890 = vpop.permute.xlu0 %1889
        %vm1892 = vcmask 195712
        %1893 = vst.msk [vmem:[%s586] sm:$0xff] %vm1892, %v1890
        %1895 = vrot.lane.b32.xlu0 %v1714, 112
        %v1896 = vpop.permute.xlu0 %1895
        %v1897 = vsel %vm906, %v1896, 0
        %1899 = vmatprep.subr.mxu0 0.0
        %1900 = vmatpush1.xpose.msra.mxu0 %v1897
        %1901 = vmatprep.subr.mxu0 0.0
        %1902 = vmatpush1.xpose.msra.mxu0 0.0
        %1903 = vmatprep.subr.mxu0 0.0
        %1904 = vmatpush1.xpose.msra.mxu0 0.0
        %1905 = vmatprep.subr.mxu0 0.0
        %1906 = vmatpush1.xpose.msra.mxu0 0.0
        %1907 = vmatprep.subr.mxu0 0.0
        %1908 = vmatpush1.xpose.msra.mxu0 0.0
        %1909 = vmatprep.subr.mxu0 0.0
        %1910 = vmatpush1.xpose.msra.mxu0 0.0
        %1911 = vmatprep.subr.mxu0 0.0
        %1912 = vmatpush1.xpose.msra.mxu0 0.0
        %1913 = vmatprep.subr.mxu0 0.0
        %1914 = vmatpush1.xpose.msra.mxu0 0.0
        %1915 = vmatprep.subr.mxu0 0.0
        %1916 = vmatpush1.xpose.msra.mxu0 0.0
        %1917 = vmatprep.subr.mxu0 0.0
        %1918 = vmatpush1.xpose.msra.mxu0 0.0
        %1919 = vmatprep.subr.mxu0 0.0
        %1920 = vmatpush1.xpose.msra.mxu0 0.0
        %1921 = vmatprep.subr.mxu0 0.0
        %1922 = vmatpush1.xpose.msra.mxu0 0.0
        %1923 = vmatprep.subr.mxu0 0.0
        %1924 = vmatpush1.xpose.msra.mxu0 0.0
        %1925 = vmatprep.subr.mxu0 0.0
        %1926 = vmatpush1.xpose.msra.mxu0 0.0
        %1927 = vmatprep.subr.mxu0 0.0
        %1928 = vmatpush1.xpose.msra.mxu0 0.0
        %1929 = vmatprep.subr.mxu0 0.0
        %1930 = vmatpush1.xpose.msra.mxu0 0.0
        %1931 = vmatprep.subr.mxu0 0.0
        %1932 = vmatpush1.xpose.msra.mxu0 0.0
        %1933 = vmatprep.subr.mxu0 0.0
        %1934 = vmatpush1.xpose.msra.mxu0 0.0
        %1935 = vmatprep.subr.mxu0 0.0
        %1936 = vmatpush1.xpose.msra.mxu0 0.0
        %1937 = vmatprep.subr.mxu0 0.0
        %1938 = vmatpush1.xpose.msra.mxu0 0.0
        %1939 = vmatprep.subr.mxu0 0.0
        %1940 = vmatpush1.xpose.msra.mxu0 0.0
        %1941 = vmatprep.subr.mxu0 0.0
        %1942 = vmatpush1.xpose.msra.mxu0 0.0
        %1943 = vmatprep.subr.mxu0 0.0
        %1944 = vmatpush1.xpose.msra.mxu0 0.0
        %1945 = vmatprep.subr.mxu0 0.0
        %1946 = vmatpush1.xpose.msra.mxu0 0.0
        %1947 = vmatprep.subr.mxu0 0.0
        %1948 = vmatpush1.xpose.msra.mxu0 0.0
        %1949 = vmatprep.subr.mxu0 0.0
        %1950 = vmatpush1.xpose.msra.mxu0 0.0
        %1951 = vmatprep.subr.mxu0 0.0
        %1952 = vmatpush1.xpose.msra.mxu0 0.0
        %1953 = vmatprep.subr.mxu0 0.0
        %1954 = vmatpush1.xpose.msra.mxu0 0.0
        %1955 = vmatprep.subr.mxu0 0.0
        %1956 = vmatpush1.xpose.msra.mxu0 0.0
        %1957 = vmatprep.subr.mxu0 0.0
        %1958 = vmatpush1.xpose.msra.mxu0 0.0
        %1959 = vmatprep.subr.mxu0 0.0
        %1960 = vmatpush1.xpose.msra.mxu0 0.0
        %1961 = vmatprep.subr.mxu0 0.0
        %1962 = vmatpush1.xpose.msra.mxu0 0.0
        %1963 = vmatprep.mubr.f32.mxu0 0.0
        %1964 = vmatmul.mubr.f32.gmra.mrb[0].mxu0 %v1723
        %v1965 = vpop.f32.mrb[0].mxu0
        %v1966 = vadd.f32 0.0, %v1965
        %v1967 = vpop.f32.mrb[0].mxu0
        %1968 = vdwg.mxu0
        %s1969 = scalar_lea.vmem %s600, 16 [#allocation16]
        %1970 = vst.msk [vmem:[%s1969] sm:$0xff] %vm906, %v1966
        %1972 = vrot.lane.b32.xlu0 %v1712, 112
        %v1973 = vpop.permute.xlu0 %1972
        %v1974 = vsel %vm906, %v1973, 0
        %1976 = vmatprep.subr.mxu0 0.0
        %1977 = vmatpush1.xpose.msra.mxu0 %v1725
        %1978 = vmatprep.subr.mxu0 0.0
        %1979 = vmatpush1.xpose.msra.mxu0 0.0
        %1980 = vmatprep.subr.mxu0 0.0
        %1981 = vmatpush1.xpose.msra.mxu0 0.0
        %1982 = vmatprep.subr.mxu0 0.0
        %1983 = vmatpush1.xpose.msra.mxu0 0.0
        %1984 = vmatprep.subr.mxu0 0.0
        %1985 = vmatpush1.xpose.msra.mxu0 0.0
        %1986 = vmatprep.subr.mxu0 0.0
        %1987 = vmatpush1.xpose.msra.mxu0 0.0
        %1988 = vmatprep.subr.mxu0 0.0
        %1989 = vmatpush1.xpose.msra.mxu0 0.0
        %1990 = vmatprep.subr.mxu0 0.0
        %1991 = vmatpush1.xpose.msra.mxu0 0.0
        %1992 = vmatprep.subr.mxu0 0.0
        %1993 = vmatpush1.xpose.msra.mxu0 0.0
        %1994 = vmatprep.subr.mxu0 0.0
        %1995 = vmatpush1.xpose.msra.mxu0 0.0
        %1996 = vmatprep.subr.mxu0 0.0
        %1997 = vmatpush1.xpose.msra.mxu0 0.0
        %1998 = vmatprep.subr.mxu0 0.0
        %1999 = vmatpush1.xpose.msra.mxu0 0.0
        %2000 = vmatprep.subr.mxu0 0.0
        %2001 = vmatpush1.xpose.msra.mxu0 0.0
        %2002 = vmatprep.subr.mxu0 0.0
        %2003 = vmatpush1.xpose.msra.mxu0 0.0
        %2004 = vmatprep.subr.mxu0 0.0
        %2005 = vmatpush1.xpose.msra.mxu0 0.0
        %2006 = vmatprep.subr.mxu0 0.0
        %2007 = vmatpush1.xpose.msra.mxu0 0.0
        %2008 = vmatprep.subr.mxu0 0.0
        %2009 = vmatpush1.xpose.msra.mxu0 0.0
        %2010 = vmatprep.subr.mxu0 0.0
        %2011 = vmatpush1.xpose.msra.mxu0 0.0
        %2012 = vmatprep.subr.mxu0 0.0
        %2013 = vmatpush1.xpose.msra.mxu0 0.0
        %2014 = vmatprep.subr.mxu0 0.0
        %2015 = vmatpush1.xpose.msra.mxu0 0.0
        %2016 = vmatprep.subr.mxu0 0.0
        %2017 = vmatpush1.xpose.msra.mxu0 0.0
        %2018 = vmatprep.subr.mxu0 0.0
        %2019 = vmatpush1.xpose.msra.mxu0 0.0
        %2020 = vmatprep.subr.mxu0 0.0
        %2021 = vmatpush1.xpose.msra.mxu0 0.0
        %2022 = vmatprep.subr.mxu0 0.0
        %2023 = vmatpush1.xpose.msra.mxu0 0.0
        %2024 = vmatprep.subr.mxu0 0.0
        %2025 = vmatpush1.xpose.msra.mxu0 0.0
        %2026 = vmatprep.subr.mxu0 0.0
        %2027 = vmatpush1.xpose.msra.mxu0 0.0
        %2028 = vmatprep.subr.mxu0 0.0
        %2029 = vmatpush1.xpose.msra.mxu0 0.0
        %2030 = vmatprep.subr.mxu0 0.0
        %2031 = vmatpush1.xpose.msra.mxu0 0.0
        %2032 = vmatprep.subr.mxu0 0.0
        %2033 = vmatpush1.xpose.msra.mxu0 0.0
        %2034 = vmatprep.subr.mxu0 0.0
        %2035 = vmatpush1.xpose.msra.mxu0 0.0
        %2036 = vmatprep.subr.mxu0 0.0
        %2037 = vmatpush1.xpose.msra.mxu0 0.0
        %2038 = vmatprep.subr.mxu0 0.0
        %2039 = vmatpush1.xpose.msra.mxu0 0.0
        %2040 = vmatprep.mubr.f32.mxu0 0.0
        %2041 = vmatmul.mubr.f32.gmra.mrb[0].mxu0 %v1974
        %v2042 = vpop.f32.mrb[0].mxu0
        %v2043 = vadd.f32 0.0, %v2042
        %v2044 = vpop.f32.mrb[0].mxu0
        %2045 = vdwg.mxu0
        %s2046 = scalar_lea.vmem %s607, 16 [#allocation17]
        %2047 = vst.msk [vmem:[%s2046] sm:$0xff] %vm906, %v2043
        %2049 = vrot.lane.b32.xlu0 %v1713, 112
        %v2050 = vpop.permute.xlu0 %2049
        %v2051 = vsel %vm906, %v2050, 0
        %v2053 = vsel %vm906, %v1812, 0
        %2055 = vmatprep.subr.mxu0 0.0
        %2056 = vmatpush1.xpose.msra.mxu0 %v2053
        %2057 = vmatprep.subr.mxu0 0.0
        %2058 = vmatpush1.xpose.msra.mxu0 0.0
        %2059 = vmatprep.subr.mxu0 0.0
        %2060 = vmatpush1.xpose.msra.mxu0 0.0
        %2061 = vmatprep.subr.mxu0 0.0
        %2062 = vmatpush1.xpose.msra.mxu0 0.0
        %2063 = vmatprep.subr.mxu0 0.0
        %2064 = vmatpush1.xpose.msra.mxu0 0.0
        %2065 = vmatprep.subr.mxu0 0.0
        %2066 = vmatpush1.xpose.msra.mxu0 0.0
        %2067 = vmatprep.subr.mxu0 0.0
        %2068 = vmatpush1.xpose.msra.mxu0 0.0
        %2069 = vmatprep.subr.mxu0 0.0
        %2070 = vmatpush1.xpose.msra.mxu0 0.0
        %2071 = vmatprep.subr.mxu0 0.0
        %2072 = vmatpush1.xpose.msra.mxu0 0.0
        %2073 = vmatprep.subr.mxu0 0.0
        %2074 = vmatpush1.xpose.msra.mxu0 0.0
        %2075 = vmatprep.subr.mxu0 0.0
        %2076 = vmatpush1.xpose.msra.mxu0 0.0
        %2077 = vmatprep.subr.mxu0 0.0
        %2078 = vmatpush1.xpose.msra.mxu0 0.0
        %2079 = vmatprep.subr.mxu0 0.0
        %2080 = vmatpush1.xpose.msra.mxu0 0.0
        %2081 = vmatprep.subr.mxu0 0.0
        %2082 = vmatpush1.xpose.msra.mxu0 0.0
        %2083 = vmatprep.subr.mxu0 0.0
        %2084 = vmatpush1.xpose.msra.mxu0 0.0
        %2085 = vmatprep.subr.mxu0 0.0
        %2086 = vmatpush1.xpose.msra.mxu0 0.0
        %2087 = vmatprep.subr.mxu0 0.0
        %2088 = vmatpush1.xpose.msra.mxu0 0.0
        %2089 = vmatprep.subr.mxu0 0.0
        %2090 = vmatpush1.xpose.msra.mxu0 0.0
        %2091 = vmatprep.subr.mxu0 0.0
        %2092 = vmatpush1.xpose.msra.mxu0 0.0
        %2093 = vmatprep.subr.mxu0 0.0
        %2094 = vmatpush1.xpose.msra.mxu0 0.0
        %2095 = vmatprep.subr.mxu0 0.0
        %2096 = vmatpush1.xpose.msra.mxu0 0.0
        %2097 = vmatprep.subr.mxu0 0.0
        %2098 = vmatpush1.xpose.msra.mxu0 0.0
        %2099 = vmatprep.subr.mxu0 0.0
        %2100 = vmatpush1.xpose.msra.mxu0 0.0
        %2101 = vmatprep.subr.mxu0 0.0
        %2102 = vmatpush1.xpose.msra.mxu0 0.0
        %2103 = vmatprep.subr.mxu0 0.0
        %2104 = vmatpush1.xpose.msra.mxu0 0.0
        %2105 = vmatprep.subr.mxu0 0.0
        %2106 = vmatpush1.xpose.msra.mxu0 0.0
        %2107 = vmatprep.subr.mxu0 0.0
        %2108 = vmatpush1.xpose.msra.mxu0 0.0
        %2109 = vmatprep.subr.mxu0 0.0
        %2110 = vmatpush1.xpose.msra.mxu0 0.0
        %2111 = vmatprep.subr.mxu0 0.0
        %2112 = vmatpush1.xpose.msra.mxu0 0.0
        %2113 = vmatprep.subr.mxu0 0.0
        %2114 = vmatpush1.xpose.msra.mxu0 0.0
        %2115 = vmatprep.subr.mxu0 0.0
        %2116 = vmatpush1.xpose.msra.mxu0 0.0
        %2117 = vmatprep.subr.mxu0 0.0
        %2118 = vmatpush1.xpose.msra.mxu0 0.0
        %2119 = vmatprep.mubr.f32.mxu0 0.0
        %2120 = vmatmul.mubr.f32.gmra.mrb[0].mxu0 %v2051
        %v2121 = vpop.f32.mrb[0].mxu0
        %v2122 = vadd.f32 0.0, %v2121
        %v2123 = vpop.f32.mrb[0].mxu0
        %2124 = vdwg.mxu0
        %s2125 = scalar_lea.vmem %s614, 16 [#allocation19]
        %2126 = vst.msk [vmem:[%s2125] sm:$0xff] %vm906, %v2122
        %v2127 = vld [vmem:[%s891] sm:$0xff]
        %v2128 = vld [vmem:[%s893] sm:$0xff]
        %v2129 = vld [vmem:[%s895] sm:$0xff]
        %v2130 = vld [vmem:[#allocation2] sm:$0xff]
        %v2131 = vld [vmem:[#allocation3] sm:$0xff]
        %v2132 = vld [vmem:[#allocation4] sm:$0xff]
        %2134 = vrot.lane.b32.xlu0 %v2127, 104
        %v2135 = vpop.permute.xlu0 %2134
        %2137 = vrot.lane.b32.xlu0 %v2131, 104
        %v2138 = vpop.permute.xlu0 %2137
        %v2139 = vsel %vm906, %v2135, 0
        %v2141 = vsel %vm906, %v2138, 0
        %2143 = vmatprep.subr.mxu0 0.0
        %2144 = vmatpush1.xpose.msra.mxu0 %v2141
        %2145 = vmatprep.subr.mxu0 0.0
        %2146 = vmatpush1.xpose.msra.mxu0 0.0
        %2147 = vmatprep.subr.mxu0 0.0
        %2148 = vmatpush1.xpose.msra.mxu0 0.0
        %2149 = vmatprep.subr.mxu0 0.0
        %2150 = vmatpush1.xpose.msra.mxu0 0.0
        %2151 = vmatprep.subr.mxu0 0.0
        %2152 = vmatpush1.xpose.msra.mxu0 0.0
        %2153 = vmatprep.subr.mxu0 0.0
        %2154 = vmatpush1.xpose.msra.mxu0 0.0
        %2155 = vmatprep.subr.mxu0 0.0
        %2156 = vmatpush1.xpose.msra.mxu0 0.0
        %2157 = vmatprep.subr.mxu0 0.0
        %2158 = vmatpush1.xpose.msra.mxu0 0.0
        %2159 = vmatprep.subr.mxu0 0.0
        %2160 = vmatpush1.xpose.msra.mxu0 0.0
        %2161 = vmatprep.subr.mxu0 0.0
        %2162 = vmatpush1.xpose.msra.mxu0 0.0
        %2163 = vmatprep.subr.mxu0 0.0
        %2164 = vmatpush1.xpose.msra.mxu0 0.0
        %2165 = vmatprep.subr.mxu0 0.0
        %2166 = vmatpush1.xpose.msra.mxu0 0.0
        %2167 = vmatprep.subr.mxu0 0.0
        %2168 = vmatpush1.xpose.msra.mxu0 0.0
        %2169 = vmatprep.subr.mxu0 0.0
        %2170 = vmatpush1.xpose.msra.mxu0 0.0
        %2171 = vmatprep.subr.mxu0 0.0
        %2172 = vmatpush1.xpose.msra.mxu0 0.0
        %2173 = vmatprep.subr.mxu0 0.0
        %2174 = vmatpush1.xpose.msra.mxu0 0.0
        %2175 = vmatprep.subr.mxu0 0.0
        %2176 = vmatpush1.xpose.msra.mxu0 0.0
        %2177 = vmatprep.subr.mxu0 0.0
        %2178 = vmatpush1.xpose.msra.mxu0 0.0
        %2179 = vmatprep.subr.mxu0 0.0
        %2180 = vmatpush1.xpose.msra.mxu0 0.0
        %2181 = vmatprep.subr.mxu0 0.0
        %2182 = vmatpush1.xpose.msra.mxu0 0.0
        %2183 = vmatprep.subr.mxu0 0.0
        %2184 = vmatpush1.xpose.msra.mxu0 0.0
        %2185 = vmatprep.subr.mxu0 0.0
        %2186 = vmatpush1.xpose.msra.mxu0 0.0
        %2187 = vmatprep.subr.mxu0 0.0
        %2188 = vmatpush1.xpose.msra.mxu0 0.0
        %2189 = vmatprep.subr.mxu0 0.0
        %2190 = vmatpush1.xpose.msra.mxu0 0.0
        %2191 = vmatprep.subr.mxu0 0.0
        %2192 = vmatpush1.xpose.msra.mxu0 0.0
        %2193 = vmatprep.subr.mxu0 0.0
        %2194 = vmatpush1.xpose.msra.mxu0 0.0
        %2195 = vmatprep.subr.mxu0 0.0
        %2196 = vmatpush1.xpose.msra.mxu0 0.0
        %2197 = vmatprep.subr.mxu0 0.0
        %2198 = vmatpush1.xpose.msra.mxu0 0.0
        %2199 = vmatprep.subr.mxu0 0.0
        %2200 = vmatpush1.xpose.msra.mxu0 0.0
        %2201 = vmatprep.subr.mxu0 0.0
        %2202 = vmatpush1.xpose.msra.mxu0 0.0
        %2203 = vmatprep.subr.mxu0 0.0
        %2204 = vmatpush1.xpose.msra.mxu0 0.0
        %2205 = vmatprep.subr.mxu0 0.0
        %2206 = vmatpush1.xpose.msra.mxu0 0.0
        %2207 = vmatprep.mubr.f32.mxu0 0.0
        %2208 = vmatmul.mubr.f32.gmra.mrb[0].mxu0 %v2139
        %v2209 = vpop.f32.mrb[0].mxu0
        %v2210 = vadd.f32 %v904, %v2209
        %v2211 = vpop.f32.mrb[0].mxu0
        %2212 = vdwg.mxu0
        %s2213 = scalar_lea.vmem %s593, 24 [#allocation14]
        %2214 = vst.msk [vmem:[%s2213] sm:$0xff] %vm906, %v2210
        %v2215 = vsel %vm906, %v2210, -inf
        %2216 = vmax.xlane.f32.xlu0 %v2215
        %v2217 = vpop.xlane.xlu0 %2216
        %v2218 = vsub.f32 %v2210, %v2217
        %v2219 = vmul.f32 %v2218, 1.442695
        %v2220 = vpow.pop %v2219
        %v2221 = vsel %vm906, %v2220, 0.0
        %2222 = vadd.xlane.f32.xlu0 %v2221
        %v2223 = vpop.xlane.xlu0 %2222
        %v2224 = vrcp.pop %v2223
        %v2225 = vmul.f32 %v2220, %v2224
        %2227 = vrot.lane.b32.xlu0 %v2132, 104
        %v2228 = vpop.permute.xlu0 %2227
        %v2231 = vsel %vm906, %v2225, 0
        %2233 = vmatprep.subr.mxu0 0.0
        %2234 = vmatpush1.msra.mxu0 %v2228
        %2235 = vmatprep.subr.mxu0 0.0
        %2236 = vmatpush1.msra.mxu0 0.0
        %2237 = vmatprep.subr.mxu0 0.0
        %2238 = vmatpush1.msra.mxu0 0.0
        %2239 = vmatprep.subr.mxu0 0.0
        %2240 = vmatpush1.msra.mxu0 0.0
        %2241 = vmatprep.subr.mxu0 0.0
        %2242 = vmatpush1.msra.mxu0 0.0
        %2243 = vmatprep.subr.mxu0 0.0
        %2244 = vmatpush1.msra.mxu0 0.0
        %2245 = vmatprep.subr.mxu0 0.0
        %2246 = vmatpush1.msra.mxu0 0.0
        %2247 = vmatprep.subr.mxu0 0.0
        %2248 = vmatpush1.msra.mxu0 0.0
        %2249 = vmatprep.subr.mxu0 0.0
        %2250 = vmatpush1.msra.mxu0 0.0
        %2251 = vmatprep.subr.mxu0 0.0
        %2252 = vmatpush1.msra.mxu0 0.0
        %2253 = vmatprep.subr.mxu0 0.0
        %2254 = vmatpush1.msra.mxu0 0.0
        %2255 = vmatprep.subr.mxu0 0.0
        %2256 = vmatpush1.msra.mxu0 0.0
        %2257 = vmatprep.subr.mxu0 0.0
        %2258 = vmatpush1.msra.mxu0 0.0
        %2259 = vmatprep.subr.mxu0 0.0
        %2260 = vmatpush1.msra.mxu0 0.0
        %2261 = vmatprep.subr.mxu0 0.0
        %2262 = vmatpush1.msra.mxu0 0.0
        %2263 = vmatprep.subr.mxu0 0.0
        %2264 = vmatpush1.msra.mxu0 0.0
        %2265 = vmatprep.subr.mxu0 0.0
        %2266 = vmatpush1.msra.mxu0 0.0
        %2267 = vmatprep.subr.mxu0 0.0
        %2268 = vmatpush1.msra.mxu0 0.0
        %2269 = vmatprep.subr.mxu0 0.0
        %2270 = vmatpush1.msra.mxu0 0.0
        %2271 = vmatprep.subr.mxu0 0.0
        %2272 = vmatpush1.msra.mxu0 0.0
        %2273 = vmatprep.subr.mxu0 0.0
        %2274 = vmatpush1.msra.mxu0 0.0
        %2275 = vmatprep.subr.mxu0 0.0
        %2276 = vmatpush1.msra.mxu0 0.0
        %2277 = vmatprep.subr.mxu0 0.0
        %2278 = vmatpush1.msra.mxu0 0.0
        %2279 = vmatprep.subr.mxu0 0.0
        %2280 = vmatpush1.msra.mxu0 0.0
        %2281 = vmatprep.subr.mxu0 0.0
        %2282 = vmatpush1.msra.mxu0 0.0
        %2283 = vmatprep.subr.mxu0 0.0
        %2284 = vmatpush1.msra.mxu0 0.0
        %2285 = vmatprep.subr.mxu0 0.0
        %2286 = vmatpush1.msra.mxu0 0.0
        %2287 = vmatprep.subr.mxu0 0.0
        %2288 = vmatpush1.msra.mxu0 0.0
        %2289 = vmatprep.subr.mxu0 0.0
        %2290 = vmatpush1.msra.mxu0 0.0
        %2291 = vmatprep.subr.mxu0 0.0
        %2292 = vmatpush1.msra.mxu0 0.0
        %2293 = vmatprep.subr.mxu0 0.0
        %2294 = vmatpush1.msra.mxu0 0.0
        %2295 = vmatprep.subr.mxu0 0.0
        %2296 = vmatpush1.msra.mxu0 0.0
        %2297 = vmatprep.mubr.f32.mxu0 0.0
        %2298 = vmatmul.mubr.f32.gmra.mrb[0].mxu0 %v2231
        %v2299 = vpop.f32.mrb[0].mxu0
        %v2300 = vadd.f32 0.0, %v2299
        %v2301 = vpop.f32.mrb[0].mxu0
        %2302 = vdwg.mxu0
        %v2303 = vmul.f32 %v2300, 1.6817929
        %2305 = vrot.lane.b32.xlu0 %v2303, 24
        %v2306 = vpop.permute.xlu0 %2305
        %vm2308 = vcmask 261312
        %2309 = vst.msk [vmem:[%s586] sm:$0xff] %vm2308, %v2306
        %2311 = vrot.lane.b32.xlu0 %v2130, 104
        %v2312 = vpop.permute.xlu0 %2311
        %v2313 = vsel %vm906, %v2312, 0
        %2315 = vmatprep.subr.mxu0 0.0
        %2316 = vmatpush1.xpose.msra.mxu0 %v2313
        %2317 = vmatprep.subr.mxu0 0.0
        %2318 = vmatpush1.xpose.msra.mxu0 0.0
        %2319 = vmatprep.subr.mxu0 0.0
        %2320 = vmatpush1.xpose.msra.mxu0 0.0
        %2321 = vmatprep.subr.mxu0 0.0
        %2322 = vmatpush1.xpose.msra.mxu0 0.0
        %2323 = vmatprep.subr.mxu0 0.0
        %2324 = vmatpush1.xpose.msra.mxu0 0.0
        %2325 = vmatprep.subr.mxu0 0.0
        %2326 = vmatpush1.xpose.msra.mxu0 0.0
        %2327 = vmatprep.subr.mxu0 0.0
        %2328 = vmatpush1.xpose.msra.mxu0 0.0
        %2329 = vmatprep.subr.mxu0 0.0
        %2330 = vmatpush1.xpose.msra.mxu0 0.0
        %2331 = vmatprep.subr.mxu0 0.0
        %2332 = vmatpush1.xpose.msra.mxu0 0.0
        %2333 = vmatprep.subr.mxu0 0.0
        %2334 = vmatpush1.xpose.msra.mxu0 0.0
        %2335 = vmatprep.subr.mxu0 0.0
        %2336 = vmatpush1.xpose.msra.mxu0 0.0
        %2337 = vmatprep.subr.mxu0 0.0
        %2338 = vmatpush1.xpose.msra.mxu0 0.0
        %2339 = vmatprep.subr.mxu0 0.0
        %2340 = vmatpush1.xpose.msra.mxu0 0.0
        %2341 = vmatprep.subr.mxu0 0.0
        %2342 = vmatpush1.xpose.msra.mxu0 0.0
        %2343 = vmatprep.subr.mxu0 0.0
        %2344 = vmatpush1.xpose.msra.mxu0 0.0
        %2345 = vmatprep.subr.mxu0 0.0
        %2346 = vmatpush1.xpose.msra.mxu0 0.0
        %2347 = vmatprep.subr.mxu0 0.0
        %2348 = vmatpush1.xpose.msra.mxu0 0.0
        %2349 = vmatprep.subr.mxu0 0.0
        %2350 = vmatpush1.xpose.msra.mxu0 0.0
        %2351 = vmatprep.subr.mxu0 0.0
        %2352 = vmatpush1.xpose.msra.mxu0 0.0
        %2353 = vmatprep.subr.mxu0 0.0
        %2354 = vmatpush1.xpose.msra.mxu0 0.0
        %2355 = vmatprep.subr.mxu0 0.0
        %2356 = vmatpush1.xpose.msra.mxu0 0.0
        %2357 = vmatprep.subr.mxu0 0.0
        %2358 = vmatpush1.xpose.msra.mxu0 0.0
        %2359 = vmatprep.subr.mxu0 0.0
        %2360 = vmatpush1.xpose.msra.mxu0 0.0
        %2361 = vmatprep.subr.mxu0 0.0
        %2362 = vmatpush1.xpose.msra.mxu0 0.0
        %2363 = vmatprep.subr.mxu0 0.0
        %2364 = vmatpush1.xpose.msra.mxu0 0.0
        %2365 = vmatprep.subr.mxu0 0.0
        %2366 = vmatpush1.xpose.msra.mxu0 0.0
        %2367 = vmatprep.subr.mxu0 0.0
        %2368 = vmatpush1.xpose.msra.mxu0 0.0
        %2369 = vmatprep.subr.mxu0 0.0
        %2370 = vmatpush1.xpose.msra.mxu0 0.0
        %2371 = vmatprep.subr.mxu0 0.0
        %2372 = vmatpush1.xpose.msra.mxu0 0.0
        %2373 = vmatprep.subr.mxu0 0.0
        %2374 = vmatpush1.xpose.msra.mxu0 0.0
        %2375 = vmatprep.subr.mxu0 0.0
        %2376 = vmatpush1.xpose.msra.mxu0 0.0
        %2377 = vmatprep.subr.mxu0 0.0
        %2378 = vmatpush1.xpose.msra.mxu0 0.0
        %2379 = vmatprep.mubr.f32.mxu0 0.0
        %2380 = vmatmul.mubr.f32.gmra.mrb[0].mxu0 %v2139
        %v2381 = vpop.f32.mrb[0].mxu0
        %v2382 = vadd.f32 0.0, %v2381
        %v2383 = vpop.f32.mrb[0].mxu0
        %2384 = vdwg.mxu0
        %s2385 = scalar_lea.vmem %s600, 24 [#allocation16]
        %2386 = vst.msk [vmem:[%s2385] sm:$0xff] %vm906, %v2382
        %2388 = vrot.lane.b32.xlu0 %v2128, 104
        %v2389 = vpop.permute.xlu0 %2388
        %v2390 = vsel %vm906, %v2389, 0
        %2392 = vmatprep.subr.mxu0 0.0
        %2393 = vmatpush1.xpose.msra.mxu0 %v2141
        %2394 = vmatprep.subr.mxu0 0.0
        %2395 = vmatpush1.xpose.msra.mxu0 0.0
        %2396 = vmatprep.subr.mxu0 0.0
        %2397 = vmatpush1.xpose.msra.mxu0 0.0
        %2398 = vmatprep.subr.mxu0 0.0
        %2399 = vmatpush1.xpose.msra.mxu0 0.0
        %2400 = vmatprep.subr.mxu0 0.0
        %2401 = vmatpush1.xpose.msra.mxu0 0.0
        %2402 = vmatprep.subr.mxu0 0.0
        %2403 = vmatpush1.xpose.msra.mxu0 0.0
        %2404 = vmatprep.subr.mxu0 0.0
        %2405 = vmatpush1.xpose.msra.mxu0 0.0
        %2406 = vmatprep.subr.mxu0 0.0
        %2407 = vmatpush1.xpose.msra.mxu0 0.0
        %2408 = vmatprep.subr.mxu0 0.0
        %2409 = vmatpush1.xpose.msra.mxu0 0.0
        %2410 = vmatprep.subr.mxu0 0.0
        %2411 = vmatpush1.xpose.msra.mxu0 0.0
        %2412 = vmatprep.subr.mxu0 0.0
        %2413 = vmatpush1.xpose.msra.mxu0 0.0
        %2414 = vmatprep.subr.mxu0 0.0
        %2415 = vmatpush1.xpose.msra.mxu0 0.0
        %2416 = vmatprep.subr.mxu0 0.0
        %2417 = vmatpush1.xpose.msra.mxu0 0.0
        %2418 = vmatprep.subr.mxu0 0.0
        %2419 = vmatpush1.xpose.msra.mxu0 0.0
        %2420 = vmatprep.subr.mxu0 0.0
        %2421 = vmatpush1.xpose.msra.mxu0 0.0
        %2422 = vmatprep.subr.mxu0 0.0
        %2423 = vmatpush1.xpose.msra.mxu0 0.0
        %2424 = vmatprep.subr.mxu0 0.0
        %2425 = vmatpush1.xpose.msra.mxu0 0.0
        %2426 = vmatprep.subr.mxu0 0.0
        %2427 = vmatpush1.xpose.msra.mxu0 0.0
        %2428 = vmatprep.subr.mxu0 0.0
        %2429 = vmatpush1.xpose.msra.mxu0 0.0
        %2430 = vmatprep.subr.mxu0 0.0
        %2431 = vmatpush1.xpose.msra.mxu0 0.0
        %2432 = vmatprep.subr.mxu0 0.0
        %2433 = vmatpush1.xpose.msra.mxu0 0.0
        %2434 = vmatprep.subr.mxu0 0.0
        %2435 = vmatpush1.xpose.msra.mxu0 0.0
        %2436 = vmatprep.subr.mxu0 0.0
        %2437 = vmatpush1.xpose.msra.mxu0 0.0
        %2438 = vmatprep.subr.mxu0 0.0
        %2439 = vmatpush1.xpose.msra.mxu0 0.0
        %2440 = vmatprep.subr.mxu0 0.0
        %2441 = vmatpush1.xpose.msra.mxu0 0.0
        %2442 = vmatprep.subr.mxu0 0.0
        %2443 = vmatpush1.xpose.msra.mxu0 0.0
        %2444 = vmatprep.subr.mxu0 0.0
        %2445 = vmatpush1.xpose.msra.mxu0 0.0
        %2446 = vmatprep.subr.mxu0 0.0
        %2447 = vmatpush1.xpose.msra.mxu0 0.0
        %2448 = vmatprep.subr.mxu0 0.0
        %2449 = vmatpush1.xpose.msra.mxu0 0.0
        %2450 = vmatprep.subr.mxu0 0.0
        %2451 = vmatpush1.xpose.msra.mxu0 0.0
        %2452 = vmatprep.subr.mxu0 0.0
        %2453 = vmatpush1.xpose.msra.mxu0 0.0
        %2454 = vmatprep.subr.mxu0 0.0
        %2455 = vmatpush1.xpose.msra.mxu0 0.0
        %2456 = vmatprep.mubr.f32.mxu0 0.0
        %2457 = vmatmul.mubr.f32.gmra.mrb[0].mxu0 %v2390
        %v2458 = vpop.f32.mrb[0].mxu0
        %v2459 = vadd.f32 0.0, %v2458
        %v2460 = vpop.f32.mrb[0].mxu0
        %2461 = vdwg.mxu0
        %s2462 = scalar_lea.vmem %s607, 24 [#allocation17]
        %2463 = vst.msk [vmem:[%s2462] sm:$0xff] %vm906, %v2459
        %2465 = vrot.lane.b32.xlu0 %v2129, 104
        %v2466 = vpop.permute.xlu0 %2465
        %v2467 = vsel %vm906, %v2466, 0
        %v2469 = vsel %vm906, %v2228, 0
        %2471 = vmatprep.subr.mxu0 0.0
        %2472 = vmatpush1.xpose.msra.mxu0 %v2469
        %2473 = vmatprep.subr.mxu0 0.0
        %2474 = vmatpush1.xpose.msra.mxu0 0.0
        %2475 = vmatprep.subr.mxu0 0.0
        %2476 = vmatpush1.xpose.msra.mxu0 0.0
        %2477 = vmatprep.subr.mxu0 0.0
        %2478 = vmatpush1.xpose.msra.mxu0 0.0
        %2479 = vmatprep.subr.mxu0 0.0
        %2480 = vmatpush1.xpose.msra.mxu0 0.0
        %2481 = vmatprep.subr.mxu0 0.0
        %2482 = vmatpush1.xpose.msra.mxu0 0.0
        %2483 = vmatprep.subr.mxu0 0.0
        %2484 = vmatpush1.xpose.msra.mxu0 0.0
        %2485 = vmatprep.subr.mxu0 0.0
        %2486 = vmatpush1.xpose.msra.mxu0 0.0
        %2487 = vmatprep.subr.mxu0 0.0
        %2488 = vmatpush1.xpose.msra.mxu0 0.0
        %2489 = vmatprep.subr.mxu0 0.0
        %2490 = vmatpush1.xpose.msra.mxu0 0.0
        %2491 = vmatprep.subr.mxu0 0.0
        %2492 = vmatpush1.xpose.msra.mxu0 0.0
        %2493 = vmatprep.subr.mxu0 0.0
        %2494 = vmatpush1.xpose.msra.mxu0 0.0
        %2495 = vmatprep.subr.mxu0 0.0
        %2496 = vmatpush1.xpose.msra.mxu0 0.0
        %2497 = vmatprep.subr.mxu0 0.0
        %2498 = vmatpush1.xpose.msra.mxu0 0.0
        %2499 = vmatprep.subr.mxu0 0.0
        %2500 = vmatpush1.xpose.msra.mxu0 0.0
        %2501 = vmatprep.subr.mxu0 0.0
        %2502 = vmatpush1.xpose.msra.mxu0 0.0
        %2503 = vmatprep.subr.mxu0 0.0
        %2504 = vmatpush1.xpose.msra.mxu0 0.0
        %2505 = vmatprep.subr.mxu0 0.0
        %2506 = vmatpush1.xpose.msra.mxu0 0.0
        %2507 = vmatprep.subr.mxu0 0.0
        %2508 = vmatpush1.xpose.msra.mxu0 0.0
        %2509 = vmatprep.subr.mxu0 0.0
        %2510 = vmatpush1.xpose.msra.mxu0 0.0
        %2511 = vmatprep.subr.mxu0 0.0
        %2512 = vmatpush1.xpose.msra.mxu0 0.0
        %2513 = vmatprep.subr.mxu0 0.0
        %2514 = vmatpush1.xpose.msra.mxu0 0.0
        %2515 = vmatprep.subr.mxu0 0.0
        %2516 = vmatpush1.xpose.msra.mxu0 0.0
        %2517 = vmatprep.subr.mxu0 0.0
        %2518 = vmatpush1.xpose.msra.mxu0 0.0
        %2519 = vmatprep.subr.mxu0 0.0
        %2520 = vmatpush1.xpose.msra.mxu0 0.0
        %2521 = vmatprep.subr.mxu0 0.0
        %2522 = vmatpush1.xpose.msra.mxu0 0.0
        %2523 = vmatprep.subr.mxu0 0.0
        %2524 = vmatpush1.xpose.msra.mxu0 0.0
        %2525 = vmatprep.subr.mxu0 0.0
        %2526 = vmatpush1.xpose.msra.mxu0 0.0
        %2527 = vmatprep.subr.mxu0 0.0
        %2528 = vmatpush1.xpose.msra.mxu0 0.0
        %2529 = vmatprep.subr.mxu0 0.0
        %2530 = vmatpush1.xpose.msra.mxu0 0.0
        %2531 = vmatprep.subr.mxu0 0.0
        %2532 = vmatpush1.xpose.msra.mxu0 0.0
        %2533 = vmatprep.subr.mxu0 0.0
        %2534 = vmatpush1.xpose.msra.mxu0 0.0
        %2535 = vmatprep.mubr.f32.mxu0 0.0
        %2536 = vmatmul.mubr.f32.gmra.mrb[0].mxu0 %v2467
        %v2537 = vpop.f32.mrb[0].mxu0
        %v2538 = vadd.f32 0.0, %v2537
        %v2539 = vpop.f32.mrb[0].mxu0
        %2540 = vdwg.mxu0
        %s2541 = scalar_lea.vmem %s614, 24 [#allocation19]
        %2542 = vst.msk [vmem:[%s2541] sm:$0xff] %vm906, %v2538
        %s2543 = sand.u32 %s277, 1
        %s2544 = scalar_lea.sflag [#allocation7], %s2543
        %s2545 = sand.u32 %s277, 1
        %s2546 = smul.addr %s2545, 8
        %s2547 = scalar_lea.vmem [#allocation13], %s2546
        %s2548 = sand.u32 %s38, 1
        %s2549 = scalar_lea.sflag [#allocation15], %s2548
        %s2550 = sand.u32 %s307, 1
        %s2551 = smul.addr %s2550, 32
        %s2552 = scalar_lea.vmem [#allocation14], %s2551
        %s2553 = sand.u32 %s38, 1
        %s2554 = scalar_lea.sflag [#allocation15], %s2553
        %s2555 = sand.u32 %s337, 1
        %s2556 = smul.addr %s2555, 32
        %s2557 = scalar_lea.vmem [#allocation16], %s2556
        %s2558 = sand.u32 %s38, 1
        %s2559 = scalar_lea.sflag [#allocation18], %s2558
        %s2560 = sand.u32 %s367, 1
        %s2561 = smul.addr %s2560, 32
        %s2562 = scalar_lea.vmem [#allocation17], %s2561
        %s2563 = sand.u32 %s38, 1
        %s2564 = scalar_lea.sflag [#allocation18], %s2563
        %s2565 = sand.u32 %s397, 1
        %s2566 = smul.addr %s2565, 32
        %s2567 = scalar_lea.vmem [#allocation19], %s2566
        // Predicated region
        $region73: #{tpu_custom_call.1} parent=51 // pred_check
          %p2568 = pneg %p287
        $region74: #{tpu_custom_call.1} parent=51 // pred_check_branch
          %2570 = sbr.rel (%p2568) target = $region76
        $region75: #{tpu_custom_call.1} parent=51 // pred_region
          %s2572 = ssub.s32 128, 128
          %2573 = vsyncadd %s2544, %s2572
          %s2574 = sadd.s32 %s44, %s45
          %s2575 = sadd.s32 %s2574, %s43
          %s2576 = smul.addr %s2575, 128
          %s2577 = scalar_lea.hbm %s8, %s2576
          %s2579 = sshll.u32 %s2547, 4
          %s2580 = int_to_ptr.vmem [resolvable:$true] %s2579
          %2582 = dma.vmem_to_hbm [thread:$0]  %s2580, 128, %s2577, %s2544
        $region76: #{tpu_custom_call.1} parent=51 // pred_fallthru
          _
        // Predicated region
        $region77: #{tpu_custom_call.1} parent=51 // pred_check
          %p2583 = pneg %p317
        $region78: #{tpu_custom_call.1} parent=51 // pred_check_branch
          %2585 = sbr.rel (%p2583) target = $region80
        $region79: #{tpu_custom_call.1} parent=51 // pred_region
          %s2586 = smul.u32 4, %s44
          %s2588 = ssub.s32 512, 512
          %2589 = vsyncadd %s2549, %s2588
          %s2590 = sadd.s32 %s45, %s2586
          %s2591 = smul.addr %s43, 4
          %s2592 = sadd.s32 %s2590, %s2591
          %s2593 = smul.addr %s2592, 128
          %s2594 = scalar_lea.hbm %s9, %s2593
          %s2595 = sshll.u32 %s2552, 4
          %s2596 = int_to_ptr.vmem [resolvable:$true] %s2595
          %2601 = dma.vmem_to_hbm [thread:$0]  %s2596, 512, %s2594, %s2549, 128, 128, 8
        $region80: #{tpu_custom_call.1} parent=51 // pred_fallthru
          _
        // Predicated region
        $region81: #{tpu_custom_call.1} parent=51 // pred_check
          %p2602 = pneg %p347
        $region82: #{tpu_custom_call.1} parent=51 // pred_check_branch
          %2604 = sbr.rel (%p2602) target = $region84
        $region83: #{tpu_custom_call.1} parent=51 // pred_region
          %s2605 = smul.u32 4, %s44
          %s2607 = ssub.s32 512, 512
          %2608 = vsyncadd %s2554, %s2607
          %s2609 = sadd.s32 %s45, %s2605
          %s2610 = smul.addr %s43, 4
          %s2611 = sadd.s32 %s2609, %s2610
          %s2612 = smul.addr %s2611, 128
          %s2613 = scalar_lea.hbm %s10, %s2612
          %s2614 = sshll.u32 %s2557, 4
          %s2615 = int_to_ptr.vmem [resolvable:$true] %s2614
          %2620 = dma.vmem_to_hbm [thread:$0]  %s2615, 512, %s2613, %s2554, 128, 128, 8
        $region84: #{tpu_custom_call.1} parent=51 // pred_fallthru
          _
        // Predicated region
        $region85: #{tpu_custom_call.1} parent=51 // pred_check
          %p2621 = pneg %p377
        $region86: #{tpu_custom_call.1} parent=51 // pred_check_branch
          %2623 = sbr.rel (%p2621) target = $region88
        $region87: #{tpu_custom_call.1} parent=51 // pred_region
          %s2624 = smul.u32 4, %s44
          %s2626 = ssub.s32 512, 512
          %2627 = vsyncadd %s2559, %s2626
          %s2628 = sadd.s32 %s45, %s2624
          %s2629 = smul.addr %s43, 4
          %s2630 = sadd.s32 %s2628, %s2629
          %s2631 = smul.addr %s2630, 128
          %s2632 = scalar_lea.hbm %s11, %s2631
          %s2633 = sshll.u32 %s2562, 4
          %s2634 = int_to_ptr.vmem [resolvable:$true] %s2633
          %2639 = dma.vmem_to_hbm [thread:$0]  %s2634, 512, %s2632, %s2559, 128, 128, 8
        $region88: #{tpu_custom_call.1} parent=51 // pred_fallthru
          _
        // Predicated region
        $region89: #{tpu_custom_call.1} parent=51 // pred_check
          %p2640 = pneg %p407
        $region90: #{tpu_custom_call.1} parent=51 // pred_check_branch
          %2642 = sbr.rel (%p2640) target = $region92
        $region91: #{tpu_custom_call.1} parent=51 // pred_region
          %s2643 = smul.u32 4, %s44
          %s2645 = ssub.s32 512, 512
          %2646 = vsyncadd %s2564, %s2645
          %s2647 = sadd.s32 %s45, %s2643
          %s2648 = smul.addr %s43, 4
          %s2649 = sadd.s32 %s2647, %s2648
          %s2650 = smul.addr %s2649, 128
          %s2651 = scalar_lea.hbm %s12, %s2650
          %s2652 = sshll.u32 %s2567, 4
          %s2653 = int_to_ptr.vmem [resolvable:$true] %s2652
          %2658 = dma.vmem_to_hbm [thread:$0]  %s2653, 512, %s2651, %s2564, 128, 128, 8
        $region92: #{tpu_custom_call.1} parent=51 // pred_fallthru
          _
      $region52: #{tpu_custom_call.1} parent=5 // pred_fallthru
        _
      %p2659 = scmp.le.s32.totalorder 2, %s33
      // Predicated region
      $region93: #{tpu_custom_call.1} parent=5 // pred_check
        %p2660 = pneg %p2659
      $region94: #{tpu_custom_call.1} parent=5 // pred_check_branch
        %2662 = sbr.rel (%p2660) target = $region96
      $region95: #{tpu_custom_call.1} parent=5 // pred_region
        %s2663 = ssub.s32 %s33, 2
        // Predicated region
        $region97: #{tpu_custom_call.1} parent=95 // pred_check
          %p2664 = pneg %p293
        $region98: #{tpu_custom_call.1} parent=95 // pred_check_branch
          %2666 = sbr.rel (%p2664) target = $region100
        $region99: #{tpu_custom_call.1} parent=95 // pred_region
          %s2667 = sand.u32 %s278, 1
          %s2668 = scalar_lea.sflag [#allocation7], %s2667
          %s2669 = sand.u32 %s278, 1
          %s2670 = smul.addr %s2669, 8
          %s2671 = scalar_lea.vmem [#allocation13], %s2670
          %2672 = dma.done %s2668, 128
        $region100: #{tpu_custom_call.1} parent=95 // pred_fallthru
          _
        // Predicated region
        $region101: #{tpu_custom_call.1} parent=95 // pred_check
          %p2673 = pneg %p323
        $region102: #{tpu_custom_call.1} parent=95 // pred_check_branch
          %2675 = sbr.rel (%p2673) target = $region104
        $region103: #{tpu_custom_call.1} parent=95 // pred_region
          %s2676 = sand.u32 %s39, 1
          %s2677 = scalar_lea.sflag [#allocation15], %s2676
          %s2678 = sand.u32 %s308, 1
          %s2679 = smul.addr %s2678, 32
          %s2680 = scalar_lea.vmem [#allocation14], %s2679
          %2681 = dma.done %s2677, 512
        $region104: #{tpu_custom_call.1} parent=95 // pred_fallthru
          _
        // Predicated region
        $region105: #{tpu_custom_call.1} parent=95 // pred_check
          %p2682 = pneg %p353
        $region106: #{tpu_custom_call.1} parent=95 // pred_check_branch
          %2684 = sbr.rel (%p2682) target = $region108
        $region107: #{tpu_custom_call.1} parent=95 // pred_region
          %s2685 = sand.u32 %s39, 1
          %s2686 = scalar_lea.sflag [#allocation15], %s2685
          %s2687 = sand.u32 %s338, 1
          %s2688 = smul.addr %s2687, 32
          %s2689 = scalar_lea.vmem [#allocation16], %s2688
          %2690 = dma.done %s2686, 512
        $region108: #{tpu_custom_call.1} parent=95 // pred_fallthru
          _
        // Predicated region
        $region109: #{tpu_custom_call.1} parent=95 // pred_check
          %p2691 = pneg %p383
        $region110: #{tpu_custom_call.1} parent=95 // pred_check_branch
          %2693 = sbr.rel (%p2691) target = $region112
        $region111: #{tpu_custom_call.1} parent=95 // pred_region
          %s2694 = sand.u32 %s39, 1
          %s2695 = scalar_lea.sflag [#allocation18], %s2694
          %s2696 = sand.u32 %s368, 1
          %s2697 = smul.addr %s2696, 32
          %s2698 = scalar_lea.vmem [#allocation17], %s2697
          %2699 = dma.done %s2695, 512
        $region112: #{tpu_custom_call.1} parent=95 // pred_fallthru
          _
        // Predicated region
        $region113: #{tpu_custom_call.1} parent=95 // pred_check
          %p2700 = pneg %p413
        $region114: #{tpu_custom_call.1} parent=95 // pred_check_branch
          %2702 = sbr.rel (%p2700) target = $region116
        $region115: #{tpu_custom_call.1} parent=95 // pred_region
          %s2703 = sand.u32 %s39, 1
          %s2704 = scalar_lea.sflag [#allocation18], %s2703
          %s2705 = sand.u32 %s398, 1
          %s2706 = smul.addr %s2705, 32
          %s2707 = scalar_lea.vmem [#allocation19], %s2706
          %2708 = dma.done %s2704, 512
        $region116: #{tpu_custom_call.1} parent=95 // pred_fallthru
          _
      $region96: #{tpu_custom_call.1} parent=5 // pred_fallthru
        _
    $region6: #{tpu_custom_call.1} parent=1 // loop_footer
      %s37 = sadd.s32 1, %s33
    $region7: #{tpu_custom_call.1} parent=1 // loop_footer_branch
      %32 = sbr.rel target = $region3
    $region8: #{tpu_custom_call.1} parent=1 // loop_exit
      _
    %2709 = vsyncpa [#allocation6], 1
    %s2710 = scalar_lea.sflag [#allocation6], 1
    %2711 = vsyncpa %s2710, 1
    %2712 = vsyncpa [#allocation9], 1
    %2713 = vsyncpa [#allocation12], 1
    %2714 = vsyncpa [#allocation7], 1
    %s2715 = scalar_lea.sflag [#allocation7], 1
    %2716 = vsyncpa %s2715, 1
    %2717 = vsyncpa [#allocation15], 1
    %s2718 = scalar_lea.sflag [#allocation15], 1
    %2719 = vsyncpa %s2718, 1
    %2720 = vsyncpa [#allocation18], 1
    %s2721 = scalar_lea.sflag [#allocation18], 1
    %2722 = vsyncpa %s2721, 1

</llo_original>
